<compile_context>
chip_gen: v6e
topology: v6e:2x2x1
jax: 0.10.0
libtpu: 0.0.40
codegen_flags: <defaults>
</compile_context>

<pallas_src>
import jax
import jax.numpy as jnp
import numpy as np
from jax import lax
from jax.experimental import pallas as pl
from jax.experimental.pallas import tpu as pltpu


def _sigmoid(x):
    # exp on the EUP + approximate reciprocal (also EUP) -> keeps the VALU free.
    return pl.reciprocal(1.0 + jnp.exp(-x), approx=True)


def _zero_halo(ref):
    """Zero only the 1-pixel border of a (H+2, W+2, C) padded scratch."""
    hp, wp, c = ref.shape
    ref[0:1, :, :] = jnp.zeros((1, wp, c), ref.dtype)
    ref[hp - 1:hp, :, :] = jnp.zeros((1, wp, c), ref.dtype)
    ref[:, 0:1, :] = jnp.zeros((hp, 1, c), ref.dtype)
    ref[:, wp - 1:wp, :] = jnp.zeros((hp, 1, c), ref.dtype)


def _im2col_3x3(pad_ref, H, W):
    """(H+2, W+2, C) padded scratch -> (H*W, 9*C) im2col matrix."""
    C = pad_ref.shape[-1]
    taps = [pad_ref[dy:dy + H, dx:dx + W, :]
            for dy in range(3) for dx in range(3)]
    return jnp.concatenate(taps, axis=-1).reshape(H * W, 9 * C)


# -----------------------------------------------------------------------------
# Fused kernel: BN1 -> conv3x3 -> BN2 -> PReLU -> conv3x3(stride) -> BN3
#               -> CAModule -> SAModule -> shortcut -> residual add
# -----------------------------------------------------------------------------
def _make_cbam_kernel(H, W, Cin, Cout, stride, dim_match):
    Ho, Wo = H // stride, W // stride
    P = Ho * Wo

    def kernel(x_ref, s1_ref, t1_ref, w1_ref, s2_ref, t2_ref, alpha_ref,
               w2_ref, s3_ref, t3_ref, caw1_ref, caw2_ref, saw_ref, *rest):
        idx = 0
        if stride > 1:
            sel_ref = rest[idx]; idx += 1
        if not dim_match:
            wsc_ref, ssc_ref, tsc_ref = rest[idx:idx + 3]; idx += 3
        o_ref, pad1_ref, pad2_ref, padsa_ref = rest[idx:idx + 4]

        xv = x_ref[...]                                         # (H, W, Cin) f32

        # ---- BN1 (inference: folded per-channel scale/shift) ----
        h = xv * s1_ref[...] + t1_ref[...]

        # ---- conv1: 3x3, stride 1, pad 1 -> single im2col matmul ----
        _zero_halo(pad1_ref)
        pad1_ref[1:H + 1, 1:W + 1, :] = h
        col1 = _im2col_3x3(pad1_ref, H, W)                      # (H*W, 9*Cin)
        y = jnp.dot(col1.astype(jnp.bfloat16), w1_ref[...],
                    preferred_element_type=jnp.float32)         # (H*W, Cout)

        # ---- BN2 + PReLU (f32 epilogue) ----
        y = y * s2_ref[...] + t2_ref[...]
        y = jnp.where(y > 0, y, alpha_ref[...] * y)

        # ---- conv2: 3x3, pad 1 -> single im2col matmul ----
        _zero_halo(pad2_ref)
        pad2_ref[1:H + 1, 1:W + 1, :] = y.reshape(H, W, Cout)
        col2 = _im2col_3x3(pad2_ref, H, W)                      # (H*W, 9*Cout)
        z = jnp.dot(col2.astype(jnp.bfloat16), w2_ref[...],
                    preferred_element_type=jnp.float32)         # (H*W, Cout)

        # conv2 stride: exact one-hot selection matmul, applied in-kernel so
        # only the Ho*Wo positions proceed / reach HBM.  (A fully strided-tap
        # im2col would also cut the MXU FLOPs stride^2-fold; negligible here.)
        if stride > 1:
            z = jnp.dot(sel_ref[...], z,
                        preferred_element_type=jnp.float32)     # (P, Cout)

        # ---- BN3 ----
        hf = z * s3_ref[...] + t3_ref[...]                      # (P, Cout)

        # ---- Channel attention: shared MLP on stacked [avg; max] pooling ----
        pooled = jnp.concatenate(
            [jnp.mean(hf, axis=0, keepdims=True),
             jnp.max(hf, axis=0, keepdims=True)], axis=0)       # (2, Cout)
        hid = jnp.maximum(
            jnp.dot(pooled, caw1_ref[...],
                    preferred_element_type=jnp.float32), 0.0)   # (2, Cr)
        att = jnp.dot(hid, caw2_ref[...],
                      preferred_element_type=jnp.float32)       # (2, Cout)
        hf = hf * _sigmoid(att[0:1, :] + att[1:2, :])

        # ---- Spatial attention: 3x3 conv over [mean_c, max_c] ----
        hsp = hf.reshape(Ho, Wo, Cout)
        padsa_ref[...] = jnp.zeros_like(padsa_ref)
        padsa_ref[1:Ho + 1, 1:Wo + 1, 0:1] = jnp.mean(hsp, axis=-1, keepdims=True)
        padsa_ref[1:Ho + 1, 1:Wo + 1, 1:2] = jnp.max(hsp, axis=-1, keepdims=True)
        sa = jnp.zeros((Ho, Wo, 1), jnp.float32)
        for k in range(9):
            dy, dx = k // 3, k % 3
            tap = padsa_ref[dy:dy + Ho, dx:dx + Wo, :]
            sa = sa + tap[:, :, 0:1] * saw_ref[k, 0] + tap[:, :, 1:2] * saw_ref[k, 1]
        res = hf * _sigmoid(sa.reshape(P, 1))

        # ---- Shortcut ----
        xf = xv.reshape(H * W, Cin)
        if stride > 1:
            xf = jnp.dot(sel_ref[...], xf,
                         preferred_element_type=jnp.float32)    # (P, Cin)
        if dim_match:
            sc = xf                                             # identity shortcut
        else:
            sc = jnp.dot(xf, wsc_ref[...],
                         preferred_element_type=jnp.float32)    # 1x1 conv
            sc = sc * ssc_ref[...] + tsc_ref[...]               # shortcut BN

        o_ref[...] = (sc + res).reshape(Ho, Wo, Cout)

    return kernel


# -----------------------------------------------------------------------------
# Wrapper
# -----------------------------------------------------------------------------
def cbam_bottleneck_ir(x_nchw, p, *, stride, dim_match):
    x = jnp.transpose(x_nchw, (0, 2, 3, 1)).astype(jnp.float32)   # NCHW -> NHWC
    N, H, W, Cin = x.shape
    Cout = p["w1_hwio"].shape[-1]
    Cr = p["ca_w1"].shape[-1]
    assert H % stride == 0 and W % stride == 0
    if dim_match:
        assert Cin == Cout
    Ho, Wo = H // stride, W // stride

    cvec = lambda a: a.reshape(1, -1).astype(jnp.float32)
    # im2col weights, pre-cast to bf16 for the MXU (f32 accumulation in-kernel).
    w1 = p["w1_hwio"].reshape(9 * Cin, Cout).astype(jnp.bfloat16)
    w2 = p["w2_hwio"].reshape(9 * Cout, Cout).astype(jnp.bfloat16)

    def bcast(shape):
        return pl.BlockSpec(shape, lambda n, _s=shape: (0,) * len(_s))

    in_specs = [
        pl.BlockSpec((None, H, W, Cin), lambda n: (n, 0, 0, 0)),
        bcast((1, Cin)), bcast((1, Cin)),
        bcast((9 * Cin, Cout)),
        bcast((1, Cout)), bcast((1, Cout)), bcast((1, Cout)),
        bcast((9 * Cout, Cout)),
        bcast((1, Cout)), bcast((1, Cout)),
        bcast((Cout, Cr)), bcast((Cr, Cout)),
        pl.BlockSpec(memory_space=pltpu.MemorySpace.SMEM),        # SA weights
    ]
    args = [x, cvec(p["bn1_s"]), cvec(p["bn1_t"]), w1,
            cvec(p["bn2_s"]), cvec(p["bn2_t"]), cvec(p["prelu"]), w2,
            cvec(p["bn3_s"]), cvec(p["bn3_t"]),
            p["ca_w1"].astype(jnp.float32), p["ca_w2"].astype(jnp.float32),
            p["sa_w"].astype(jnp.float32)]

    if stride > 1:
        # Exact one-hot selection matrix realizing the conv-2 / shortcut stride
        # as a matmul inside the kernel (no strided slices, no HBM gathers).
        sel_np = np.zeros((Ho * Wo, H * W), np.float32)
        for i in range(Ho):
            for j in range(Wo):
                sel_np[i * Wo + j, (i * stride) * W + j * stride] = 1.0
        in_specs.append(bcast((Ho * Wo, H * W)))
        args.append(jnp.asarray(sel_np))

    if not dim_match:
        in_specs += [bcast((Cin, Cout)), bcast((1, Cout)), bcast((1, Cout))]
        args += [p["wsc"].astype(jnp.float32),
                 cvec(p["bnsc_s"]), cvec(p["bnsc_t"])]

    kernel = _make_cbam_kernel(H, W, Cin, Cout, stride, dim_match)

    out = pl.pallas_call(
        kernel,
        out_shape=jax.ShapeDtypeStruct((N, Ho, Wo, Cout), jnp.float32),
        grid_spec=pltpu.PrefetchScalarGridSpec(
            num_scalar_prefetch=0,
            grid=(N,),
            in_specs=in_specs,
            out_specs=pl.BlockSpec((None, Ho, Wo, Cout), lambda n: (n, 0, 0, 0)),
            scratch_shapes=[
                pltpu.VMEM((H + 2, W + 2, Cin), jnp.float32),    # conv1 halo pad
                pltpu.VMEM((H + 2, W + 2, Cout), jnp.float32),   # conv2 halo pad
                pltpu.VMEM((Ho + 2, Wo + 2, 2), jnp.float32),    # SA halo pad
            ],
        ),
        compiler_params=pltpu.CompilerParams(
            dimension_semantics=("parallel",),            # shard batch on v7x
            vmem_limit_bytes=32 * 1024 * 1024,
        ),
    )(*args)

    return jnp.transpose(out, (0, 3, 1, 2))   # NHWC -> NCHW


# -----------------------------------------------------------------------------
# Deterministic synthetic parameters (matching the PyTorch module's shapes)
# -----------------------------------------------------------------------------
def init_params(key, cin, cout, reduction=16):
    cr = cout // reduction
    ks = jax.random.split(key, 10)

    def bn(k, c):
        k1, k2, k3, k4 = jax.random.split(k, 4)
        gamma = 1.0 + 0.1 * jax.random.normal(k1, (c,), jnp.float32)
        beta = 0.1 * jax.random.normal(k2, (c,), jnp.float32)
        mean = 0.1 * jax.random.normal(k3, (c,), jnp.float32)
        var = 1.0 + 0.1 * jax.random.uniform(k4, (c,), jnp.float32)
        s = gamma * lax.rsqrt(var + 1e-5)
        return s, beta - mean * s

    bn1_s, bn1_t = bn(ks[0], cin)
    w1_hwio = 0.1 * jax.random.normal(ks[1], (3, 3, cin, cout), jnp.float32)
    bn2_s, bn2_t = bn(ks[2], cout)
    prelu = jnp.full((cout,), 0.25, jnp.float32)          # nn.PReLU default init
    w2_hwio = 0.1 * jax.random.normal(ks[3], (3, 3, cout, cout), jnp.float32)
    bn3_s, bn3_t = bn(ks[4], cout)
    ca_w1 = 0.1 * jax.random.normal(ks[5], (cout, cr), jnp.float32)
    ca_w2 = 0.1 * jax.random.normal(ks[6], (cr, cout), jnp.float32)
    sa_w_hwio = 0.1 * jax.random.normal(ks[7], (3, 3, 2, 1), jnp.float32)
    wsc_hwio = 0.1 * jax.random.normal(ks[8], (1, 1, cin, cout), jnp.float32)
    bnsc_s, bnsc_t = bn(ks[9], cout)

    return dict(
        bn1_s=bn1_s, bn1_t=bn1_t, w1_hwio=w1_hwio,
        bn2_s=bn2_s, bn2_t=bn2_t, prelu=prelu, w2_hwio=w2_hwio,
        bn3_s=bn3_s, bn3_t=bn3_t,
        ca_w1=ca_w1, ca_w2=ca_w2,
        sa_w=sa_w_hwio.reshape(9, 2), sa_w_hwio=sa_w_hwio,
        wsc=wsc_hwio.reshape(cin, cout), wsc_hwio=wsc_hwio,
        bnsc_s=bnsc_s, bnsc_t=bnsc_t,
    )


# -----------------------------------------------------------------------------
# Pure-JAX reference (inference-mode BN), for a sanity check
# -----------------------------------------------------------------------------
def reference_nchw(x_nchw, p, *, stride, dim_match):
    x = jnp.transpose(x_nchw, (0, 2, 3, 1)).astype(jnp.float32)
    dn = ("NHWC", "HWIO", "NHWC")
    hp = lax.Precision.HIGHEST

    def conv(h, w, s, pad):
        return lax.conv_general_dilated(h, w, (s, s), [(pad, pad), (pad, pad)],
                                        dimension_numbers=dn, precision=hp)

    h = x * p["bn1_s"] + p["bn1_t"]
    h = conv(h, p["w1_hwio"], 1, 1)
    h = h * p["bn2_s"] + p["bn2_t"]
    h = jnp.where(h > 0, h, p["prelu"] * h)
    h = conv(h, p["w2_hwio"], stride, 1)
    h = h * p["bn3_s"] + p["bn3_t"]
    avg = jnp.mean(h, axis=(1, 2))
    mx = jnp.max(h, axis=(1, 2))
    mlp = lambda v: jnp.maximum(v @ p["ca_w1"], 0.0) @ p["ca_w2"]
    h = h * jax.nn.sigmoid(mlp(avg) + mlp(mx))[:, None, None, :]
    am = jnp.concatenate([jnp.mean(h, -1, keepdims=True),
                          jnp.max(h, -1, keepdims=True)], axis=-1)
    h = h * jax.nn.sigmoid(conv(am, p["sa_w_hwio"], 1, 1))
    if dim_match:
        sc = x
    else:
        sc = conv(x, p["wsc_hwio"], stride, 0)
        sc = sc * p["bnsc_s"] + p["bnsc_t"]
    return jnp.transpose(sc + h, (0, 3, 1, 2))


if __name__ == "__main__":
    key = jax.random.PRNGKey(0)
    kx, kp, kx2, kp2 = jax.random.split(key, 4)

    # Config 1: down-sampling block (first block of a layer): stride 2,
    # projection shortcut.  reduction=16 => out_channel multiple of 16.
    N, Cin, Cout, H, W = 2, 16, 32, 16, 16
    x = jax.random.normal(kx, (N, Cin, H, W), jnp.float32)
    params = init_params(kp, Cin, Cout, reduction=16)
    out = jax.block_until_ready(
        cbam_bottleneck_ir(x, params, stride=2, dim_match=False))
    ref = reference_nchw(x, params, stride=2, dim_match=False)
    assert out.shape == (N, Cout, H // 2, W // 2), out.shape
    np.testing.assert_allclose(np.asarray(out), np.asarray(ref),
                               rtol=5e-2, atol=5e-2)

    # Config 2: identity-shortcut block (dim_match=True, stride 1).
    C2, H2 = 32, 8
    x2 = jax.random.normal(kx2, (N, C2, H2, H2), jnp.float32)
    params2 = init_params(kp2, C2, C2, reduction=16)
    out2 = jax.block_until_ready(
        cbam_bottleneck_ir(x2, params2, stride=1, dim_match=True))
    ref2 = reference_nchw(x2, params2, stride=1, dim_match=True)
    assert out2.shape == (N, C2, H2, H2), out2.shape
    np.testing.assert_allclose(np.asarray(out2), np.asarray(ref2),
                               rtol=5e-2, atol=5e-2)

    print("KERNEL_OK")
</pallas_src>

<mosaic_0001>
module attributes {stable_mosaic.version = 11 : i64} {
  func.func @kernel(%arg0: i32, %arg1: memref<1x16x16x16xf32, #tpu.memory_space<vmem>>, %arg2: memref<1x16xf32, #tpu.memory_space<vmem>>, %arg3: memref<1x16xf32, #tpu.memory_space<vmem>>, %arg4: memref<144x32xbf16, #tpu.memory_space<vmem>>, %arg5: memref<1x32xf32, #tpu.memory_space<vmem>>, %arg6: memref<1x32xf32, #tpu.memory_space<vmem>>, %arg7: memref<1x32xf32, #tpu.memory_space<vmem>>, %arg8: memref<288x32xbf16, #tpu.memory_space<vmem>>, %arg9: memref<1x32xf32, #tpu.memory_space<vmem>>, %arg10: memref<1x32xf32, #tpu.memory_space<vmem>>, %arg11: memref<32x2xf32, #tpu.memory_space<vmem>>, %arg12: memref<2x32xf32, #tpu.memory_space<vmem>>, %arg13: memref<9x2xf32, #tpu.memory_space<smem>>, %arg14: memref<64x256xf32, #tpu.memory_space<vmem>>, %arg15: memref<16x32xf32, #tpu.memory_space<vmem>>, %arg16: memref<1x32xf32, #tpu.memory_space<vmem>>, %arg17: memref<1x32xf32, #tpu.memory_space<vmem>>, %arg18: memref<1x8x8x32xf32, #tpu.memory_space<vmem>>, %arg19: memref<18x18x16xf32, #tpu.memory_space<vmem>>, %arg20: memref<18x18x32xf32, #tpu.memory_space<vmem>>, %arg21: memref<10x10x2xf32, #tpu.memory_space<vmem>>) attributes {dimension_semantics = [#tpu.dimension_semantics<parallel>], iteration_bounds = array<i64: 2>, scalar_prefetch = 0 : i64, scratch_operands = 3 : i64, tpu.core_type = #tpu.core_type<tc>, window_params = [{transform_indices = @transform_0, window_bounds = array<i64: 1, 16, 16, 16>}, {pipeline_mode = #tpu.pipeline_mode<synchronous>, transform_indices = @transform_1, window_bounds = array<i64: 1, 16>}, {pipeline_mode = #tpu.pipeline_mode<synchronous>, transform_indices = @transform_2, window_bounds = array<i64: 1, 16>}, {pipeline_mode = #tpu.pipeline_mode<synchronous>, transform_indices = @transform_3, window_bounds = array<i64: 144, 32>}, {pipeline_mode = #tpu.pipeline_mode<synchronous>, transform_indices = @transform_4, window_bounds = array<i64: 1, 32>}, {pipeline_mode = #tpu.pipeline_mode<synchronous>, transform_indices = @transform_5, window_bounds = array<i64: 1, 32>}, {pipeline_mode = #tpu.pipeline_mode<synchronous>, transform_indices = @transform_6, window_bounds = array<i64: 1, 32>}, {pipeline_mode = #tpu.pipeline_mode<synchronous>, transform_indices = @transform_7, window_bounds = array<i64: 288, 32>}, {pipeline_mode = #tpu.pipeline_mode<synchronous>, transform_indices = @transform_8, window_bounds = array<i64: 1, 32>}, {pipeline_mode = #tpu.pipeline_mode<synchronous>, transform_indices = @transform_9, window_bounds = array<i64: 1, 32>}, {pipeline_mode = #tpu.pipeline_mode<synchronous>, transform_indices = @transform_10, window_bounds = array<i64: 32, 2>}, {pipeline_mode = #tpu.pipeline_mode<synchronous>, transform_indices = @transform_11, window_bounds = array<i64: 2, 32>}, {transform_indices = @transform_12, window_bounds = array<i64: 9, 2>}, {pipeline_mode = #tpu.pipeline_mode<synchronous>, transform_indices = @transform_13, window_bounds = array<i64: 64, 256>}, {pipeline_mode = #tpu.pipeline_mode<synchronous>, transform_indices = @transform_14, window_bounds = array<i64: 16, 32>}, {pipeline_mode = #tpu.pipeline_mode<synchronous>, transform_indices = @transform_15, window_bounds = array<i64: 1, 32>}, {pipeline_mode = #tpu.pipeline_mode<synchronous>, transform_indices = @transform_16, window_bounds = array<i64: 1, 32>}, {transform_indices = @transform_17, window_bounds = array<i64: 1, 8, 8, 32>}]} {
    %c0 = arith.constant 0 : index
    %c0_0 = arith.constant 0 : index
    %c0_1 = arith.constant 0 : index
    %c0_2 = arith.constant 0 : index
    %0 = vector.load %arg1[%c0, %c0_0, %c0_1, %c0_2] : memref<1x16x16x16xf32, #tpu.memory_space<vmem>>, vector<1x16x16x16xf32>
    %1 = vector.shape_cast %0 : vector<1x16x16x16xf32> to vector<16x16x16xf32>
    %c0_3 = arith.constant 0 : index
    %c0_4 = arith.constant 0 : index
    %2 = vector.load %arg2[%c0_3, %c0_4] : memref<1x16xf32, #tpu.memory_space<vmem>>, vector<1x16xf32>
    %3 = vector.shape_cast %2 : vector<1x16xf32> to vector<1x1x16xf32>
    %4 = vector.broadcast %3 : vector<1x1x16xf32> to vector<16x16x16xf32>
    %5 = arith.mulf %1, %4 : vector<16x16x16xf32>
    %c0_5 = arith.constant 0 : index
    %c0_6 = arith.constant 0 : index
    %6 = vector.load %arg3[%c0_5, %c0_6] : memref<1x16xf32, #tpu.memory_space<vmem>>, vector<1x16xf32>
    %7 = vector.shape_cast %6 : vector<1x16xf32> to vector<1x1x16xf32>
    %8 = vector.broadcast %7 : vector<1x1x16xf32> to vector<16x16x16xf32>
    %9 = arith.addf %5, %8 : vector<16x16x16xf32>
    %cst = arith.constant 0.000000e+00 : f32
    %10 = vector.broadcast %cst : f32 to vector<1x18x16xf32>
    %c0_7 = arith.constant 0 : index
    %c0_8 = arith.constant 0 : index
    %c0_9 = arith.constant 0 : index
    %11 = vector.load %arg19[%c0_7, %c0_8, %c0_9] : memref<18x18x16xf32, #tpu.memory_space<vmem>>, vector<1x18x16xf32>
    tpu.vector_store %arg19[%c0_7, %c0_8, %c0_9], %10 {strides = array<i32>} : memref<18x18x16xf32, #tpu.memory_space<vmem>>, vector<1x18x16xf32>,
    %cst_10 = arith.constant 0.000000e+00 : f32
    %12 = vector.broadcast %cst_10 : f32 to vector<1x18x16xf32>
    %c17 = arith.constant 17 : index
    %c0_11 = arith.constant 0 : index
    %c0_12 = arith.constant 0 : index
    %13 = vector.load %arg19[%c17, %c0_11, %c0_12] : memref<18x18x16xf32, #tpu.memory_space<vmem>>, vector<1x18x16xf32>
    tpu.vector_store %arg19[%c17, %c0_11, %c0_12], %12 {strides = array<i32>} : memref<18x18x16xf32, #tpu.memory_space<vmem>>, vector<1x18x16xf32>,
    %cst_13 = arith.constant 0.000000e+00 : f32
    %14 = vector.broadcast %cst_13 : f32 to vector<18x1x16xf32>
    %c0_14 = arith.constant 0 : index
    %c0_15 = arith.constant 0 : index
    %c0_16 = arith.constant 0 : index
    %15 = vector.load %arg19[%c0_14, %c0_15, %c0_16] : memref<18x18x16xf32, #tpu.memory_space<vmem>>, vector<18x1x16xf32>
    tpu.vector_store %arg19[%c0_14, %c0_15, %c0_16], %14 {strides = array<i32>} : memref<18x18x16xf32, #tpu.memory_space<vmem>>, vector<18x1x16xf32>,
    %cst_17 = arith.constant 0.000000e+00 : f32
    %16 = vector.broadcast %cst_17 : f32 to vector<18x1x16xf32>
    %c0_18 = arith.constant 0 : index
    %c17_19 = arith.constant 17 : index
    %c0_20 = arith.constant 0 : index
    %17 = vector.load %arg19[%c0_18, %c17_19, %c0_20] : memref<18x18x16xf32, #tpu.memory_space<vmem>>, vector<18x1x16xf32>
    tpu.vector_store %arg19[%c0_18, %c17_19, %c0_20], %16 {strides = array<i32>} : memref<18x18x16xf32, #tpu.memory_space<vmem>>, vector<18x1x16xf32>,
    %c1 = arith.constant 1 : index
    %c1_21 = arith.constant 1 : index
    %c0_22 = arith.constant 0 : index
    %18 = vector.load %arg19[%c1, %c1_21, %c0_22] : memref<18x18x16xf32, #tpu.memory_space<vmem>>, vector<16x16x16xf32>
    tpu.vector_store %arg19[%c1, %c1_21, %c0_22], %9 {strides = array<i32>} : memref<18x18x16xf32, #tpu.memory_space<vmem>>, vector<16x16x16xf32>,
    %c0_23 = arith.constant 0 : index
    %c0_24 = arith.constant 0 : index
    %c0_25 = arith.constant 0 : index
    %19 = vector.load %arg19[%c0_23, %c0_24, %c0_25] : memref<18x18x16xf32, #tpu.memory_space<vmem>>, vector<16x16x16xf32>
    %c0_26 = arith.constant 0 : index
    %c1_27 = arith.constant 1 : index
    %c0_28 = arith.constant 0 : index
    %20 = vector.load %arg19[%c0_26, %c1_27, %c0_28] : memref<18x18x16xf32, #tpu.memory_space<vmem>>, vector<16x16x16xf32>
    %c0_29 = arith.constant 0 : index
    %c2 = arith.constant 2 : index
    %c0_30 = arith.constant 0 : index
    %21 = vector.load %arg19[%c0_29, %c2, %c0_30] : memref<18x18x16xf32, #tpu.memory_space<vmem>>, vector<16x16x16xf32>
    %c1_31 = arith.constant 1 : index
    %c0_32 = arith.constant 0 : index
    %c0_33 = arith.constant 0 : index
    %22 = vector.load %arg19[%c1_31, %c0_32, %c0_33] : memref<18x18x16xf32, #tpu.memory_space<vmem>>, vector<16x16x16xf32>
    %c1_34 = arith.constant 1 : index
    %c1_35 = arith.constant 1 : index
    %c0_36 = arith.constant 0 : index
    %23 = vector.load %arg19[%c1_34, %c1_35, %c0_36] : memref<18x18x16xf32, #tpu.memory_space<vmem>>, vector<16x16x16xf32>
    %c1_37 = arith.constant 1 : index
    %c2_38 = arith.constant 2 : index
    %c0_39 = arith.constant 0 : index
    %24 = vector.load %arg19[%c1_37, %c2_38, %c0_39] : memref<18x18x16xf32, #tpu.memory_space<vmem>>, vector<16x16x16xf32>
    %c2_40 = arith.constant 2 : index
    %c0_41 = arith.constant 0 : index
    %c0_42 = arith.constant 0 : index
    %25 = vector.load %arg19[%c2_40, %c0_41, %c0_42] : memref<18x18x16xf32, #tpu.memory_space<vmem>>, vector<16x16x16xf32>
    %c2_43 = arith.constant 2 : index
    %c1_44 = arith.constant 1 : index
    %c0_45 = arith.constant 0 : index
    %26 = vector.load %arg19[%c2_43, %c1_44, %c0_45] : memref<18x18x16xf32, #tpu.memory_space<vmem>>, vector<16x16x16xf32>
    %c2_46 = arith.constant 2 : index
    %c2_47 = arith.constant 2 : index
    %c0_48 = arith.constant 0 : index
    %27 = vector.load %arg19[%c2_46, %c2_47, %c0_48] : memref<18x18x16xf32, #tpu.memory_space<vmem>>, vector<16x16x16xf32>
    %28 = tpu.concatenate %19, %20, %21, %22, %23, %24, %25, %26, %27 in 2 : vector<16x16x16xf32>, vector<16x16x16xf32>, vector<16x16x16xf32>, vector<16x16x16xf32>, vector<16x16x16xf32>, vector<16x16x16xf32>, vector<16x16x16xf32>, vector<16x16x16xf32>, vector<16x16x16xf32> -> vector<16x16x144xf32>
    %29 = vector.shape_cast %28 : vector<16x16x144xf32> to vector<256x144xf32>
    %30 = arith.truncf %29 : vector<256x144xf32> to vector<256x144xbf16>
    %c0_49 = arith.constant 0 : index
    %c0_50 = arith.constant 0 : index
    %31 = vector.load %arg4[%c0_49, %c0_50] : memref<144x32xbf16, #tpu.memory_space<vmem>>, vector<144x32xbf16>
    %cst_51 = arith.constant dense<0.000000e+00> : vector<256x32xf32>
    %32 = tpu.matmul %30, %31, %cst_51 {dimension_numbers = #tpu.dot_dimension_numbers<[1], [0], [0], [1], [0, 0, 1, 1], [], []>} : vector<256x144xbf16>, vector<144x32xbf16>, vector<256x32xf32> -> vector<256x32xf32>
    %c0_52 = arith.constant 0 : index
    %c0_53 = arith.constant 0 : index
    %33 = vector.load %arg5[%c0_52, %c0_53] : memref<1x32xf32, #tpu.memory_space<vmem>>, vector<1x32xf32>
    %34 = vector.broadcast %33 : vector<1x32xf32> to vector<256x32xf32>
    %35 = arith.mulf %32, %34 : vector<256x32xf32>
    %c0_54 = arith.constant 0 : index
    %c0_55 = arith.constant 0 : index
    %36 = vector.load %arg6[%c0_54, %c0_55] : memref<1x32xf32, #tpu.memory_space<vmem>>, vector<1x32xf32>
    %37 = vector.broadcast %36 : vector<1x32xf32> to vector<256x32xf32>
    %38 = arith.addf %35, %37 : vector<256x32xf32>
    %cst_56 = arith.constant 0.000000e+00 : f32
    %39 = vector.broadcast %cst_56 : f32 to vector<256x32xf32>
    %40 = arith.cmpf ogt, %38, %39 : vector<256x32xf32>
    %c0_57 = arith.constant 0 : index
    %c0_58 = arith.constant 0 : index
    %41 = vector.load %arg7[%c0_57, %c0_58] : memref<1x32xf32, #tpu.memory_space<vmem>>, vector<1x32xf32>
    %42 = vector.broadcast %41 : vector<1x32xf32> to vector<256x32xf32>
    %43 = arith.mulf %42, %38 : vector<256x32xf32>
    %44 = arith.select %40, %38, %43 : vector<256x32xi1>, vector<256x32xf32>
    %cst_59 = arith.constant 0.000000e+00 : f32
    %45 = vector.broadcast %cst_59 : f32 to vector<1x18x32xf32>
    %c0_60 = arith.constant 0 : index
    %c0_61 = arith.constant 0 : index
    %c0_62 = arith.constant 0 : index
    %46 = vector.load %arg20[%c0_60, %c0_61, %c0_62] : memref<18x18x32xf32, #tpu.memory_space<vmem>>, vector<1x18x32xf32>
    tpu.vector_store %arg20[%c0_60, %c0_61, %c0_62], %45 {strides = array<i32>} : memref<18x18x32xf32, #tpu.memory_space<vmem>>, vector<1x18x32xf32>,
    %cst_63 = arith.constant 0.000000e+00 : f32
    %47 = vector.broadcast %cst_63 : f32 to vector<1x18x32xf32>
    %c17_64 = arith.constant 17 : index
    %c0_65 = arith.constant 0 : index
    %c0_66 = arith.constant 0 : index
    %48 = vector.load %arg20[%c17_64, %c0_65, %c0_66] : memref<18x18x32xf32, #tpu.memory_space<vmem>>, vector<1x18x32xf32>
    tpu.vector_store %arg20[%c17_64, %c0_65, %c0_66], %47 {strides = array<i32>} : memref<18x18x32xf32, #tpu.memory_space<vmem>>, vector<1x18x32xf32>,
    %cst_67 = arith.constant 0.000000e+00 : f32
    %49 = vector.broadcast %cst_67 : f32 to vector<18x1x32xf32>
    %c0_68 = arith.constant 0 : index
    %c0_69 = arith.constant 0 : index
    %c0_70 = arith.constant 0 : index
    %50 = vector.load %arg20[%c0_68, %c0_69, %c0_70] : memref<18x18x32xf32, #tpu.memory_space<vmem>>, vector<18x1x32xf32>
    tpu.vector_store %arg20[%c0_68, %c0_69, %c0_70], %49 {strides = array<i32>} : memref<18x18x32xf32, #tpu.memory_space<vmem>>, vector<18x1x32xf32>,
    %cst_71 = arith.constant 0.000000e+00 : f32
    %51 = vector.broadcast %cst_71 : f32 to vector<18x1x32xf32>
    %c0_72 = arith.constant 0 : index
    %c17_73 = arith.constant 17 : index
    %c0_74 = arith.constant 0 : index
    %52 = vector.load %arg20[%c0_72, %c17_73, %c0_74] : memref<18x18x32xf32, #tpu.memory_space<vmem>>, vector<18x1x32xf32>
    tpu.vector_store %arg20[%c0_72, %c17_73, %c0_74], %51 {strides = array<i32>} : memref<18x18x32xf32, #tpu.memory_space<vmem>>, vector<18x1x32xf32>,
    %53 = vector.shape_cast %44 : vector<256x32xf32> to vector<16x16x32xf32>
    %c1_75 = arith.constant 1 : index
    %c1_76 = arith.constant 1 : index
    %c0_77 = arith.constant 0 : index
    %54 = vector.load %arg20[%c1_75, %c1_76, %c0_77] : memref<18x18x32xf32, #tpu.memory_space<vmem>>, vector<16x16x32xf32>
    tpu.vector_store %arg20[%c1_75, %c1_76, %c0_77], %53 {strides = array<i32>} : memref<18x18x32xf32, #tpu.memory_space<vmem>>, vector<16x16x32xf32>,
    %c0_78 = arith.constant 0 : index
    %c0_79 = arith.constant 0 : index
    %c0_80 = arith.constant 0 : index
    %55 = vector.load %arg20[%c0_78, %c0_79, %c0_80] : memref<18x18x32xf32, #tpu.memory_space<vmem>>, vector<16x16x32xf32>
    %c0_81 = arith.constant 0 : index
    %c1_82 = arith.constant 1 : index
    %c0_83 = arith.constant 0 : index
    %56 = vector.load %arg20[%c0_81, %c1_82, %c0_83] : memref<18x18x32xf32, #tpu.memory_space<vmem>>, vector<16x16x32xf32>
    %c0_84 = arith.constant 0 : index
    %c2_85 = arith.constant 2 : index
    %c0_86 = arith.constant 0 : index
    %57 = vector.load %arg20[%c0_84, %c2_85, %c0_86] : memref<18x18x32xf32, #tpu.memory_space<vmem>>, vector<16x16x32xf32>
    %c1_87 = arith.constant 1 : index
    %c0_88 = arith.constant 0 : index
    %c0_89 = arith.constant 0 : index
    %58 = vector.load %arg20[%c1_87, %c0_88, %c0_89] : memref<18x18x32xf32, #tpu.memory_space<vmem>>, vector<16x16x32xf32>
    %c1_90 = arith.constant 1 : index
    %c1_91 = arith.constant 1 : index
    %c0_92 = arith.constant 0 : index
    %59 = vector.load %arg20[%c1_90, %c1_91, %c0_92] : memref<18x18x32xf32, #tpu.memory_space<vmem>>, vector<16x16x32xf32>
    %c1_93 = arith.constant 1 : index
    %c2_94 = arith.constant 2 : index
    %c0_95 = arith.constant 0 : index
    %60 = vector.load %arg20[%c1_93, %c2_94, %c0_95] : memref<18x18x32xf32, #tpu.memory_space<vmem>>, vector<16x16x32xf32>
    %c2_96 = arith.constant 2 : index
    %c0_97 = arith.constant 0 : index
    %c0_98 = arith.constant 0 : index
    %61 = vector.load %arg20[%c2_96, %c0_97, %c0_98] : memref<18x18x32xf32, #tpu.memory_space<vmem>>, vector<16x16x32xf32>
    %c2_99 = arith.constant 2 : index
    %c1_100 = arith.constant 1 : index
    %c0_101 = arith.constant 0 : index
    %62 = vector.load %arg20[%c2_99, %c1_100, %c0_101] : memref<18x18x32xf32, #tpu.memory_space<vmem>>, vector<16x16x32xf32>
    %c2_102 = arith.constant 2 : index
    %c2_103 = arith.constant 2 : index
    %c0_104 = arith.constant 0 : index
    %63 = vector.load %arg20[%c2_102, %c2_103, %c0_104] : memref<18x18x32xf32, #tpu.memory_space<vmem>>, vector<16x16x32xf32>
    %64 = tpu.concatenate %55, %56, %57, %58, %59, %60, %61, %62, %63 in 2 : vector<16x16x32xf32>, vector<16x16x32xf32>, vector<16x16x32xf32>, vector<16x16x32xf32>, vector<16x16x32xf32>, vector<16x16x32xf32>, vector<16x16x32xf32>, vector<16x16x32xf32>, vector<16x16x32xf32> -> vector<16x16x288xf32>
    %65 = vector.shape_cast %64 : vector<16x16x288xf32> to vector<256x288xf32>
    %66 = arith.truncf %65 : vector<256x288xf32> to vector<256x288xbf16>
    %c0_105 = arith.constant 0 : index
    %c0_106 = arith.constant 0 : index
    %67 = vector.load %arg8[%c0_105, %c0_106] : memref<288x32xbf16, #tpu.memory_space<vmem>>, vector<288x32xbf16>
    %cst_107 = arith.constant dense<0.000000e+00> : vector<256x32xf32>
    %68 = tpu.matmul %66, %67, %cst_107 {dimension_numbers = #tpu.dot_dimension_numbers<[1], [0], [0], [1], [0, 0, 1, 1], [], []>} : vector<256x288xbf16>, vector<288x32xbf16>, vector<256x32xf32> -> vector<256x32xf32>
    %c0_108 = arith.constant 0 : index
    %c0_109 = arith.constant 0 : index
    %69 = vector.load %arg14[%c0_108, %c0_109] : memref<64x256xf32, #tpu.memory_space<vmem>>, vector<64x256xf32>
    %cst_110 = arith.constant dense<0.000000e+00> : vector<64x32xf32>
    %70 = tpu.matmul %69, %68, %cst_110 {dimension_numbers = #tpu.dot_dimension_numbers<[1], [0], [0], [1], [0, 0, 1, 1], [], []>} : vector<64x256xf32>, vector<256x32xf32>, vector<64x32xf32> -> vector<64x32xf32>
    %c0_111 = arith.constant 0 : index
    %c0_112 = arith.constant 0 : index
    %71 = vector.load %arg9[%c0_111, %c0_112] : memref<1x32xf32, #tpu.memory_space<vmem>>, vector<1x32xf32>
    %72 = vector.broadcast %71 : vector<1x32xf32> to vector<64x32xf32>
    %73 = arith.mulf %70, %72 : vector<64x32xf32>
    %c0_113 = arith.constant 0 : index
    %c0_114 = arith.constant 0 : index
    %74 = vector.load %arg10[%c0_113, %c0_114] : memref<1x32xf32, #tpu.memory_space<vmem>>, vector<1x32xf32>
    %75 = vector.broadcast %74 : vector<1x32xf32> to vector<64x32xf32>
    %76 = arith.addf %73, %75 : vector<64x32xf32>
    %cst_115 = arith.constant dense<0.000000e+00> : vector<32xf32>
    %77 = vector.multi_reduction <add>, %76, %cst_115 [0] : vector<64x32xf32> to vector<32xf32>
    %78 = vector.shape_cast %77 : vector<32xf32> to vector<1x32xf32>
    %cst_116 = arith.constant 6.400000e+01 : f32
    %79 = vector.broadcast %cst_116 : f32 to vector<1x32xf32>
    %80 = arith.divf %78, %79 : vector<1x32xf32>
    %cst_117 = arith.constant dense<0xFF800000> : vector<32xf32>
    %81 = vector.multi_reduction <maximumf>, %76, %cst_117 [0] : vector<64x32xf32> to vector<32xf32>
    %82 = vector.shape_cast %81 : vector<32xf32> to vector<1x32xf32>
    %83 = tpu.concatenate %80, %82 in 0 : vector<1x32xf32>, vector<1x32xf32> -> vector<2x32xf32>
    %c0_118 = arith.constant 0 : index
    %c0_119 = arith.constant 0 : index
    %84 = vector.load %arg11[%c0_118, %c0_119] : memref<32x2xf32, #tpu.memory_space<vmem>>, vector<32x2xf32>
    %cst_120 = arith.constant dense<0.000000e+00> : vector<2x2xf32>
    %85 = tpu.matmul %83, %84, %cst_120 {dimension_numbers = #tpu.dot_dimension_numbers<[1], [0], [0], [1], [0, 0, 1, 1], [], []>} : vector<2x32xf32>, vector<32x2xf32>, vector<2x2xf32> -> vector<2x2xf32>
    %cst_121 = arith.constant 0.000000e+00 : f32
    %86 = vector.broadcast %cst_121 : f32 to vector<2x2xf32>
    %87 = arith.maximumf %85, %86 : vector<2x2xf32>
    %c0_122 = arith.constant 0 : index
    %c0_123 = arith.constant 0 : index
    %88 = vector.load %arg12[%c0_122, %c0_123] : memref<2x32xf32, #tpu.memory_space<vmem>>, vector<2x32xf32>
    %cst_124 = arith.constant dense<0.000000e+00> : vector<2x32xf32>
    %89 = tpu.matmul %87, %88, %cst_124 {dimension_numbers = #tpu.dot_dimension_numbers<[1], [0], [0], [1], [0, 0, 1, 1], [], []>} : vector<2x2xf32>, vector<2x32xf32>, vector<2x32xf32> -> vector<2x32xf32>
    %90 = vector.extract_strided_slice %89 {offsets = [0, 0], sizes = [1, 32], strides = [1, 1]} : vector<2x32xf32> to vector<1x32xf32>
    %91 = vector.extract_strided_slice %89 {offsets = [1, 0], sizes = [1, 32], strides = [1, 1]} : vector<2x32xf32> to vector<1x32xf32>
    %92 = arith.addf %90, %91 : vector<1x32xf32>
    %cst_125 = arith.constant 0.000000e+00 : f32
    %93 = vector.broadcast %cst_125 : f32 to vector<1x32xf32>
    %94 = arith.subf %93, %92 : vector<1x32xf32>
    %95 = math.exp %94 : vector<1x32xf32>
    %cst_126 = arith.constant 1.000000e+00 : f32
    %96 = vector.broadcast %cst_126 : f32 to vector<1x32xf32>
    %97 = arith.addf %96, %95 : vector<1x32xf32>
    %98 = tpu.reciprocal %97 {approx = true} : vector<1x32xf32> -> vector<1x32xf32>
    %99 = vector.broadcast %98 : vector<1x32xf32> to vector<64x32xf32>
    %100 = arith.mulf %76, %99 : vector<64x32xf32>
    %101 = vector.shape_cast %100 : vector<64x32xf32> to vector<8x8x32xf32>
    %cst_127 = arith.constant 0.000000e+00 : f32
    %102 = vector.broadcast %cst_127 : f32 to vector<10x10x2xf32>
    %c0_128 = arith.constant 0 : index
    %c0_129 = arith.constant 0 : index
    %c0_130 = arith.constant 0 : index
    %103 = vector.load %arg21[%c0_128, %c0_129, %c0_130] : memref<10x10x2xf32, #tpu.memory_space<vmem>>, vector<10x10x2xf32>
    tpu.vector_store %arg21[%c0_128, %c0_129, %c0_130], %102 {strides = array<i32>} : memref<10x10x2xf32, #tpu.memory_space<vmem>>, vector<10x10x2xf32>,
    %cst_131 = arith.constant dense<0.000000e+00> : vector<8x8xf32>
    %104 = vector.multi_reduction <add>, %101, %cst_131 [2] : vector<8x8x32xf32> to vector<8x8xf32>
    %105 = vector.shape_cast %104 : vector<8x8xf32> to vector<8x8x1xf32>
    %cst_132 = arith.constant 3.200000e+01 : f32
    %106 = vector.broadcast %cst_132 : f32 to vector<8x8x1xf32>
    %107 = arith.divf %105, %106 : vector<8x8x1xf32>
    %c1_133 = arith.constant 1 : index
    %c1_134 = arith.constant 1 : index
    %c0_135 = arith.constant 0 : index
    %108 = vector.load %arg21[%c1_133, %c1_134, %c0_135] : memref<10x10x2xf32, #tpu.memory_space<vmem>>, vector<8x8x1xf32>
    tpu.vector_store %arg21[%c1_133, %c1_134, %c0_135], %107 {strides = array<i32>} : memref<10x10x2xf32, #tpu.memory_space<vmem>>, vector<8x8x1xf32>,
    %cst_136 = arith.constant dense<0xFF800000> : vector<8x8xf32>
    %109 = vector.multi_reduction <maximumf>, %101, %cst_136 [2] : vector<8x8x32xf32> to vector<8x8xf32>
    %110 = vector.shape_cast %109 : vector<8x8xf32> to vector<8x8x1xf32>
    %c1_137 = arith.constant 1 : index
    %c1_138 = arith.constant 1 : index
    %c1_139 = arith.constant 1 : index
    %111 = vector.load %arg21[%c1_137, %c1_138, %c1_139] : memref<10x10x2xf32, #tpu.memory_space<vmem>>, vector<8x8x1xf32>
    tpu.vector_store %arg21[%c1_137, %c1_138, %c1_139], %110 {strides = array<i32>} : memref<10x10x2xf32, #tpu.memory_space<vmem>>, vector<8x8x1xf32>,
    %cst_140 = arith.constant 0.000000e+00 : f32
    %112 = vector.broadcast %cst_140 : f32 to vector<8x8x1xf32>
    %c0_141 = arith.constant 0 : index
    %c0_142 = arith.constant 0 : index
    %c0_143 = arith.constant 0 : index
    %113 = vector.load %arg21[%c0_141, %c0_142, %c0_143] : memref<10x10x2xf32, #tpu.memory_space<vmem>>, vector<8x8x2xf32>
    %114 = vector.extract_strided_slice %113 {offsets = [0, 0, 0], sizes = [8, 8, 1], strides = [1, 1, 1]} : vector<8x8x2xf32> to vector<8x8x1xf32>
    %c0_144 = arith.constant 0 : index
    %c0_145 = arith.constant 0 : index
    %115 = memref.load %arg13[%c0_144, %c0_145] : memref<9x2xf32, #tpu.memory_space<smem>>
    %116 = vector.broadcast %115 : f32 to vector<8x8x1xf32>
    %117 = arith.mulf %114, %116 : vector<8x8x1xf32>
    %118 = arith.addf %112, %117 : vector<8x8x1xf32>
    %119 = vector.extract_strided_slice %113 {offsets = [0, 0, 1], sizes = [8, 8, 1], strides = [1, 1, 1]} : vector<8x8x2xf32> to vector<8x8x1xf32>
    %c0_146 = arith.constant 0 : index
    %c1_147 = arith.constant 1 : index
    %120 = memref.load %arg13[%c0_146, %c1_147] : memref<9x2xf32, #tpu.memory_space<smem>>
    %121 = vector.broadcast %120 : f32 to vector<8x8x1xf32>
    %122 = arith.mulf %119, %121 : vector<8x8x1xf32>
    %123 = arith.addf %118, %122 : vector<8x8x1xf32>
    %c0_148 = arith.constant 0 : index
    %c1_149 = arith.constant 1 : index
    %c0_150 = arith.constant 0 : index
    %124 = vector.load %arg21[%c0_148, %c1_149, %c0_150] : memref<10x10x2xf32, #tpu.memory_space<vmem>>, vector<8x8x2xf32>
    %125 = vector.extract_strided_slice %124 {offsets = [0, 0, 0], sizes = [8, 8, 1], strides = [1, 1, 1]} : vector<8x8x2xf32> to vector<8x8x1xf32>
    %c1_151 = arith.constant 1 : index
    %c0_152 = arith.constant 0 : index
    %126 = memref.load %arg13[%c1_151, %c0_152] : memref<9x2xf32, #tpu.memory_space<smem>>
    %127 = vector.broadcast %126 : f32 to vector<8x8x1xf32>
    %128 = arith.mulf %125, %127 : vector<8x8x1xf32>
    %129 = arith.addf %123, %128 : vector<8x8x1xf32>
    %130 = vector.extract_strided_slice %124 {offsets = [0, 0, 1], sizes = [8, 8, 1], strides = [1, 1, 1]} : vector<8x8x2xf32> to vector<8x8x1xf32>
    %c1_153 = arith.constant 1 : index
    %c1_154 = arith.constant 1 : index
    %131 = memref.load %arg13[%c1_153, %c1_154] : memref<9x2xf32, #tpu.memory_space<smem>>
    %132 = vector.broadcast %131 : f32 to vector<8x8x1xf32>
    %133 = arith.mulf %130, %132 : vector<8x8x1xf32>
    %134 = arith.addf %129, %133 : vector<8x8x1xf32>
    %c0_155 = arith.constant 0 : index
    %c2_156 = arith.constant 2 : index
    %c0_157 = arith.constant 0 : index
    %135 = vector.load %arg21[%c0_155, %c2_156, %c0_157] : memref<10x10x2xf32, #tpu.memory_space<vmem>>, vector<8x8x2xf32>
    %136 = vector.extract_strided_slice %135 {offsets = [0, 0, 0], sizes = [8, 8, 1], strides = [1, 1, 1]} : vector<8x8x2xf32> to vector<8x8x1xf32>
    %c2_158 = arith.constant 2 : index
    %c0_159 = arith.constant 0 : index
    %137 = memref.load %arg13[%c2_158, %c0_159] : memref<9x2xf32, #tpu.memory_space<smem>>
    %138 = vector.broadcast %137 : f32 to vector<8x8x1xf32>
    %139 = arith.mulf %136, %138 : vector<8x8x1xf32>
    %140 = arith.addf %134, %139 : vector<8x8x1xf32>
    %141 = vector.extract_strided_slice %135 {offsets = [0, 0, 1], sizes = [8, 8, 1], strides = [1, 1, 1]} : vector<8x8x2xf32> to vector<8x8x1xf32>
    %c2_160 = arith.constant 2 : index
    %c1_161 = arith.constant 1 : index
    %142 = memref.load %arg13[%c2_160, %c1_161] : memref<9x2xf32, #tpu.memory_space<smem>>
    %143 = vector.broadcast %142 : f32 to vector<8x8x1xf32>
    %144 = arith.mulf %141, %143 : vector<8x8x1xf32>
    %145 = arith.addf %140, %144 : vector<8x8x1xf32>
    %c1_162 = arith.constant 1 : index
    %c0_163 = arith.constant 0 : index
    %c0_164 = arith.constant 0 : index
    %146 = vector.load %arg21[%c1_162, %c0_163, %c0_164] : memref<10x10x2xf32, #tpu.memory_space<vmem>>, vector<8x8x2xf32>
    %147 = vector.extract_strided_slice %146 {offsets = [0, 0, 0], sizes = [8, 8, 1], strides = [1, 1, 1]} : vector<8x8x2xf32> to vector<8x8x1xf32>
    %c3 = arith.constant 3 : index
    %c0_165 = arith.constant 0 : index
    %148 = memref.load %arg13[%c3, %c0_165] : memref<9x2xf32, #tpu.memory_space<smem>>
    %149 = vector.broadcast %148 : f32 to vector<8x8x1xf32>
    %150 = arith.mulf %147, %149 : vector<8x8x1xf32>
    %151 = arith.addf %145, %150 : vector<8x8x1xf32>
    %152 = vector.extract_strided_slice %146 {offsets = [0, 0, 1], sizes = [8, 8, 1], strides = [1, 1, 1]} : vector<8x8x2xf32> to vector<8x8x1xf32>
    %c3_166 = arith.constant 3 : index
    %c1_167 = arith.constant 1 : index
    %153 = memref.load %arg13[%c3_166, %c1_167] : memref<9x2xf32, #tpu.memory_space<smem>>
    %154 = vector.broadcast %153 : f32 to vector<8x8x1xf32>
    %155 = arith.mulf %152, %154 : vector<8x8x1xf32>
    %156 = arith.addf %151, %155 : vector<8x8x1xf32>
    %c1_168 = arith.constant 1 : index
    %c1_169 = arith.constant 1 : index
    %c0_170 = arith.constant 0 : index
    %157 = vector.load %arg21[%c1_168, %c1_169, %c0_170] : memref<10x10x2xf32, #tpu.memory_space<vmem>>, vector<8x8x2xf32>
    %158 = vector.extract_strided_slice %157 {offsets = [0, 0, 0], sizes = [8, 8, 1], strides = [1, 1, 1]} : vector<8x8x2xf32> to vector<8x8x1xf32>
    %c4 = arith.constant 4 : index
    %c0_171 = arith.constant 0 : index
    %159 = memref.load %arg13[%c4, %c0_171] : memref<9x2xf32, #tpu.memory_space<smem>>
    %160 = vector.broadcast %159 : f32 to vector<8x8x1xf32>
    %161 = arith.mulf %158, %160 : vector<8x8x1xf32>
    %162 = arith.addf %156, %161 : vector<8x8x1xf32>
    %163 = vector.extract_strided_slice %157 {offsets = [0, 0, 1], sizes = [8, 8, 1], strides = [1, 1, 1]} : vector<8x8x2xf32> to vector<8x8x1xf32>
    %c4_172 = arith.constant 4 : index
    %c1_173 = arith.constant 1 : index
    %164 = memref.load %arg13[%c4_172, %c1_173] : memref<9x2xf32, #tpu.memory_space<smem>>
    %165 = vector.broadcast %164 : f32 to vector<8x8x1xf32>
    %166 = arith.mulf %163, %165 : vector<8x8x1xf32>
    %167 = arith.addf %162, %166 : vector<8x8x1xf32>
    %c1_174 = arith.constant 1 : index
    %c2_175 = arith.constant 2 : index
    %c0_176 = arith.constant 0 : index
    %168 = vector.load %arg21[%c1_174, %c2_175, %c0_176] : memref<10x10x2xf32, #tpu.memory_space<vmem>>, vector<8x8x2xf32>
    %169 = vector.extract_strided_slice %168 {offsets = [0, 0, 0], sizes = [8, 8, 1], strides = [1, 1, 1]} : vector<8x8x2xf32> to vector<8x8x1xf32>
    %c5 = arith.constant 5 : index
    %c0_177 = arith.constant 0 : index
    %170 = memref.load %arg13[%c5, %c0_177] : memref<9x2xf32, #tpu.memory_space<smem>>
    %171 = vector.broadcast %170 : f32 to vector<8x8x1xf32>
    %172 = arith.mulf %169, %171 : vector<8x8x1xf32>
    %173 = arith.addf %167, %172 : vector<8x8x1xf32>
    %174 = vector.extract_strided_slice %168 {offsets = [0, 0, 1], sizes = [8, 8, 1], strides = [1, 1, 1]} : vector<8x8x2xf32> to vector<8x8x1xf32>
    %c5_178 = arith.constant 5 : index
    %c1_179 = arith.constant 1 : index
    %175 = memref.load %arg13[%c5_178, %c1_179] : memref<9x2xf32, #tpu.memory_space<smem>>
    %176 = vector.broadcast %175 : f32 to vector<8x8x1xf32>
    %177 = arith.mulf %174, %176 : vector<8x8x1xf32>
    %178 = arith.addf %173, %177 : vector<8x8x1xf32>
    %c2_180 = arith.constant 2 : index
    %c0_181 = arith.constant 0 : index
    %c0_182 = arith.constant 0 : index
    %179 = vector.load %arg21[%c2_180, %c0_181, %c0_182] : memref<10x10x2xf32, #tpu.memory_space<vmem>>, vector<8x8x2xf32>
    %180 = vector.extract_strided_slice %179 {offsets = [0, 0, 0], sizes = [8, 8, 1], strides = [1, 1, 1]} : vector<8x8x2xf32> to vector<8x8x1xf32>
    %c6 = arith.constant 6 : index
    %c0_183 = arith.constant 0 : index
    %181 = memref.load %arg13[%c6, %c0_183] : memref<9x2xf32, #tpu.memory_space<smem>>
    %182 = vector.broadcast %181 : f32 to vector<8x8x1xf32>
    %183 = arith.mulf %180, %182 : vector<8x8x1xf32>
    %184 = arith.addf %178, %183 : vector<8x8x1xf32>
    %185 = vector.extract_strided_slice %179 {offsets = [0, 0, 1], sizes = [8, 8, 1], strides = [1, 1, 1]} : vector<8x8x2xf32> to vector<8x8x1xf32>
    %c6_184 = arith.constant 6 : index
    %c1_185 = arith.constant 1 : index
    %186 = memref.load %arg13[%c6_184, %c1_185] : memref<9x2xf32, #tpu.memory_space<smem>>
    %187 = vector.broadcast %186 : f32 to vector<8x8x1xf32>
    %188 = arith.mulf %185, %187 : vector<8x8x1xf32>
    %189 = arith.addf %184, %188 : vector<8x8x1xf32>
    %c2_186 = arith.constant 2 : index
    %c1_187 = arith.constant 1 : index
    %c0_188 = arith.constant 0 : index
    %190 = vector.load %arg21[%c2_186, %c1_187, %c0_188] : memref<10x10x2xf32, #tpu.memory_space<vmem>>, vector<8x8x2xf32>
    %191 = vector.extract_strided_slice %190 {offsets = [0, 0, 0], sizes = [8, 8, 1], strides = [1, 1, 1]} : vector<8x8x2xf32> to vector<8x8x1xf32>
    %c7 = arith.constant 7 : index
    %c0_189 = arith.constant 0 : index
    %192 = memref.load %arg13[%c7, %c0_189] : memref<9x2xf32, #tpu.memory_space<smem>>
    %193 = vector.broadcast %192 : f32 to vector<8x8x1xf32>
    %194 = arith.mulf %191, %193 : vector<8x8x1xf32>
    %195 = arith.addf %189, %194 : vector<8x8x1xf32>
    %196 = vector.extract_strided_slice %190 {offsets = [0, 0, 1], sizes = [8, 8, 1], strides = [1, 1, 1]} : vector<8x8x2xf32> to vector<8x8x1xf32>
    %c7_190 = arith.constant 7 : index
    %c1_191 = arith.constant 1 : index
    %197 = memref.load %arg13[%c7_190, %c1_191] : memref<9x2xf32, #tpu.memory_space<smem>>
    %198 = vector.broadcast %197 : f32 to vector<8x8x1xf32>
    %199 = arith.mulf %196, %198 : vector<8x8x1xf32>
    %200 = arith.addf %195, %199 : vector<8x8x1xf32>
    %c2_192 = arith.constant 2 : index
    %c2_193 = arith.constant 2 : index
    %c0_194 = arith.constant 0 : index
    %201 = vector.load %arg21[%c2_192, %c2_193, %c0_194] : memref<10x10x2xf32, #tpu.memory_space<vmem>>, vector<8x8x2xf32>
    %202 = vector.extract_strided_slice %201 {offsets = [0, 0, 0], sizes = [8, 8, 1], strides = [1, 1, 1]} : vector<8x8x2xf32> to vector<8x8x1xf32>
    %c8 = arith.constant 8 : index
    %c0_195 = arith.constant 0 : index
    %203 = memref.load %arg13[%c8, %c0_195] : memref<9x2xf32, #tpu.memory_space<smem>>
    %204 = vector.broadcast %203 : f32 to vector<8x8x1xf32>
    %205 = arith.mulf %202, %204 : vector<8x8x1xf32>
    %206 = arith.addf %200, %205 : vector<8x8x1xf32>
    %207 = vector.extract_strided_slice %201 {offsets = [0, 0, 1], sizes = [8, 8, 1], strides = [1, 1, 1]} : vector<8x8x2xf32> to vector<8x8x1xf32>
    %c8_196 = arith.constant 8 : index
    %c1_197 = arith.constant 1 : index
    %208 = memref.load %arg13[%c8_196, %c1_197] : memref<9x2xf32, #tpu.memory_space<smem>>
    %209 = vector.broadcast %208 : f32 to vector<8x8x1xf32>
    %210 = arith.mulf %207, %209 : vector<8x8x1xf32>
    %211 = arith.addf %206, %210 : vector<8x8x1xf32>
    %212 = vector.shape_cast %211 : vector<8x8x1xf32> to vector<64x1xf32>
    %cst_198 = arith.constant 0.000000e+00 : f32
    %213 = vector.broadcast %cst_198 : f32 to vector<64x1xf32>
    %214 = arith.subf %213, %212 : vector<64x1xf32>
    %215 = math.exp %214 : vector<64x1xf32>
    %cst_199 = arith.constant 1.000000e+00 : f32
    %216 = vector.broadcast %cst_199 : f32 to vector<64x1xf32>
    %217 = arith.addf %216, %215 : vector<64x1xf32>
    %218 = tpu.reciprocal %217 {approx = true} : vector<64x1xf32> -> vector<64x1xf32>
    %219 = vector.broadcast %218 : vector<64x1xf32> to vector<64x32xf32>
    %220 = arith.mulf %100, %219 : vector<64x32xf32>
    %221 = vector.shape_cast %1 : vector<16x16x16xf32> to vector<256x16xf32>
    %c0_200 = arith.constant 0 : index
    %c0_201 = arith.constant 0 : index
    %222 = vector.load %arg14[%c0_200, %c0_201] : memref<64x256xf32, #tpu.memory_space<vmem>>, vector<64x256xf32>
    %cst_202 = arith.constant dense<0.000000e+00> : vector<64x16xf32>
    %223 = tpu.matmul %222, %221, %cst_202 {dimension_numbers = #tpu.dot_dimension_numbers<[1], [0], [0], [1], [0, 0, 1, 1], [], []>} : vector<64x256xf32>, vector<256x16xf32>, vector<64x16xf32> -> vector<64x16xf32>
    %c0_203 = arith.constant 0 : index
    %c0_204 = arith.constant 0 : index
    %224 = vector.load %arg15[%c0_203, %c0_204] : memref<16x32xf32, #tpu.memory_space<vmem>>, vector<16x32xf32>
    %cst_205 = arith.constant dense<0.000000e+00> : vector<64x32xf32>
    %225 = tpu.matmul %223, %224, %cst_205 {dimension_numbers = #tpu.dot_dimension_numbers<[1], [0], [0], [1], [0, 0, 1, 1], [], []>} : vector<64x16xf32>, vector<16x32xf32>, vector<64x32xf32> -> vector<64x32xf32>
    %c0_206 = arith.constant 0 : index
    %c0_207 = arith.constant 0 : index
    %226 = vector.load %arg16[%c0_206, %c0_207] : memref<1x32xf32, #tpu.memory_space<vmem>>, vector<1x32xf32>
    %227 = vector.broadcast %226 : vector<1x32xf32> to vector<64x32xf32>
    %228 = arith.mulf %225, %227 : vector<64x32xf32>
    %c0_208 = arith.constant 0 : index
    %c0_209 = arith.constant 0 : index
    %229 = vector.load %arg17[%c0_208, %c0_209] : memref<1x32xf32, #tpu.memory_space<vmem>>, vector<1x32xf32>
    %230 = vector.broadcast %229 : vector<1x32xf32> to vector<64x32xf32>
    %231 = arith.addf %228, %230 : vector<64x32xf32>
    %232 = arith.addf %231, %220 : vector<64x32xf32>
    %233 = vector.shape_cast %232 : vector<64x32xf32> to vector<8x8x32xf32>
    %c0_210 = arith.constant 0 : index
    %c0_211 = arith.constant 0 : index
    %c0_212 = arith.constant 0 : index
    %c0_213 = arith.constant 0 : index
    %234 = vector.load %arg18[%c0_210, %c0_211, %c0_212, %c0_213] : memref<1x8x8x32xf32, #tpu.memory_space<vmem>>, vector<1x8x8x32xf32>
    %235 = vector.shape_cast %234 : vector<1x8x8x32xf32> to vector<8x8x32xf32>
    %236 = vector.shape_cast %233 : vector<8x8x32xf32> to vector<1x8x8x32xf32>
    tpu.vector_store %arg18[%c0_210, %c0_211, %c0_212, %c0_213], %236 {strides = array<i32>} : memref<1x8x8x32xf32, #tpu.memory_space<vmem>>, vector<1x8x8x32xf32>,
    return
  }
  func.func @transform_0(%arg0: i32) -> (i32, i32, i32, i32) {
    %c0_i32 = arith.constant 0 : i32
    %c0_i32_0 = arith.constant 0 : i32
    %c0_i32_1 = arith.constant 0 : i32
    %c0_i32_2 = arith.constant 0 : i32
    return %arg0, %c0_i32, %c0_i32_0, %c0_i32_1 : i32, i32, i32, i32
  }
  func.func @transform_1(%arg0: i32) -> (i32, i32) {
    %c0_i32 = arith.constant 0 : i32
    %c0_i32_0 = arith.constant 0 : i32
    %c0_i32_1 = arith.constant 0 : i32
    return %c0_i32, %c0_i32_0 : i32, i32
  }
  func.func @transform_2(%arg0: i32) -> (i32, i32) {
    %c0_i32 = arith.constant 0 : i32
    %c0_i32_0 = arith.constant 0 : i32
    %c0_i32_1 = arith.constant 0 : i32
    return %c0_i32, %c0_i32_0 : i32, i32
  }
  func.func @transform_3(%arg0: i32) -> (i32, i32) {
    %c0_i32 = arith.constant 0 : i32
    %c0_i32_0 = arith.constant 0 : i32
    %c0_i32_1 = arith.constant 0 : i32
    return %c0_i32, %c0_i32_0 : i32, i32
  }
  func.func @transform_4(%arg0: i32) -> (i32, i32) {
    %c0_i32 = arith.constant 0 : i32
    %c0_i32_0 = arith.constant 0 : i32
    %c0_i32_1 = arith.constant 0 : i32
    return %c0_i32, %c0_i32_0 : i32, i32
  }
  func.func @transform_5(%arg0: i32) -> (i32, i32) {
    %c0_i32 = arith.constant 0 : i32
    %c0_i32_0 = arith.constant 0 : i32
    %c0_i32_1 = arith.constant 0 : i32
    return %c0_i32, %c0_i32_0 : i32, i32
  }
  func.func @transform_6(%arg0: i32) -> (i32, i32) {
    %c0_i32 = arith.constant 0 : i32
    %c0_i32_0 = arith.constant 0 : i32
    %c0_i32_1 = arith.constant 0 : i32
    return %c0_i32, %c0_i32_0 : i32, i32
  }
  func.func @transform_7(%arg0: i32) -> (i32, i32) {
    %c0_i32 = arith.constant 0 : i32
    %c0_i32_0 = arith.constant 0 : i32
    %c0_i32_1 = arith.constant 0 : i32
    return %c0_i32, %c0_i32_0 : i32, i32
  }
  func.func @transform_8(%arg0: i32) -> (i32, i32) {
    %c0_i32 = arith.constant 0 : i32
    %c0_i32_0 = arith.constant 0 : i32
    %c0_i32_1 = arith.constant 0 : i32
    return %c0_i32, %c0_i32_0 : i32, i32
  }
  func.func @transform_9(%arg0: i32) -> (i32, i32) {
    %c0_i32 = arith.constant 0 : i32
    %c0_i32_0 = arith.constant 0 : i32
    %c0_i32_1 = arith.constant 0 : i32
    return %c0_i32, %c0_i32_0 : i32, i32
  }
  func.func @transform_10(%arg0: i32) -> (i32, i32) {
    %c0_i32 = arith.constant 0 : i32
    %c0_i32_0 = arith.constant 0 : i32
    %c0_i32_1 = arith.constant 0 : i32
    return %c0_i32, %c0_i32_0 : i32, i32
  }
  func.func @transform_11(%arg0: i32) -> (i32, i32) {
    %c0_i32 = arith.constant 0 : i32
    %c0_i32_0 = arith.constant 0 : i32
    %c0_i32_1 = arith.constant 0 : i32
    return %c0_i32, %c0_i32_0 : i32, i32
  }
  func.func @transform_12(%arg0: i32) -> (i32, i32) {
    %c0_i32 = arith.constant 0 : i32
    %c0_i32_0 = arith.constant 0 : i32
    %c0_i32_1 = arith.constant 0 : i32
    return %c0_i32, %c0_i32_0 : i32, i32
  }
  func.func @transform_13(%arg0: i32) -> (i32, i32) {
    %c0_i32 = arith.constant 0 : i32
    %c0_i32_0 = arith.constant 0 : i32
    %c0_i32_1 = arith.constant 0 : i32
    return %c0_i32, %c0_i32_0 : i32, i32
  }
  func.func @transform_14(%arg0: i32) -> (i32, i32) {
    %c0_i32 = arith.constant 0 : i32
    %c0_i32_0 = arith.constant 0 : i32
    %c0_i32_1 = arith.constant 0 : i32
    return %c0_i32, %c0_i32_0 : i32, i32
  }
  func.func @transform_15(%arg0: i32) -> (i32, i32) {
    %c0_i32 = arith.constant 0 : i32
    %c0_i32_0 = arith.constant 0 : i32
    %c0_i32_1 = arith.constant 0 : i32
    return %c0_i32, %c0_i32_0 : i32, i32
  }
  func.func @transform_16(%arg0: i32) -> (i32, i32) {
    %c0_i32 = arith.constant 0 : i32
    %c0_i32_0 = arith.constant 0 : i32
    %c0_i32_1 = arith.constant 0 : i32
    return %c0_i32, %c0_i32_0 : i32, i32
  }
  func.func @transform_17(%arg0: i32) -> (i32, i32, i32, i32) {
    %c0_i32 = arith.constant 0 : i32
    %c0_i32_0 = arith.constant 0 : i32
    %c0_i32_1 = arith.constant 0 : i32
    %c0_i32_2 = arith.constant 0 : i32
    return %arg0, %c0_i32, %c0_i32_0, %c0_i32_1 : i32, i32, i32, i32
  }
}

</mosaic_0001>

<llo_original>
// kernel: tpu_custom_call.1
$region0: #{tpu_custom_call.1}
  #allocation0 [shape = 'u32[]', space=smem, size = 0x4, offset = 0x4, fixed_abs, tag = 'smem constant byte address 0x4 - core index']
  #allocation1 [shape = 'u32[144,128]{1,0:T(1,128)}', space=vmem, size = 0x12000, scoped, tag = 'internal scratch']
  #allocation2 [shape = 'f32[18,18,16]{2,1,0:T(8,128)}', space=vmem, size = 0x36000, scoped, tag = 'scratch operand']
  #allocation3 [shape = 'f32[18,18,32]{2,1,0:T(8,128)}', space=vmem, size = 0x36000, scoped, tag = 'scratch operand']
  #allocation4 [shape = 'f32[10,10,2]{2,1,0:T(8,128)}', space=vmem, size = 0x14000, scoped, tag = 'scratch operand']
  %s0 = inlined_call_operand.hbm [shape: f32[2,16,16,16], index: 0, kind: input, shape index: {}]
  %s1 = inlined_call_operand.vmem [shape: f32[1,16], index: 1, kind: input, shape index: {}]
  %s2 = inlined_call_operand.vmem [shape: f32[1,16], index: 2, kind: input, shape index: {}]
  %s3 = inlined_call_operand.vmem [shape: bf16[144,32], index: 3, kind: input, shape index: {}]
  %s4 = inlined_call_operand.vmem [shape: f32[1,32], index: 4, kind: input, shape index: {}]
  %s5 = inlined_call_operand.vmem [shape: f32[1,32], index: 5, kind: input, shape index: {}]
  %s6 = inlined_call_operand.vmem [shape: f32[1,32], index: 6, kind: input, shape index: {}]
  %s7 = inlined_call_operand.vmem [shape: bf16[288,32], index: 7, kind: input, shape index: {}]
  %s8 = inlined_call_operand.vmem [shape: f32[1,32], index: 8, kind: input, shape index: {}]
  %s9 = inlined_call_operand.vmem [shape: f32[1,32], index: 9, kind: input, shape index: {}]
  %s10 = inlined_call_operand.vmem [shape: f32[32,2], index: 10, kind: input, shape index: {}]
  %s11 = inlined_call_operand.vmem [shape: f32[2,32], index: 11, kind: input, shape index: {}]
  %s12 = inlined_call_operand.vmem [shape: f32[9,2], index: 12, kind: input, shape index: {}]
  %s13 = inlined_call_operand.vmem [shape: f32[64,256], index: 13, kind: input, shape index: {}]
  %s14 = inlined_call_operand.vmem [shape: f32[16,32], index: 14, kind: input, shape index: {}]
  %s15 = inlined_call_operand.vmem [shape: f32[1,32], index: 15, kind: input, shape index: {}]
  %s16 = inlined_call_operand.vmem [shape: f32[1,32], index: 16, kind: input, shape index: {}]
  %s17 = inlined_call_operand.hbm [shape: f32[2,8,8,32], index: 17, kind: output, shape index: {}]
  %s18 = sld [smem:[#allocation0]]
  $region109: #{tpu_custom_call.1} parent=0
    _
  %s20 = ssub.s32 1, %s18
  %s21 = scalar_select 0, %s20, %s18
  $region1: #{tpu_custom_call.1} parent=0
    #allocation5 [shape = 'u8[262144]{0}', space=vmem, size = 0x40000, scoped, tag = 'input window, operand 0']
    #allocation6 [shape = 's32[2]{0}', space=sflag, size = 0x8, scoped, tag = 'scoped memory for tpu_custom_call.1']
    #allocation7 [shape = 's32[2]{0}', space=sflag, size = 0x8, scoped, tag = 'scoped memory for tpu_custom_call.1']
    #allocation8 [shape = 's32[2]{0}', space=sflag, size = 0x8, scoped, tag = 'scoped memory for tpu_custom_call.1']
    #allocation9 [shape = 'u8[8192]{0}', space=smem, size = 0x2000, scoped, tag = 'input window, operand 12, single buffered']
    #allocation10 [shape = 'u8[65536]{0}', space=vmem, size = 0x10000, scoped, tag = 'output window, operand 0']
    %22 = vsyncpa [#allocation6], 0
    %s23 = scalar_lea.sflag [#allocation6], 1
    %24 = vsyncpa %s23, 0
    %25 = vsyncpa [#allocation8], 0
    %26 = vsyncpa [#allocation7], 0
    %s27 = scalar_lea.sflag [#allocation7], 1
    %28 = vsyncpa %s27, 0
    loop: start=0, step=1, limit=4
    $region2: #{tpu_custom_call.1} parent=1 // loop_pre_header
      _
    $region3: #{tpu_custom_call.1} parent=1 // loop_header
      %s30 = sphi 0, %s34
      %p31 = scmp.ge.s32.totalorder %s30, 4
      %s40 = sphi 0, %s42
      %s43 = sphi 0, %s40
      %s44 = sphi 0, %s43
      %s60 = sphi 0, %s44
      %s64 = sphi 0, %s64
      %s66 = sphi 0, %s64
      %s67 = sphi 0, %s66
      %s81 = sphi 0, %s67
      %s85 = sphi 0, %s85
      %s87 = sphi 0, %s85
      %s88 = sphi 0, %s87
      %s102 = sphi 0, %s88
      %s106 = sphi 0, %s106
      %s108 = sphi 0, %s106
      %s109 = sphi 0, %s108
      %s123 = sphi 0, %s109
      %s127 = sphi 0, %s127
      %s129 = sphi 0, %s127
      %s130 = sphi 0, %s129
      %s144 = sphi 0, %s130
      %s148 = sphi 0, %s148
      %s150 = sphi 0, %s148
      %s151 = sphi 0, %s150
      %s165 = sphi 0, %s151
      %s169 = sphi 0, %s169
      %s171 = sphi 0, %s169
      %s172 = sphi 0, %s171
      %s186 = sphi 0, %s172
      %s190 = sphi 0, %s190
      %s192 = sphi 0, %s190
      %s193 = sphi 0, %s192
      %s207 = sphi 0, %s193
      %s211 = sphi 0, %s211
      %s213 = sphi 0, %s211
      %s214 = sphi 0, %s213
      %s228 = sphi 0, %s214
      %s232 = sphi 0, %s232
      %s234 = sphi 0, %s232
      %s235 = sphi 0, %s234
      %s249 = sphi 0, %s235
      %s253 = sphi 0, %s253
      %s255 = sphi 0, %s253
      %s256 = sphi 0, %s255
      %s270 = sphi 0, %s256
      %s274 = sphi 0, %s274
      %s276 = sphi 0, %s274
      %s277 = sphi 0, %s276
      %s291 = sphi 0, %s277
      %s295 = sphi 0, %s295
      %s297 = sphi 0, %s295
      %s298 = sphi 0, %s297
      %s312 = sphi 0, %s298
      %s316 = sphi 0, %s316
      %s318 = sphi 0, %s316
      %s319 = sphi 0, %s318
      %s333 = sphi 0, %s319
      %s337 = sphi 0, %s337
      %s339 = sphi 0, %s337
      %s340 = sphi 0, %s339
      %s354 = sphi 0, %s340
      %s358 = sphi 0, %s358
      %s360 = sphi 0, %s358
      %s361 = sphi 0, %s360
      %s375 = sphi 0, %s361
      %s379 = sphi 0, %s379
      %s381 = sphi 0, %s379
      %s382 = sphi 0, %s381
      %s396 = sphi 0, %s382
      %s402 = sphi 0, %s404
      %s405 = sphi 0, %s402
      %s406 = sphi 0, %s405
      %s422 = sphi 0, %s406
    $region4: #{tpu_custom_call.1} parent=1 // loop_header_branch
      %33 = sbr.rel (%p31) target = $region8
    $region5: #{tpu_custom_call.1} parent=1 // loop_body
      %s35 = ssub.s32 %s30, 1
      %s36 = ssub.s32 %s30, 2
      %s37 = sadd.s32 %s30, 1
      %s38 = ssub.s32 %s30, %s37
      %p39 = scmp.eq.s32.totalorder %s38, 0
      %s41 = sadd.s32 %s40, 1
      %s42 = scalar_select %p39, %s40, %s41
      %p45 = pneg %p39
      %p46 = scmp.eq.s32.totalorder %s30, 1
      %p47 = por %p45, %p46
      %p48 = scmp.ne.s32.totalorder %s40, %s43
      %p49 = scmp.eq.s32.totalorder %s30, 0
      %p50 = por %p48, %p49
      %p51 = scmp.ne.s32.totalorder %s40, %s43
      %p52 = scmp.eq.s32.totalorder %s35, 1
      %p53 = por %p51, %p52
      %p54 = scmp.ne.s32.totalorder %s43, %s44
      %p55 = scmp.eq.s32.totalorder %s35, 0
      %p56 = por %p54, %p55
      %p57 = scmp.ne.s32.totalorder %s43, %s44
      %p58 = scmp.eq.s32.totalorder %s36, 1
      %p59 = por %p57, %p58
      %p61 = scmp.ne.s32.totalorder %s44, %s60
      %p62 = scmp.eq.s32.totalorder %s36, 0
      %p63 = por %p61, %p62
      %s65 = sadd.s32 %s64, 1
      %p68 = scmp.eq.s32.totalorder %s30, 1
      %p69 = scmp.ne.s32.totalorder %s64, %s66
      %p70 = scmp.eq.s32.totalorder %s30, 0
      %p71 = por %p69, %p70
      %p72 = scmp.ne.s32.totalorder %s64, %s66
      %p73 = scmp.eq.s32.totalorder %s35, 1
      %p74 = por %p72, %p73
      %p75 = scmp.ne.s32.totalorder %s66, %s67
      %p76 = scmp.eq.s32.totalorder %s35, 0
      %p77 = por %p75, %p76
      %p78 = scmp.ne.s32.totalorder %s66, %s67
      %p79 = scmp.eq.s32.totalorder %s36, 1
      %p80 = por %p78, %p79
      %p82 = scmp.ne.s32.totalorder %s67, %s81
      %p83 = scmp.eq.s32.totalorder %s36, 0
      %p84 = por %p82, %p83
      %s86 = sadd.s32 %s85, 1
      %p89 = scmp.eq.s32.totalorder %s30, 1
      %p90 = scmp.ne.s32.totalorder %s85, %s87
      %p91 = scmp.eq.s32.totalorder %s30, 0
      %p92 = por %p90, %p91
      %p93 = scmp.ne.s32.totalorder %s85, %s87
      %p94 = scmp.eq.s32.totalorder %s35, 1
      %p95 = por %p93, %p94
      %p96 = scmp.ne.s32.totalorder %s87, %s88
      %p97 = scmp.eq.s32.totalorder %s35, 0
      %p98 = por %p96, %p97
      %p99 = scmp.ne.s32.totalorder %s87, %s88
      %p100 = scmp.eq.s32.totalorder %s36, 1
      %p101 = por %p99, %p100
      %p103 = scmp.ne.s32.totalorder %s88, %s102
      %p104 = scmp.eq.s32.totalorder %s36, 0
      %p105 = por %p103, %p104
      %s107 = sadd.s32 %s106, 1
      %p110 = scmp.eq.s32.totalorder %s30, 1
      %p111 = scmp.ne.s32.totalorder %s106, %s108
      %p112 = scmp.eq.s32.totalorder %s30, 0
      %p113 = por %p111, %p112
      %p114 = scmp.ne.s32.totalorder %s106, %s108
      %p115 = scmp.eq.s32.totalorder %s35, 1
      %p116 = por %p114, %p115
      %p117 = scmp.ne.s32.totalorder %s108, %s109
      %p118 = scmp.eq.s32.totalorder %s35, 0
      %p119 = por %p117, %p118
      %p120 = scmp.ne.s32.totalorder %s108, %s109
      %p121 = scmp.eq.s32.totalorder %s36, 1
      %p122 = por %p120, %p121
      %p124 = scmp.ne.s32.totalorder %s109, %s123
      %p125 = scmp.eq.s32.totalorder %s36, 0
      %p126 = por %p124, %p125
      %s128 = sadd.s32 %s127, 1
      %p131 = scmp.eq.s32.totalorder %s30, 1
      %p132 = scmp.ne.s32.totalorder %s127, %s129
      %p133 = scmp.eq.s32.totalorder %s30, 0
      %p134 = por %p132, %p133
      %p135 = scmp.ne.s32.totalorder %s127, %s129
      %p136 = scmp.eq.s32.totalorder %s35, 1
      %p137 = por %p135, %p136
      %p138 = scmp.ne.s32.totalorder %s129, %s130
      %p139 = scmp.eq.s32.totalorder %s35, 0
      %p140 = por %p138, %p139
      %p141 = scmp.ne.s32.totalorder %s129, %s130
      %p142 = scmp.eq.s32.totalorder %s36, 1
      %p143 = por %p141, %p142
      %p145 = scmp.ne.s32.totalorder %s130, %s144
      %p146 = scmp.eq.s32.totalorder %s36, 0
      %p147 = por %p145, %p146
      %s149 = sadd.s32 %s148, 1
      %p152 = scmp.eq.s32.totalorder %s30, 1
      %p153 = scmp.ne.s32.totalorder %s148, %s150
      %p154 = scmp.eq.s32.totalorder %s30, 0
      %p155 = por %p153, %p154
      %p156 = scmp.ne.s32.totalorder %s148, %s150
      %p157 = scmp.eq.s32.totalorder %s35, 1
      %p158 = por %p156, %p157
      %p159 = scmp.ne.s32.totalorder %s150, %s151
      %p160 = scmp.eq.s32.totalorder %s35, 0
      %p161 = por %p159, %p160
      %p162 = scmp.ne.s32.totalorder %s150, %s151
      %p163 = scmp.eq.s32.totalorder %s36, 1
      %p164 = por %p162, %p163
      %p166 = scmp.ne.s32.totalorder %s151, %s165
      %p167 = scmp.eq.s32.totalorder %s36, 0
      %p168 = por %p166, %p167
      %s170 = sadd.s32 %s169, 1
      %p173 = scmp.eq.s32.totalorder %s30, 1
      %p174 = scmp.ne.s32.totalorder %s169, %s171
      %p175 = scmp.eq.s32.totalorder %s30, 0
      %p176 = por %p174, %p175
      %p177 = scmp.ne.s32.totalorder %s169, %s171
      %p178 = scmp.eq.s32.totalorder %s35, 1
      %p179 = por %p177, %p178
      %p180 = scmp.ne.s32.totalorder %s171, %s172
      %p181 = scmp.eq.s32.totalorder %s35, 0
      %p182 = por %p180, %p181
      %p183 = scmp.ne.s32.totalorder %s171, %s172
      %p184 = scmp.eq.s32.totalorder %s36, 1
      %p185 = por %p183, %p184
      %p187 = scmp.ne.s32.totalorder %s172, %s186
      %p188 = scmp.eq.s32.totalorder %s36, 0
      %p189 = por %p187, %p188
      %s191 = sadd.s32 %s190, 1
      %p194 = scmp.eq.s32.totalorder %s30, 1
      %p195 = scmp.ne.s32.totalorder %s190, %s192
      %p196 = scmp.eq.s32.totalorder %s30, 0
      %p197 = por %p195, %p196
      %p198 = scmp.ne.s32.totalorder %s190, %s192
      %p199 = scmp.eq.s32.totalorder %s35, 1
      %p200 = por %p198, %p199
      %p201 = scmp.ne.s32.totalorder %s192, %s193
      %p202 = scmp.eq.s32.totalorder %s35, 0
      %p203 = por %p201, %p202
      %p204 = scmp.ne.s32.totalorder %s192, %s193
      %p205 = scmp.eq.s32.totalorder %s36, 1
      %p206 = por %p204, %p205
      %p208 = scmp.ne.s32.totalorder %s193, %s207
      %p209 = scmp.eq.s32.totalorder %s36, 0
      %p210 = por %p208, %p209
      %s212 = sadd.s32 %s211, 1
      %p215 = scmp.eq.s32.totalorder %s30, 1
      %p216 = scmp.ne.s32.totalorder %s211, %s213
      %p217 = scmp.eq.s32.totalorder %s30, 0
      %p218 = por %p216, %p217
      %p219 = scmp.ne.s32.totalorder %s211, %s213
      %p220 = scmp.eq.s32.totalorder %s35, 1
      %p221 = por %p219, %p220
      %p222 = scmp.ne.s32.totalorder %s213, %s214
      %p223 = scmp.eq.s32.totalorder %s35, 0
      %p224 = por %p222, %p223
      %p225 = scmp.ne.s32.totalorder %s213, %s214
      %p226 = scmp.eq.s32.totalorder %s36, 1
      %p227 = por %p225, %p226
      %p229 = scmp.ne.s32.totalorder %s214, %s228
      %p230 = scmp.eq.s32.totalorder %s36, 0
      %p231 = por %p229, %p230
      %s233 = sadd.s32 %s232, 1
      %p236 = scmp.eq.s32.totalorder %s30, 1
      %p237 = scmp.ne.s32.totalorder %s232, %s234
      %p238 = scmp.eq.s32.totalorder %s30, 0
      %p239 = por %p237, %p238
      %p240 = scmp.ne.s32.totalorder %s232, %s234
      %p241 = scmp.eq.s32.totalorder %s35, 1
      %p242 = por %p240, %p241
      %p243 = scmp.ne.s32.totalorder %s234, %s235
      %p244 = scmp.eq.s32.totalorder %s35, 0
      %p245 = por %p243, %p244
      %p246 = scmp.ne.s32.totalorder %s234, %s235
      %p247 = scmp.eq.s32.totalorder %s36, 1
      %p248 = por %p246, %p247
      %p250 = scmp.ne.s32.totalorder %s235, %s249
      %p251 = scmp.eq.s32.totalorder %s36, 0
      %p252 = por %p250, %p251
      %s254 = sadd.s32 %s253, 1
      %p257 = scmp.eq.s32.totalorder %s30, 1
      %p258 = scmp.ne.s32.totalorder %s253, %s255
      %p259 = scmp.eq.s32.totalorder %s30, 0
      %p260 = por %p258, %p259
      %p261 = scmp.ne.s32.totalorder %s253, %s255
      %p262 = scmp.eq.s32.totalorder %s35, 1
      %p263 = por %p261, %p262
      %p264 = scmp.ne.s32.totalorder %s255, %s256
      %p265 = scmp.eq.s32.totalorder %s35, 0
      %p266 = por %p264, %p265
      %p267 = scmp.ne.s32.totalorder %s255, %s256
      %p268 = scmp.eq.s32.totalorder %s36, 1
      %p269 = por %p267, %p268
      %p271 = scmp.ne.s32.totalorder %s256, %s270
      %p272 = scmp.eq.s32.totalorder %s36, 0
      %p273 = por %p271, %p272
      %s275 = sadd.s32 %s274, 1
      %p278 = scmp.eq.s32.totalorder %s30, 1
      %p279 = scmp.ne.s32.totalorder %s274, %s276
      %p280 = scmp.eq.s32.totalorder %s30, 0
      %p281 = por %p279, %p280
      %p282 = scmp.ne.s32.totalorder %s274, %s276
      %p283 = scmp.eq.s32.totalorder %s35, 1
      %p284 = por %p282, %p283
      %p285 = scmp.ne.s32.totalorder %s276, %s277
      %p286 = scmp.eq.s32.totalorder %s35, 0
      %p287 = por %p285, %p286
      %p288 = scmp.ne.s32.totalorder %s276, %s277
      %p289 = scmp.eq.s32.totalorder %s36, 1
      %p290 = por %p288, %p289
      %p292 = scmp.ne.s32.totalorder %s277, %s291
      %p293 = scmp.eq.s32.totalorder %s36, 0
      %p294 = por %p292, %p293
      %s296 = sadd.s32 %s295, 1
      %p299 = scmp.eq.s32.totalorder %s30, 1
      %p300 = scmp.ne.s32.totalorder %s295, %s297
      %p301 = scmp.eq.s32.totalorder %s30, 0
      %p302 = por %p300, %p301
      %p303 = scmp.ne.s32.totalorder %s295, %s297
      %p304 = scmp.eq.s32.totalorder %s35, 1
      %p305 = por %p303, %p304
      %p306 = scmp.ne.s32.totalorder %s297, %s298
      %p307 = scmp.eq.s32.totalorder %s35, 0
      %p308 = por %p306, %p307
      %p309 = scmp.ne.s32.totalorder %s297, %s298
      %p310 = scmp.eq.s32.totalorder %s36, 1
      %p311 = por %p309, %p310
      %p313 = scmp.ne.s32.totalorder %s298, %s312
      %p314 = scmp.eq.s32.totalorder %s36, 0
      %p315 = por %p313, %p314
      %s317 = sadd.s32 %s316, 1
      %p320 = scmp.eq.s32.totalorder %s30, 1
      %p321 = scmp.ne.s32.totalorder %s316, %s318
      %p322 = scmp.eq.s32.totalorder %s30, 0
      %p323 = por %p321, %p322
      %p324 = scmp.ne.s32.totalorder %s316, %s318
      %p325 = scmp.eq.s32.totalorder %s35, 1
      %p326 = por %p324, %p325
      %p327 = scmp.ne.s32.totalorder %s318, %s319
      %p328 = scmp.eq.s32.totalorder %s35, 0
      %p329 = por %p327, %p328
      %p330 = scmp.ne.s32.totalorder %s318, %s319
      %p331 = scmp.eq.s32.totalorder %s36, 1
      %p332 = por %p330, %p331
      %p334 = scmp.ne.s32.totalorder %s319, %s333
      %p335 = scmp.eq.s32.totalorder %s36, 0
      %p336 = por %p334, %p335
      %s338 = sadd.s32 %s337, 1
      %p341 = scmp.eq.s32.totalorder %s30, 1
      %p342 = scmp.ne.s32.totalorder %s337, %s339
      %p343 = scmp.eq.s32.totalorder %s30, 0
      %p344 = por %p342, %p343
      %p345 = scmp.ne.s32.totalorder %s337, %s339
      %p346 = scmp.eq.s32.totalorder %s35, 1
      %p347 = por %p345, %p346
      %p348 = scmp.ne.s32.totalorder %s339, %s340
      %p349 = scmp.eq.s32.totalorder %s35, 0
      %p350 = por %p348, %p349
      %p351 = scmp.ne.s32.totalorder %s339, %s340
      %p352 = scmp.eq.s32.totalorder %s36, 1
      %p353 = por %p351, %p352
      %p355 = scmp.ne.s32.totalorder %s340, %s354
      %p356 = scmp.eq.s32.totalorder %s36, 0
      %p357 = por %p355, %p356
      %s359 = sadd.s32 %s358, 1
      %p362 = scmp.eq.s32.totalorder %s30, 1
      %p363 = scmp.ne.s32.totalorder %s358, %s360
      %p364 = scmp.eq.s32.totalorder %s30, 0
      %p365 = por %p363, %p364
      %p366 = scmp.ne.s32.totalorder %s358, %s360
      %p367 = scmp.eq.s32.totalorder %s35, 1
      %p368 = por %p366, %p367
      %p369 = scmp.ne.s32.totalorder %s360, %s361
      %p370 = scmp.eq.s32.totalorder %s35, 0
      %p371 = por %p369, %p370
      %p372 = scmp.ne.s32.totalorder %s360, %s361
      %p373 = scmp.eq.s32.totalorder %s36, 1
      %p374 = por %p372, %p373
      %p376 = scmp.ne.s32.totalorder %s361, %s375
      %p377 = scmp.eq.s32.totalorder %s36, 0
      %p378 = por %p376, %p377
      %s380 = sadd.s32 %s379, 1
      %p383 = scmp.eq.s32.totalorder %s30, 1
      %p384 = scmp.ne.s32.totalorder %s379, %s381
      %p385 = scmp.eq.s32.totalorder %s30, 0
      %p386 = por %p384, %p385
      %p387 = scmp.ne.s32.totalorder %s379, %s381
      %p388 = scmp.eq.s32.totalorder %s35, 1
      %p389 = por %p387, %p388
      %p390 = scmp.ne.s32.totalorder %s381, %s382
      %p391 = scmp.eq.s32.totalorder %s35, 0
      %p392 = por %p390, %p391
      %p393 = scmp.ne.s32.totalorder %s381, %s382
      %p394 = scmp.eq.s32.totalorder %s36, 1
      %p395 = por %p393, %p394
      %p397 = scmp.ne.s32.totalorder %s382, %s396
      %p398 = scmp.eq.s32.totalorder %s36, 0
      %p399 = por %p397, %p398
      %s400 = ssub.s32 %s30, %s37
      %p401 = scmp.eq.s32.totalorder %s400, 0
      %s403 = sadd.s32 %s402, 1
      %s404 = scalar_select %p401, %s402, %s403
      %p407 = pneg %p401
      %p408 = scmp.eq.s32.totalorder %s30, 1
      %p409 = por %p407, %p408
      %p410 = scmp.ne.s32.totalorder %s402, %s405
      %p411 = scmp.eq.s32.totalorder %s30, 0
      %p412 = por %p410, %p411
      %p413 = scmp.ne.s32.totalorder %s402, %s405
      %p414 = scmp.eq.s32.totalorder %s35, 1
      %p415 = por %p413, %p414
      %p416 = scmp.ne.s32.totalorder %s405, %s406
      %p417 = scmp.eq.s32.totalorder %s35, 0
      %p418 = por %p416, %p417
      %p419 = scmp.ne.s32.totalorder %s405, %s406
      %p420 = scmp.eq.s32.totalorder %s36, 1
      %p421 = por %p419, %p420
      %p423 = scmp.ne.s32.totalorder %s406, %s422
      %p424 = scmp.eq.s32.totalorder %s36, 0
      %p425 = por %p423, %p424
      %p426 = scmp.le.s32.totalorder 1, %s30
      %p427 = scmp.lt.s32.totalorder %s30, 3
      %p428 = pnand %p426, %p427
      %p429 = pneg %p428
      // Predicated region
      $region9: #{tpu_custom_call.1} parent=5 // pred_check
        _
      $region10: #{tpu_custom_call.1} parent=5 // pred_check_branch
        %431 = sbr.rel (%p428) target = $region12
      $region11: #{tpu_custom_call.1} parent=5 // pred_region
        %s432 = ssub.s32 %s30, 1
        // Predicated region
        $region13: #{tpu_custom_call.1} parent=11 // pred_check
          %p433 = pneg %p77
        $region14: #{tpu_custom_call.1} parent=11 // pred_check_branch
          %435 = sbr.rel (%p433) target = $region16
        $region15: #{tpu_custom_call.1} parent=11 // pred_region
          _
        $region16: #{tpu_custom_call.1} parent=11 // pred_fallthru
          _
        // Predicated region
        $region17: #{tpu_custom_call.1} parent=11 // pred_check
          %p436 = pneg %p98
        $region18: #{tpu_custom_call.1} parent=11 // pred_check_branch
          %438 = sbr.rel (%p436) target = $region20
        $region19: #{tpu_custom_call.1} parent=11 // pred_region
          _
        $region20: #{tpu_custom_call.1} parent=11 // pred_fallthru
          _
        // Predicated region
        $region21: #{tpu_custom_call.1} parent=11 // pred_check
          %p439 = pneg %p119
        $region22: #{tpu_custom_call.1} parent=11 // pred_check_branch
          %441 = sbr.rel (%p439) target = $region24
        $region23: #{tpu_custom_call.1} parent=11 // pred_region
          _
        $region24: #{tpu_custom_call.1} parent=11 // pred_fallthru
          _
        // Predicated region
        $region25: #{tpu_custom_call.1} parent=11 // pred_check
          %p442 = pneg %p140
        $region26: #{tpu_custom_call.1} parent=11 // pred_check_branch
          %444 = sbr.rel (%p442) target = $region28
        $region27: #{tpu_custom_call.1} parent=11 // pred_region
          _
        $region28: #{tpu_custom_call.1} parent=11 // pred_fallthru
          _
        // Predicated region
        $region29: #{tpu_custom_call.1} parent=11 // pred_check
          %p445 = pneg %p161
        $region30: #{tpu_custom_call.1} parent=11 // pred_check_branch
          %447 = sbr.rel (%p445) target = $region32
        $region31: #{tpu_custom_call.1} parent=11 // pred_region
          _
        $region32: #{tpu_custom_call.1} parent=11 // pred_fallthru
          _
        // Predicated region
        $region33: #{tpu_custom_call.1} parent=11 // pred_check
          %p448 = pneg %p182
        $region34: #{tpu_custom_call.1} parent=11 // pred_check_branch
          %450 = sbr.rel (%p448) target = $region36
        $region35: #{tpu_custom_call.1} parent=11 // pred_region
          _
        $region36: #{tpu_custom_call.1} parent=11 // pred_fallthru
          _
        // Predicated region
        $region37: #{tpu_custom_call.1} parent=11 // pred_check
          %p451 = pneg %p203
        $region38: #{tpu_custom_call.1} parent=11 // pred_check_branch
          %453 = sbr.rel (%p451) target = $region40
        $region39: #{tpu_custom_call.1} parent=11 // pred_region
          _
        $region40: #{tpu_custom_call.1} parent=11 // pred_fallthru
          _
        // Predicated region
        $region41: #{tpu_custom_call.1} parent=11 // pred_check
          %p454 = pneg %p224
        $region42: #{tpu_custom_call.1} parent=11 // pred_check_branch
          %456 = sbr.rel (%p454) target = $region44
        $region43: #{tpu_custom_call.1} parent=11 // pred_region
          _
        $region44: #{tpu_custom_call.1} parent=11 // pred_fallthru
          _
        // Predicated region
        $region45: #{tpu_custom_call.1} parent=11 // pred_check
          %p457 = pneg %p245
        $region46: #{tpu_custom_call.1} parent=11 // pred_check_branch
          %459 = sbr.rel (%p457) target = $region48
        $region47: #{tpu_custom_call.1} parent=11 // pred_region
          _
        $region48: #{tpu_custom_call.1} parent=11 // pred_fallthru
          _
        // Predicated region
        $region49: #{tpu_custom_call.1} parent=11 // pred_check
          %p460 = pneg %p266
        $region50: #{tpu_custom_call.1} parent=11 // pred_check_branch
          %462 = sbr.rel (%p460) target = $region52
        $region51: #{tpu_custom_call.1} parent=11 // pred_region
          _
        $region52: #{tpu_custom_call.1} parent=11 // pred_fallthru
          _
        // Predicated region
        $region53: #{tpu_custom_call.1} parent=11 // pred_check
          %p463 = pneg %p287
        $region54: #{tpu_custom_call.1} parent=11 // pred_check_branch
          %465 = sbr.rel (%p463) target = $region56
        $region55: #{tpu_custom_call.1} parent=11 // pred_region
          _
        $region56: #{tpu_custom_call.1} parent=11 // pred_fallthru
          _
        // Predicated region
        $region57: #{tpu_custom_call.1} parent=11 // pred_check
          %p466 = pneg %p308
        $region58: #{tpu_custom_call.1} parent=11 // pred_check_branch
          %468 = sbr.rel (%p466) target = $region60
        $region59: #{tpu_custom_call.1} parent=11 // pred_region
          %s470 = ssub.s32 256, 256
          %471 = vsyncadd [#allocation8], %s470
          %s472 = sshll.u32 %s12, 4
          %s473 = int_to_ptr.vmem [resolvable:$true] %s472
          %478 = dma.vmem_to_smem %s473, 256, [#allocation9], [#allocation8], 128, 128, 8
        $region60: #{tpu_custom_call.1} parent=11 // pred_fallthru
          _
        // Predicated region
        $region61: #{tpu_custom_call.1} parent=11 // pred_check
          %p479 = pneg %p329
        $region62: #{tpu_custom_call.1} parent=11 // pred_check_branch
          %481 = sbr.rel (%p479) target = $region64
        $region63: #{tpu_custom_call.1} parent=11 // pred_region
          _
        $region64: #{tpu_custom_call.1} parent=11 // pred_fallthru
          _
        // Predicated region
        $region65: #{tpu_custom_call.1} parent=11 // pred_check
          %p482 = pneg %p350
        $region66: #{tpu_custom_call.1} parent=11 // pred_check_branch
          %484 = sbr.rel (%p482) target = $region68
        $region67: #{tpu_custom_call.1} parent=11 // pred_region
          _
        $region68: #{tpu_custom_call.1} parent=11 // pred_fallthru
          _
        // Predicated region
        $region69: #{tpu_custom_call.1} parent=11 // pred_check
          %p485 = pneg %p371
        $region70: #{tpu_custom_call.1} parent=11 // pred_check_branch
          %487 = sbr.rel (%p485) target = $region72
        $region71: #{tpu_custom_call.1} parent=11 // pred_region
          _
        $region72: #{tpu_custom_call.1} parent=11 // pred_fallthru
          _
        // Predicated region
        $region73: #{tpu_custom_call.1} parent=11 // pred_check
          %p488 = pneg %p392
        $region74: #{tpu_custom_call.1} parent=11 // pred_check_branch
          %490 = sbr.rel (%p488) target = $region76
        $region75: #{tpu_custom_call.1} parent=11 // pred_region
          _
        $region76: #{tpu_custom_call.1} parent=11 // pred_fallthru
          _
      $region12: #{tpu_custom_call.1} parent=5 // pred_fallthru
        _
      %p491 = scmp.lt.s32.totalorder %s30, 2
      // Predicated region
      $region77: #{tpu_custom_call.1} parent=5 // pred_check
        %p492 = pneg %p491
      $region78: #{tpu_custom_call.1} parent=5 // pred_check_branch
        %494 = sbr.rel (%p492) target = $region80
      $region79: #{tpu_custom_call.1} parent=5 // pred_region
        // Predicated region
        $region81: #{tpu_custom_call.1} parent=79 // pred_check
          %p495 = pneg %p50
        $region82: #{tpu_custom_call.1} parent=79 // pred_check_branch
          %497 = sbr.rel (%p495) target = $region84
        $region83: #{tpu_custom_call.1} parent=79 // pred_region
          %s498 = sand.u32 %s40, 1
          %s499 = scalar_lea.sflag [#allocation6], %s498
          %s500 = sand.u32 %s40, 1
          %s501 = smul.addr %s500, 256
          %s502 = scalar_lea.vmem [#allocation5], %s501
          %s504 = ssub.s32 4096, 4096
          %505 = vsyncadd %s499, %s504
          %s506 = smul.addr %s30, 32
          %s507 = smul.addr %s506, 128
          %s508 = scalar_lea.hbm %s0, %s507
          %s509 = sshll.u32 %s502, 4
          %s510 = int_to_ptr.vmem [resolvable:$true] %s509
          %515 = dma.hbm_to_vmem [thread:$0]  %s508, 4096, %s510, %s499, 128, 128, 8
        $region84: #{tpu_custom_call.1} parent=79 // pred_fallthru
          _
      $region80: #{tpu_custom_call.1} parent=5 // pred_fallthru
        _
      %p516 = scmp.le.s32.totalorder 1, %s30
      %p517 = scmp.lt.s32.totalorder %s30, 3
      %p518 = pnand %p516, %p517
      %p519 = pneg %p518
      // Predicated region
      $region85: #{tpu_custom_call.1} parent=5 // pred_check
        _
      $region86: #{tpu_custom_call.1} parent=5 // pred_check_branch
        %521 = sbr.rel (%p518) target = $region88
      $region87: #{tpu_custom_call.1} parent=5 // pred_region
        %s522 = ssub.s32 %s30, 1
        %s523 = sand.u32 %s43, 1
        %s524 = scalar_lea.sflag [#allocation6], %s523
        %s525 = sand.u32 %s43, 1
        %s526 = smul.addr %s525, 256
        %s527 = scalar_lea.vmem [#allocation5], %s526
        // Predicated region
        $region89: #{tpu_custom_call.1} parent=87 // pred_check
          %p528 = pneg %p56
        $region90: #{tpu_custom_call.1} parent=87 // pred_check_branch
          %530 = sbr.rel (%p528) target = $region92
        $region91: #{tpu_custom_call.1} parent=87 // pred_region
          %531 = dma.done %s524, 4096
        $region92: #{tpu_custom_call.1} parent=87 // pred_fallthru
          _
        // Predicated region
        $region93: #{tpu_custom_call.1} parent=87 // pred_check
          %p532 = pneg %p308
        $region94: #{tpu_custom_call.1} parent=87 // pred_check_branch
          %534 = sbr.rel (%p532) target = $region96
        $region95: #{tpu_custom_call.1} parent=87 // pred_region
          %535 = dma.done [#allocation8], 256
        $region96: #{tpu_custom_call.1} parent=87 // pred_fallthru
          _
        %536 = sfence
        %s537 = sand.u32 %s43, 1
        %s538 = scalar_lea.sflag [#allocation6], %s537
        %s539 = sand.u32 %s43, 1
        %s540 = smul.addr %s539, 256
        %s541 = scalar_lea.vmem [#allocation5], %s540
        %p542 = pneg %p56
        %p543 = pneg %p53
        %p544 = pneg %p77
        %p545 = pneg %p74
        %p546 = pneg %p98
        %p547 = pneg %p95
        %p548 = pneg %p119
        %p549 = pneg %p116
        %p550 = pneg %p140
        %p551 = pneg %p137
        %p552 = pneg %p161
        %p553 = pneg %p158
        %p554 = pneg %p182
        %p555 = pneg %p179
        %p556 = pneg %p203
        %p557 = pneg %p200
        %p558 = pneg %p224
        %p559 = pneg %p221
        %p560 = pneg %p245
        %p561 = pneg %p242
        %p562 = pneg %p266
        %p563 = pneg %p263
        %p564 = pneg %p287
        %p565 = pneg %p284
        %p566 = pneg %p308
        %p567 = pneg %p305
        %p568 = pneg %p329
        %p569 = pneg %p326
        %p570 = pneg %p350
        %p571 = pneg %p347
        %p572 = pneg %p371
        %p573 = pneg %p368
        %p574 = pneg %p392
        %p575 = pneg %p389
        %p576 = pneg %p418
        %p577 = pneg %p415
        %s578 = sand.u32 %s405, 1
        %s579 = scalar_lea.sflag [#allocation7], %s578
        %s580 = sand.u32 %s405, 1
        %s581 = smul.addr %s580, 64
        %s582 = scalar_lea.vmem [#allocation10], %s581
        %v584 = vld [vmem:[%s527] sm:$0xff]
        %v585 = vld [vmem:[%s527 + $0x8] sm:$0xff]
        %v586 = vld [vmem:[%s527 + $0x10] sm:$0xff]
        %v587 = vld [vmem:[%s527 + $0x18] sm:$0xff]
        %v588 = vld [vmem:[%s527 + $0x20] sm:$0xff]
        %v589 = vld [vmem:[%s527 + $0x28] sm:$0xff]
        %v590 = vld [vmem:[%s527 + $0x30] sm:$0xff]
        %v591 = vld [vmem:[%s527 + $0x38] sm:$0xff]
        %v592 = vld [vmem:[%s527 + $0x40] sm:$0xff]
        %v593 = vld [vmem:[%s527 + $0x48] sm:$0xff]
        %v594 = vld [vmem:[%s527 + $0x50] sm:$0xff]
        %v595 = vld [vmem:[%s527 + $0x58] sm:$0xff]
        %v596 = vld [vmem:[%s527 + $0x60] sm:$0xff]
        %v597 = vld [vmem:[%s527 + $0x68] sm:$0xff]
        %v598 = vld [vmem:[%s527 + $0x70] sm:$0xff]
        %v599 = vld [vmem:[%s527 + $0x78] sm:$0xff]
        %v600 = vld [vmem:[%s527 + $0x80] sm:$0xff]
        %v601 = vld [vmem:[%s527 + $0x88] sm:$0xff]
        %v602 = vld [vmem:[%s527 + $0x90] sm:$0xff]
        %v603 = vld [vmem:[%s527 + $0x98] sm:$0xff]
        %v604 = vld [vmem:[%s527 + $0xa0] sm:$0xff]
        %v605 = vld [vmem:[%s527 + $0xa8] sm:$0xff]
        %v606 = vld [vmem:[%s527 + $0xb0] sm:$0xff]
        %v607 = vld [vmem:[%s527 + $0xb8] sm:$0xff]
        %v608 = vld [vmem:[%s527 + $0xc0] sm:$0xff]
        %v609 = vld [vmem:[%s527 + $0xc8] sm:$0xff]
        %v610 = vld [vmem:[%s527 + $0xd0] sm:$0xff]
        %v611 = vld [vmem:[%s527 + $0xd8] sm:$0xff]
        %v612 = vld [vmem:[%s527 + $0xe0] sm:$0xff]
        %v613 = vld [vmem:[%s527 + $0xe8] sm:$0xff]
        %v614 = vld [vmem:[%s527 + $0xf0] sm:$0xff]
        %v615 = vld [vmem:[%s527 + $0xf8] sm:$0xff]
        %v616 = vld [vmem:[%s1] sm:$0x1]
        %v618 = vlaneseq
        %v619 = vshrl.u32 %v618, 7
        %v620 = vsub.s32 0, %v619
        %v621 = vrot.slane %v616, %v620
        %v623 = vmul.f32 %v584, %v621
        %v624 = vmul.f32 %v585, %v621
        %v625 = vmul.f32 %v586, %v621
        %v626 = vmul.f32 %v587, %v621
        %v627 = vmul.f32 %v588, %v621
        %v628 = vmul.f32 %v589, %v621
        %v629 = vmul.f32 %v590, %v621
        %v630 = vmul.f32 %v591, %v621
        %v631 = vmul.f32 %v592, %v621
        %v632 = vmul.f32 %v593, %v621
        %v633 = vmul.f32 %v594, %v621
        %v634 = vmul.f32 %v595, %v621
        %v635 = vmul.f32 %v596, %v621
        %v636 = vmul.f32 %v597, %v621
        %v637 = vmul.f32 %v598, %v621
        %v638 = vmul.f32 %v599, %v621
        %v639 = vmul.f32 %v600, %v621
        %v640 = vmul.f32 %v601, %v621
        %v641 = vmul.f32 %v602, %v621
        %v642 = vmul.f32 %v603, %v621
        %v643 = vmul.f32 %v604, %v621
        %v644 = vmul.f32 %v605, %v621
        %v645 = vmul.f32 %v606, %v621
        %v646 = vmul.f32 %v607, %v621
        %v647 = vmul.f32 %v608, %v621
        %v648 = vmul.f32 %v609, %v621
        %v649 = vmul.f32 %v610, %v621
        %v650 = vmul.f32 %v611, %v621
        %v651 = vmul.f32 %v612, %v621
        %v652 = vmul.f32 %v613, %v621
        %v653 = vmul.f32 %v614, %v621
        %v654 = vmul.f32 %v615, %v621
        %v655 = vld [vmem:[%s2] sm:$0x1]
        %v657 = vlaneseq
        %v658 = vshrl.u32 %v657, 7
        %v659 = vsub.s32 0, %v658
        %v660 = vrot.slane %v655, %v659
        %v662 = vadd.f32 %v623, %v660
        %v663 = vadd.f32 %v624, %v660
        %v664 = vadd.f32 %v625, %v660
        %v665 = vadd.f32 %v626, %v660
        %v666 = vadd.f32 %v627, %v660
        %v667 = vadd.f32 %v628, %v660
        %v668 = vadd.f32 %v629, %v660
        %v669 = vadd.f32 %v630, %v660
        %v670 = vadd.f32 %v631, %v660
        %v671 = vadd.f32 %v632, %v660
        %v672 = vadd.f32 %v633, %v660
        %v673 = vadd.f32 %v634, %v660
        %v674 = vadd.f32 %v635, %v660
        %v675 = vadd.f32 %v636, %v660
        %v676 = vadd.f32 %v637, %v660
        %v677 = vadd.f32 %v638, %v660
        %v678 = vadd.f32 %v639, %v660
        %v679 = vadd.f32 %v640, %v660
        %v680 = vadd.f32 %v641, %v660
        %v681 = vadd.f32 %v642, %v660
        %v682 = vadd.f32 %v643, %v660
        %v683 = vadd.f32 %v644, %v660
        %v684 = vadd.f32 %v645, %v660
        %v685 = vadd.f32 %v646, %v660
        %v686 = vadd.f32 %v647, %v660
        %v687 = vadd.f32 %v648, %v660
        %v688 = vadd.f32 %v649, %v660
        %v689 = vadd.f32 %v650, %v660
        %v690 = vadd.f32 %v651, %v660
        %v691 = vadd.f32 %v652, %v660
        %v692 = vadd.f32 %v653, %v660
        %v693 = vadd.f32 %v654, %v660
        %vm694 = vcmask 130048
        %695 = vst.msk [vmem:[#allocation2] sm:$0xff] %vm694, 0.0
        %696 = vst.msk [vmem:[#allocation2 + $0x8] sm:$0xff] %vm694, 0.0
        %vm697 = vcmask 123904
        %698 = vst.msk [vmem:[#allocation2 + $0x10] sm:$0x3] %vm697, 0.0
        %s699 = scalar_lea.vmem [#allocation2], 408
        %700 = vst.msk [vmem:[%s699] sm:$0xff] %vm694, 0.0
        %701 = vst.msk [vmem:[%s699 + $0x8] sm:$0xff] %vm694, 0.0
        %702 = vst.msk [vmem:[%s699 + $0x10] sm:$0x3] %vm697, 0.0
        %vm703 = vcmask 122880
        %704 = vst.msk [vmem:[#allocation2] sm:$0x1] %vm703, 0.0
        %705 = vst.msk [vmem:[#allocation2 + $0x18] sm:$0x1] %vm703, 0.0
        %706 = vst.msk [vmem:[#allocation2 + $0x30] sm:$0x1] %vm703, 0.0
        %707 = vst.msk [vmem:[#allocation2 + $0x48] sm:$0x1] %vm703, 0.0
        %708 = vst.msk [vmem:[#allocation2 + $0x60] sm:$0x1] %vm703, 0.0
        %709 = vst.msk [vmem:[#allocation2 + $0x78] sm:$0x1] %vm703, 0.0
        %710 = vst.msk [vmem:[#allocation2 + $0x90] sm:$0x1] %vm703, 0.0
        %711 = vst.msk [vmem:[#allocation2 + $0xa8] sm:$0x1] %vm703, 0.0
        %712 = vst.msk [vmem:[#allocation2 + $0xc0] sm:$0x1] %vm703, 0.0
        %713 = vst.msk [vmem:[#allocation2 + $0xd8] sm:$0x1] %vm703, 0.0
        %714 = vst.msk [vmem:[#allocation2 + $0xf0] sm:$0x1] %vm703, 0.0
        %715 = vst.msk [vmem:[#allocation2 + $0x108] sm:$0x1] %vm703, 0.0
        %716 = vst.msk [vmem:[#allocation2 + $0x120] sm:$0x1] %vm703, 0.0
        %717 = vst.msk [vmem:[#allocation2 + $0x138] sm:$0x1] %vm703, 0.0
        %718 = vst.msk [vmem:[#allocation2 + $0x150] sm:$0x1] %vm703, 0.0
        %719 = vst.msk [vmem:[#allocation2 + $0x168] sm:$0x1] %vm703, 0.0
        %720 = vst.msk [vmem:[#allocation2 + $0x180] sm:$0x1] %vm703, 0.0
        %721 = vst.msk [vmem:[#allocation2 + $0x198] sm:$0x1] %vm703, 0.0
        %722 = vst.msk [vmem:[#allocation2 + $0x11] sm:$0x1] %vm703, 0.0
        %723 = vst.msk [vmem:[#allocation2 + $0x29] sm:$0x1] %vm703, 0.0
        %724 = vst.msk [vmem:[#allocation2 + $0x41] sm:$0x1] %vm703, 0.0
        %725 = vst.msk [vmem:[#allocation2 + $0x59] sm:$0x1] %vm703, 0.0
        %726 = vst.msk [vmem:[#allocation2 + $0x71] sm:$0x1] %vm703, 0.0
        %727 = vst.msk [vmem:[#allocation2 + $0x89] sm:$0x1] %vm703, 0.0
        %728 = vst.msk [vmem:[#allocation2 + $0xa1] sm:$0x1] %vm703, 0.0
        %729 = vst.msk [vmem:[#allocation2 + $0xb9] sm:$0x1] %vm703, 0.0
        %730 = vst.msk [vmem:[#allocation2 + $0xd1] sm:$0x1] %vm703, 0.0
        %731 = vst.msk [vmem:[#allocation2 + $0xe9] sm:$0x1] %vm703, 0.0
        %732 = vst.msk [vmem:[#allocation2 + $0x101] sm:$0x1] %vm703, 0.0
        %733 = vst.msk [vmem:[#allocation2 + $0x119] sm:$0x1] %vm703, 0.0
        %734 = vst.msk [vmem:[#allocation2 + $0x131] sm:$0x1] %vm703, 0.0
        %735 = vst.msk [vmem:[#allocation2 + $0x149] sm:$0x1] %vm703, 0.0
        %736 = vst.msk [vmem:[#allocation2 + $0x161] sm:$0x1] %vm703, 0.0
        %737 = vst.msk [vmem:[#allocation2 + $0x179] sm:$0x1] %vm703, 0.0
        %738 = vst.msk [vmem:[#allocation2 + $0x191] sm:$0x1] %vm703, 0.0
        %739 = vst.msk [vmem:[#allocation2 + $0x1a9] sm:$0x1] %vm703, 0.0
        %s740 = scalar_lea.vmem [#allocation2], 24
        %741 = vst.msk [vmem:[%s740 + $0x1] sm:$0xff] %vm694, %v662
        %742 = vst.msk [vmem:[%s740 + $0x9] sm:$0xff] %vm694, %v663
        %743 = vst.msk [vmem:[%s740 + $0x19] sm:$0xff] %vm694, %v664
        %744 = vst.msk [vmem:[%s740 + $0x21] sm:$0xff] %vm694, %v665
        %745 = vst.msk [vmem:[%s740 + $0x31] sm:$0xff] %vm694, %v666
        %746 = vst.msk [vmem:[%s740 + $0x39] sm:$0xff] %vm694, %v667
        %747 = vst.msk [vmem:[%s740 + $0x49] sm:$0xff] %vm694, %v668
        %748 = vst.msk [vmem:[%s740 + $0x51] sm:$0xff] %vm694, %v669
        %749 = vst.msk [vmem:[%s740 + $0x61] sm:$0xff] %vm694, %v670
        %750 = vst.msk [vmem:[%s740 + $0x69] sm:$0xff] %vm694, %v671
        %751 = vst.msk [vmem:[%s740 + $0x79] sm:$0xff] %vm694, %v672
        %752 = vst.msk [vmem:[%s740 + $0x81] sm:$0xff] %vm694, %v673
        %753 = vst.msk [vmem:[%s740 + $0x91] sm:$0xff] %vm694, %v674
        %754 = vst.msk [vmem:[%s740 + $0x99] sm:$0xff] %vm694, %v675
        %755 = vst.msk [vmem:[%s740 + $0xa9] sm:$0xff] %vm694, %v676
        %756 = vst.msk [vmem:[%s740 + $0xb1] sm:$0xff] %vm694, %v677
        %757 = vst.msk [vmem:[%s740 + $0xc1] sm:$0xff] %vm694, %v678
        %758 = vst.msk [vmem:[%s740 + $0xc9] sm:$0xff] %vm694, %v679
        %759 = vst.msk [vmem:[%s740 + $0xd9] sm:$0xff] %vm694, %v680
        %760 = vst.msk [vmem:[%s740 + $0xe1] sm:$0xff] %vm694, %v681
        %761 = vst.msk [vmem:[%s740 + $0xf1] sm:$0xff] %vm694, %v682
        %762 = vst.msk [vmem:[%s740 + $0xf9] sm:$0xff] %vm694, %v683
        %763 = vst.msk [vmem:[%s740 + $0x109] sm:$0xff] %vm694, %v684
        %764 = vst.msk [vmem:[%s740 + $0x111] sm:$0xff] %vm694, %v685
        %765 = vst.msk [vmem:[%s740 + $0x121] sm:$0xff] %vm694, %v686
        %766 = vst.msk [vmem:[%s740 + $0x129] sm:$0xff] %vm694, %v687
        %767 = vst.msk [vmem:[%s740 + $0x139] sm:$0xff] %vm694, %v688
        %768 = vst.msk [vmem:[%s740 + $0x141] sm:$0xff] %vm694, %v689
        %769 = vst.msk [vmem:[%s740 + $0x151] sm:$0xff] %vm694, %v690
        %770 = vst.msk [vmem:[%s740 + $0x159] sm:$0xff] %vm694, %v691
        %771 = vst.msk [vmem:[%s740 + $0x169] sm:$0xff] %vm694, %v692
        %772 = vst.msk [vmem:[%s740 + $0x171] sm:$0xff] %vm694, %v693
        %v773 = vld [vmem:[#allocation2] sm:$0xff]
        %v774 = vld [vmem:[#allocation2 + $0x8] sm:$0xff]
        %v775 = vld [vmem:[#allocation2 + $0x18] sm:$0xff]
        %v776 = vld [vmem:[#allocation2 + $0x20] sm:$0xff]
        %v777 = vld [vmem:[#allocation2 + $0x30] sm:$0xff]
        %v778 = vld [vmem:[#allocation2 + $0x38] sm:$0xff]
        %v779 = vld [vmem:[#allocation2 + $0x48] sm:$0xff]
        %v780 = vld [vmem:[#allocation2 + $0x50] sm:$0xff]
        %v781 = vld [vmem:[#allocation2 + $0x60] sm:$0xff]
        %v782 = vld [vmem:[#allocation2 + $0x68] sm:$0xff]
        %v783 = vld [vmem:[#allocation2 + $0x78] sm:$0xff]
        %v784 = vld [vmem:[#allocation2 + $0x80] sm:$0xff]
        %v785 = vld [vmem:[#allocation2 + $0x90] sm:$0xff]
        %v786 = vld [vmem:[#allocation2 + $0x98] sm:$0xff]
        %v787 = vld [vmem:[#allocation2 + $0xa8] sm:$0xff]
        %v788 = vld [vmem:[#allocation2 + $0xb0] sm:$0xff]
        %v789 = vld [vmem:[#allocation2 + $0xc0] sm:$0xff]
        %v790 = vld [vmem:[#allocation2 + $0xc8] sm:$0xff]
        %v791 = vld [vmem:[#allocation2 + $0xd8] sm:$0xff]
        %v792 = vld [vmem:[#allocation2 + $0xe0] sm:$0xff]
        %v793 = vld [vmem:[#allocation2 + $0xf0] sm:$0xff]
        %v794 = vld [vmem:[#allocation2 + $0xf8] sm:$0xff]
        %v795 = vld [vmem:[#allocation2 + $0x108] sm:$0xff]
        %v796 = vld [vmem:[#allocation2 + $0x110] sm:$0xff]
        %v797 = vld [vmem:[#allocation2 + $0x120] sm:$0xff]
        %v798 = vld [vmem:[#allocation2 + $0x128] sm:$0xff]
        %v799 = vld [vmem:[#allocation2 + $0x138] sm:$0xff]
        %v800 = vld [vmem:[#allocation2 + $0x140] sm:$0xff]
        %v801 = vld [vmem:[#allocation2 + $0x150] sm:$0xff]
        %v802 = vld [vmem:[#allocation2 + $0x158] sm:$0xff]
        %v803 = vld [vmem:[#allocation2 + $0x168] sm:$0xff]
        %v804 = vld [vmem:[#allocation2 + $0x170] sm:$0xff]
        %v805 = vld [vmem:[#allocation2 + $0x1] sm:$0xff]
        %v806 = vld [vmem:[#allocation2 + $0x9] sm:$0xff]
        %v807 = vld [vmem:[#allocation2 + $0x19] sm:$0xff]
        %v808 = vld [vmem:[#allocation2 + $0x21] sm:$0xff]
        %v809 = vld [vmem:[#allocation2 + $0x31] sm:$0xff]
        %v810 = vld [vmem:[#allocation2 + $0x39] sm:$0xff]
        %v811 = vld [vmem:[#allocation2 + $0x49] sm:$0xff]
        %v812 = vld [vmem:[#allocation2 + $0x51] sm:$0xff]
        %v813 = vld [vmem:[#allocation2 + $0x61] sm:$0xff]
        %v814 = vld [vmem:[#allocation2 + $0x69] sm:$0xff]
        %v815 = vld [vmem:[#allocation2 + $0x79] sm:$0xff]
        %v816 = vld [vmem:[#allocation2 + $0x81] sm:$0xff]
        %v817 = vld [vmem:[#allocation2 + $0x91] sm:$0xff]
        %v818 = vld [vmem:[#allocation2 + $0x99] sm:$0xff]
        %v819 = vld [vmem:[#allocation2 + $0xa9] sm:$0xff]
        %v820 = vld [vmem:[#allocation2 + $0xb1] sm:$0xff]
        %v821 = vld [vmem:[#allocation2 + $0xc1] sm:$0xff]
        %v822 = vld [vmem:[#allocation2 + $0xc9] sm:$0xff]
        %v823 = vld [vmem:[#allocation2 + $0xd9] sm:$0xff]
        %v824 = vld [vmem:[#allocation2 + $0xe1] sm:$0xff]
        %v825 = vld [vmem:[#allocation2 + $0xf1] sm:$0xff]
        %v826 = vld [vmem:[#allocation2 + $0xf9] sm:$0xff]
        %v827 = vld [vmem:[#allocation2 + $0x109] sm:$0xff]
        %v828 = vld [vmem:[#allocation2 + $0x111] sm:$0xff]
        %v829 = vld [vmem:[#allocation2 + $0x121] sm:$0xff]
        %v830 = vld [vmem:[#allocation2 + $0x129] sm:$0xff]
        %v831 = vld [vmem:[#allocation2 + $0x139] sm:$0xff]
        %v832 = vld [vmem:[#allocation2 + $0x141] sm:$0xff]
        %v833 = vld [vmem:[#allocation2 + $0x151] sm:$0xff]
        %v834 = vld [vmem:[#allocation2 + $0x159] sm:$0xff]
        %v835 = vld [vmem:[#allocation2 + $0x169] sm:$0xff]
        %v836 = vld [vmem:[#allocation2 + $0x171] sm:$0xff]
        %v837 = vld [vmem:[#allocation2 + $0x2] sm:$0xff]
        %v838 = vld [vmem:[#allocation2 + $0xa] sm:$0xff]
        %v839 = vld [vmem:[#allocation2 + $0x1a] sm:$0xff]
        %v840 = vld [vmem:[#allocation2 + $0x22] sm:$0xff]
        %v841 = vld [vmem:[#allocation2 + $0x32] sm:$0xff]
        %v842 = vld [vmem:[#allocation2 + $0x3a] sm:$0xff]
        %v843 = vld [vmem:[#allocation2 + $0x4a] sm:$0xff]
        %v844 = vld [vmem:[#allocation2 + $0x52] sm:$0xff]
        %v845 = vld [vmem:[#allocation2 + $0x62] sm:$0xff]
        %v846 = vld [vmem:[#allocation2 + $0x6a] sm:$0xff]
        %v847 = vld [vmem:[#allocation2 + $0x7a] sm:$0xff]
        %v848 = vld [vmem:[#allocation2 + $0x82] sm:$0xff]
        %v849 = vld [vmem:[#allocation2 + $0x92] sm:$0xff]
        %v850 = vld [vmem:[#allocation2 + $0x9a] sm:$0xff]
        %v851 = vld [vmem:[#allocation2 + $0xaa] sm:$0xff]
        %v852 = vld [vmem:[#allocation2 + $0xb2] sm:$0xff]
        %v853 = vld [vmem:[#allocation2 + $0xc2] sm:$0xff]
        %v854 = vld [vmem:[#allocation2 + $0xca] sm:$0xff]
        %v855 = vld [vmem:[#allocation2 + $0xda] sm:$0xff]
        %v856 = vld [vmem:[#allocation2 + $0xe2] sm:$0xff]
        %v857 = vld [vmem:[#allocation2 + $0xf2] sm:$0xff]
        %v858 = vld [vmem:[#allocation2 + $0xfa] sm:$0xff]
        %v859 = vld [vmem:[#allocation2 + $0x10a] sm:$0xff]
        %v860 = vld [vmem:[#allocation2 + $0x112] sm:$0xff]
        %v861 = vld [vmem:[#allocation2 + $0x122] sm:$0xff]
        %v862 = vld [vmem:[#allocation2 + $0x12a] sm:$0xff]
        %v863 = vld [vmem:[#allocation2 + $0x13a] sm:$0xff]
        %v864 = vld [vmem:[#allocation2 + $0x142] sm:$0xff]
        %v865 = vld [vmem:[#allocation2 + $0x152] sm:$0xff]
        %v866 = vld [vmem:[#allocation2 + $0x15a] sm:$0xff]
        %v867 = vld [vmem:[#allocation2 + $0x16a] sm:$0xff]
        %v868 = vld [vmem:[#allocation2 + $0x172] sm:$0xff]
        %v869 = vld [vmem:[%s740] sm:$0xff]
        %v870 = vld [vmem:[%s740 + $0x8] sm:$0xff]
        %v871 = vld [vmem:[%s740 + $0x18] sm:$0xff]
        %v872 = vld [vmem:[%s740 + $0x20] sm:$0xff]
        %v873 = vld [vmem:[%s740 + $0x30] sm:$0xff]
        %v874 = vld [vmem:[%s740 + $0x38] sm:$0xff]
        %v875 = vld [vmem:[%s740 + $0x48] sm:$0xff]
        %v876 = vld [vmem:[%s740 + $0x50] sm:$0xff]
        %v877 = vld [vmem:[%s740 + $0x60] sm:$0xff]
        %v878 = vld [vmem:[%s740 + $0x68] sm:$0xff]
        %v879 = vld [vmem:[%s740 + $0x78] sm:$0xff]
        %v880 = vld [vmem:[%s740 + $0x80] sm:$0xff]
        %v881 = vld [vmem:[%s740 + $0x90] sm:$0xff]
        %v882 = vld [vmem:[%s740 + $0x98] sm:$0xff]
        %v883 = vld [vmem:[%s740 + $0xa8] sm:$0xff]
        %v884 = vld [vmem:[%s740 + $0xb0] sm:$0xff]
        %v885 = vld [vmem:[%s740 + $0xc0] sm:$0xff]
        %v886 = vld [vmem:[%s740 + $0xc8] sm:$0xff]
        %v887 = vld [vmem:[%s740 + $0xd8] sm:$0xff]
        %v888 = vld [vmem:[%s740 + $0xe0] sm:$0xff]
        %v889 = vld [vmem:[%s740 + $0xf0] sm:$0xff]
        %v890 = vld [vmem:[%s740 + $0xf8] sm:$0xff]
        %v891 = vld [vmem:[%s740 + $0x108] sm:$0xff]
        %v892 = vld [vmem:[%s740 + $0x110] sm:$0xff]
        %v893 = vld [vmem:[%s740 + $0x120] sm:$0xff]
        %v894 = vld [vmem:[%s740 + $0x128] sm:$0xff]
        %v895 = vld [vmem:[%s740 + $0x138] sm:$0xff]
        %v896 = vld [vmem:[%s740 + $0x140] sm:$0xff]
        %v897 = vld [vmem:[%s740 + $0x150] sm:$0xff]
        %v898 = vld [vmem:[%s740 + $0x158] sm:$0xff]
        %v899 = vld [vmem:[%s740 + $0x168] sm:$0xff]
        %v900 = vld [vmem:[%s740 + $0x170] sm:$0xff]
        %v901 = vld [vmem:[%s740 + $0x1] sm:$0xff]
        %v902 = vld [vmem:[%s740 + $0x9] sm:$0xff]
        %v903 = vld [vmem:[%s740 + $0x19] sm:$0xff]
        %v904 = vld [vmem:[%s740 + $0x21] sm:$0xff]
        %v905 = vld [vmem:[%s740 + $0x31] sm:$0xff]
        %v906 = vld [vmem:[%s740 + $0x39] sm:$0xff]
        %v907 = vld [vmem:[%s740 + $0x49] sm:$0xff]
        %v908 = vld [vmem:[%s740 + $0x51] sm:$0xff]
        %v909 = vld [vmem:[%s740 + $0x61] sm:$0xff]
        %v910 = vld [vmem:[%s740 + $0x69] sm:$0xff]
        %v911 = vld [vmem:[%s740 + $0x79] sm:$0xff]
        %v912 = vld [vmem:[%s740 + $0x81] sm:$0xff]
        %v913 = vld [vmem:[%s740 + $0x91] sm:$0xff]
        %v914 = vld [vmem:[%s740 + $0x99] sm:$0xff]
        %v915 = vld [vmem:[%s740 + $0xa9] sm:$0xff]
        %v916 = vld [vmem:[%s740 + $0xb1] sm:$0xff]
        %v917 = vld [vmem:[%s740 + $0xc1] sm:$0xff]
        %v918 = vld [vmem:[%s740 + $0xc9] sm:$0xff]
        %v919 = vld [vmem:[%s740 + $0xd9] sm:$0xff]
        %v920 = vld [vmem:[%s740 + $0xe1] sm:$0xff]
        %v921 = vld [vmem:[%s740 + $0xf1] sm:$0xff]
        %v922 = vld [vmem:[%s740 + $0xf9] sm:$0xff]
        %v923 = vld [vmem:[%s740 + $0x109] sm:$0xff]
        %v924 = vld [vmem:[%s740 + $0x111] sm:$0xff]
        %v925 = vld [vmem:[%s740 + $0x121] sm:$0xff]
        %v926 = vld [vmem:[%s740 + $0x129] sm:$0xff]
        %v927 = vld [vmem:[%s740 + $0x139] sm:$0xff]
        %v928 = vld [vmem:[%s740 + $0x141] sm:$0xff]
        %v929 = vld [vmem:[%s740 + $0x151] sm:$0xff]
        %v930 = vld [vmem:[%s740 + $0x159] sm:$0xff]
        %v931 = vld [vmem:[%s740 + $0x169] sm:$0xff]
        %v932 = vld [vmem:[%s740 + $0x171] sm:$0xff]
        %v933 = vld [vmem:[%s740 + $0x2] sm:$0xff]
        %v934 = vld [vmem:[%s740 + $0xa] sm:$0xff]
        %v935 = vld [vmem:[%s740 + $0x1a] sm:$0xff]
        %v936 = vld [vmem:[%s740 + $0x22] sm:$0xff]
        %v937 = vld [vmem:[%s740 + $0x32] sm:$0xff]
        %v938 = vld [vmem:[%s740 + $0x3a] sm:$0xff]
        %v939 = vld [vmem:[%s740 + $0x4a] sm:$0xff]
        %v940 = vld [vmem:[%s740 + $0x52] sm:$0xff]
        %v941 = vld [vmem:[%s740 + $0x62] sm:$0xff]
        %v942 = vld [vmem:[%s740 + $0x6a] sm:$0xff]
        %v943 = vld [vmem:[%s740 + $0x7a] sm:$0xff]
        %v944 = vld [vmem:[%s740 + $0x82] sm:$0xff]
        %v945 = vld [vmem:[%s740 + $0x92] sm:$0xff]
        %v946 = vld [vmem:[%s740 + $0x9a] sm:$0xff]
        %v947 = vld [vmem:[%s740 + $0xaa] sm:$0xff]
        %v948 = vld [vmem:[%s740 + $0xb2] sm:$0xff]
        %v949 = vld [vmem:[%s740 + $0xc2] sm:$0xff]
        %v950 = vld [vmem:[%s740 + $0xca] sm:$0xff]
        %v951 = vld [vmem:[%s740 + $0xda] sm:$0xff]
        %v952 = vld [vmem:[%s740 + $0xe2] sm:$0xff]
        %v953 = vld [vmem:[%s740 + $0xf2] sm:$0xff]
        %v954 = vld [vmem:[%s740 + $0xfa] sm:$0xff]
        %v955 = vld [vmem:[%s740 + $0x10a] sm:$0xff]
        %v956 = vld [vmem:[%s740 + $0x112] sm:$0xff]
        %v957 = vld [vmem:[%s740 + $0x122] sm:$0xff]
        %v958 = vld [vmem:[%s740 + $0x12a] sm:$0xff]
        %v959 = vld [vmem:[%s740 + $0x13a] sm:$0xff]
        %v960 = vld [vmem:[%s740 + $0x142] sm:$0xff]
        %v961 = vld [vmem:[%s740 + $0x152] sm:$0xff]
        %v962 = vld [vmem:[%s740 + $0x15a] sm:$0xff]
        %v963 = vld [vmem:[%s740 + $0x16a] sm:$0xff]
        %v964 = vld [vmem:[%s740 + $0x172] sm:$0xff]
        %s965 = scalar_lea.vmem [#allocation2], 48
        %v966 = vld [vmem:[%s965] sm:$0xff]
        %v967 = vld [vmem:[%s965 + $0x8] sm:$0xff]
        %v968 = vld [vmem:[%s965 + $0x18] sm:$0xff]
        %v969 = vld [vmem:[%s965 + $0x20] sm:$0xff]
        %v970 = vld [vmem:[%s965 + $0x30] sm:$0xff]
        %v971 = vld [vmem:[%s965 + $0x38] sm:$0xff]
        %v972 = vld [vmem:[%s965 + $0x48] sm:$0xff]
        %v973 = vld [vmem:[%s965 + $0x50] sm:$0xff]
        %v974 = vld [vmem:[%s965 + $0x60] sm:$0xff]
        %v975 = vld [vmem:[%s965 + $0x68] sm:$0xff]
        %v976 = vld [vmem:[%s965 + $0x78] sm:$0xff]
        %v977 = vld [vmem:[%s965 + $0x80] sm:$0xff]
        %v978 = vld [vmem:[%s965 + $0x90] sm:$0xff]
        %v979 = vld [vmem:[%s965 + $0x98] sm:$0xff]
        %v980 = vld [vmem:[%s965 + $0xa8] sm:$0xff]
        %v981 = vld [vmem:[%s965 + $0xb0] sm:$0xff]
        %v982 = vld [vmem:[%s965 + $0xc0] sm:$0xff]
        %v983 = vld [vmem:[%s965 + $0xc8] sm:$0xff]
        %v984 = vld [vmem:[%s965 + $0xd8] sm:$0xff]
        %v985 = vld [vmem:[%s965 + $0xe0] sm:$0xff]
        %v986 = vld [vmem:[%s965 + $0xf0] sm:$0xff]
        %v987 = vld [vmem:[%s965 + $0xf8] sm:$0xff]
        %v988 = vld [vmem:[%s965 + $0x108] sm:$0xff]
        %v989 = vld [vmem:[%s965 + $0x110] sm:$0xff]
        %v990 = vld [vmem:[%s965 + $0x120] sm:$0xff]
        %v991 = vld [vmem:[%s965 + $0x128] sm:$0xff]
        %v992 = vld [vmem:[%s965 + $0x138] sm:$0xff]
        %v993 = vld [vmem:[%s965 + $0x140] sm:$0xff]
        %v994 = vld [vmem:[%s965 + $0x150] sm:$0xff]
        %v995 = vld [vmem:[%s965 + $0x158] sm:$0xff]
        %v996 = vld [vmem:[%s965 + $0x168] sm:$0xff]
        %v997 = vld [vmem:[%s965 + $0x170] sm:$0xff]
        %v998 = vld [vmem:[%s965 + $0x1] sm:$0xff]
        %v999 = vld [vmem:[%s965 + $0x9] sm:$0xff]
        %v1000 = vld [vmem:[%s965 + $0x19] sm:$0xff]
        %v1001 = vld [vmem:[%s965 + $0x21] sm:$0xff]
        %v1002 = vld [vmem:[%s965 + $0x31] sm:$0xff]
        %v1003 = vld [vmem:[%s965 + $0x39] sm:$0xff]
        %v1004 = vld [vmem:[%s965 + $0x49] sm:$0xff]
        %v1005 = vld [vmem:[%s965 + $0x51] sm:$0xff]
        %v1006 = vld [vmem:[%s965 + $0x61] sm:$0xff]
        %v1007 = vld [vmem:[%s965 + $0x69] sm:$0xff]
        %v1008 = vld [vmem:[%s965 + $0x79] sm:$0xff]
        %v1009 = vld [vmem:[%s965 + $0x81] sm:$0xff]
        %v1010 = vld [vmem:[%s965 + $0x91] sm:$0xff]
        %v1011 = vld [vmem:[%s965 + $0x99] sm:$0xff]
        %v1012 = vld [vmem:[%s965 + $0xa9] sm:$0xff]
        %v1013 = vld [vmem:[%s965 + $0xb1] sm:$0xff]
        %v1014 = vld [vmem:[%s965 + $0xc1] sm:$0xff]
        %v1015 = vld [vmem:[%s965 + $0xc9] sm:$0xff]
        %v1016 = vld [vmem:[%s965 + $0xd9] sm:$0xff]
        %v1017 = vld [vmem:[%s965 + $0xe1] sm:$0xff]
        %v1018 = vld [vmem:[%s965 + $0xf1] sm:$0xff]
        %v1019 = vld [vmem:[%s965 + $0xf9] sm:$0xff]
        %v1020 = vld [vmem:[%s965 + $0x109] sm:$0xff]
        %v1021 = vld [vmem:[%s965 + $0x111] sm:$0xff]
        %v1022 = vld [vmem:[%s965 + $0x121] sm:$0xff]
        %v1023 = vld [vmem:[%s965 + $0x129] sm:$0xff]
        %v1024 = vld [vmem:[%s965 + $0x139] sm:$0xff]
        %v1025 = vld [vmem:[%s965 + $0x141] sm:$0xff]
        %v1026 = vld [vmem:[%s965 + $0x151] sm:$0xff]
        %v1027 = vld [vmem:[%s965 + $0x159] sm:$0xff]
        %v1028 = vld [vmem:[%s965 + $0x169] sm:$0xff]
        %v1029 = vld [vmem:[%s965 + $0x171] sm:$0xff]
        %v1030 = vld [vmem:[%s965 + $0x2] sm:$0xff]
        %v1031 = vld [vmem:[%s965 + $0xa] sm:$0xff]
        %v1032 = vld [vmem:[%s965 + $0x1a] sm:$0xff]
        %v1033 = vld [vmem:[%s965 + $0x22] sm:$0xff]
        %v1034 = vld [vmem:[%s965 + $0x32] sm:$0xff]
        %v1035 = vld [vmem:[%s965 + $0x3a] sm:$0xff]
        %v1036 = vld [vmem:[%s965 + $0x4a] sm:$0xff]
        %v1037 = vld [vmem:[%s965 + $0x52] sm:$0xff]
        %v1038 = vld [vmem:[%s965 + $0x62] sm:$0xff]
        %v1039 = vld [vmem:[%s965 + $0x6a] sm:$0xff]
        %v1040 = vld [vmem:[%s965 + $0x7a] sm:$0xff]
        %v1041 = vld [vmem:[%s965 + $0x82] sm:$0xff]
        %v1042 = vld [vmem:[%s965 + $0x92] sm:$0xff]
        %v1043 = vld [vmem:[%s965 + $0x9a] sm:$0xff]
        %v1044 = vld [vmem:[%s965 + $0xaa] sm:$0xff]
        %v1045 = vld [vmem:[%s965 + $0xb2] sm:$0xff]
        %v1046 = vld [vmem:[%s965 + $0xc2] sm:$0xff]
        %v1047 = vld [vmem:[%s965 + $0xca] sm:$0xff]
        %v1048 = vld [vmem:[%s965 + $0xda] sm:$0xff]
        %v1049 = vld [vmem:[%s965 + $0xe2] sm:$0xff]
        %v1050 = vld [vmem:[%s965 + $0xf2] sm:$0xff]
        %v1051 = vld [vmem:[%s965 + $0xfa] sm:$0xff]
        %v1052 = vld [vmem:[%s965 + $0x10a] sm:$0xff]
        %v1053 = vld [vmem:[%s965 + $0x112] sm:$0xff]
        %v1054 = vld [vmem:[%s965 + $0x122] sm:$0xff]
        %v1055 = vld [vmem:[%s965 + $0x12a] sm:$0xff]
        %v1056 = vld [vmem:[%s965 + $0x13a] sm:$0xff]
        %v1057 = vld [vmem:[%s965 + $0x142] sm:$0xff]
        %v1058 = vld [vmem:[%s965 + $0x152] sm:$0xff]
        %v1059 = vld [vmem:[%s965 + $0x15a] sm:$0xff]
        %v1060 = vld [vmem:[%s965 + $0x16a] sm:$0xff]
        %v1061 = vld [vmem:[%s965 + $0x172] sm:$0xff]
        %1094 = vrot.lane.b32.xlu0 %v805, 16
        %v1095 = vpop.permute.xlu0 %1094
        %1096 = vrot.lane.b32.xlu0 %v806, 16
        %v1097 = vpop.permute.xlu0 %1096
        %1098 = vrot.lane.b32.xlu0 %v807, 16
        %v1099 = vpop.permute.xlu0 %1098
        %1100 = vrot.lane.b32.xlu0 %v808, 16
        %v1101 = vpop.permute.xlu0 %1100
        %1102 = vrot.lane.b32.xlu0 %v809, 16
        %v1103 = vpop.permute.xlu0 %1102
        %1104 = vrot.lane.b32.xlu0 %v810, 16
        %v1105 = vpop.permute.xlu0 %1104
        %1106 = vrot.lane.b32.xlu0 %v811, 16
        %v1107 = vpop.permute.xlu0 %1106
        %1108 = vrot.lane.b32.xlu0 %v812, 16
        %v1109 = vpop.permute.xlu0 %1108
        %1110 = vrot.lane.b32.xlu0 %v813, 16
        %v1111 = vpop.permute.xlu0 %1110
        %1112 = vrot.lane.b32.xlu0 %v814, 16
        %v1113 = vpop.permute.xlu0 %1112
        %1114 = vrot.lane.b32.xlu0 %v815, 16
        %v1115 = vpop.permute.xlu0 %1114
        %1116 = vrot.lane.b32.xlu0 %v816, 16
        %v1117 = vpop.permute.xlu0 %1116
        %1118 = vrot.lane.b32.xlu0 %v817, 16
        %v1119 = vpop.permute.xlu0 %1118
        %1120 = vrot.lane.b32.xlu0 %v818, 16
        %v1121 = vpop.permute.xlu0 %1120
        %1122 = vrot.lane.b32.xlu0 %v819, 16
        %v1123 = vpop.permute.xlu0 %1122
        %1124 = vrot.lane.b32.xlu0 %v820, 16
        %v1125 = vpop.permute.xlu0 %1124
        %1126 = vrot.lane.b32.xlu0 %v821, 16
        %v1127 = vpop.permute.xlu0 %1126
        %1128 = vrot.lane.b32.xlu0 %v822, 16
        %v1129 = vpop.permute.xlu0 %1128
        %1130 = vrot.lane.b32.xlu0 %v823, 16
        %v1131 = vpop.permute.xlu0 %1130
        %1132 = vrot.lane.b32.xlu0 %v824, 16
        %v1133 = vpop.permute.xlu0 %1132
        %1134 = vrot.lane.b32.xlu0 %v825, 16
        %v1135 = vpop.permute.xlu0 %1134
        %1136 = vrot.lane.b32.xlu0 %v826, 16
        %v1137 = vpop.permute.xlu0 %1136
        %1138 = vrot.lane.b32.xlu0 %v827, 16
        %v1139 = vpop.permute.xlu0 %1138
        %1140 = vrot.lane.b32.xlu0 %v828, 16
        %v1141 = vpop.permute.xlu0 %1140
        %1142 = vrot.lane.b32.xlu0 %v829, 16
        %v1143 = vpop.permute.xlu0 %1142
        %1144 = vrot.lane.b32.xlu0 %v830, 16
        %v1145 = vpop.permute.xlu0 %1144
        %1146 = vrot.lane.b32.xlu0 %v831, 16
        %v1147 = vpop.permute.xlu0 %1146
        %1148 = vrot.lane.b32.xlu0 %v832, 16
        %v1149 = vpop.permute.xlu0 %1148
        %1150 = vrot.lane.b32.xlu0 %v833, 16
        %v1151 = vpop.permute.xlu0 %1150
        %1152 = vrot.lane.b32.xlu0 %v834, 16
        %v1153 = vpop.permute.xlu0 %1152
        %1154 = vrot.lane.b32.xlu0 %v835, 16
        %v1155 = vpop.permute.xlu0 %1154
        %1156 = vrot.lane.b32.xlu0 %v836, 16
        %v1157 = vpop.permute.xlu0 %1156
        %1222 = vrot.lane.b32.xlu0 %v837, 32
        %v1223 = vpop.permute.xlu0 %1222
        %1224 = vrot.lane.b32.xlu0 %v838, 32
        %v1225 = vpop.permute.xlu0 %1224
        %1226 = vrot.lane.b32.xlu0 %v839, 32
        %v1227 = vpop.permute.xlu0 %1226
        %1228 = vrot.lane.b32.xlu0 %v840, 32
        %v1229 = vpop.permute.xlu0 %1228
        %1230 = vrot.lane.b32.xlu0 %v841, 32
        %v1231 = vpop.permute.xlu0 %1230
        %1232 = vrot.lane.b32.xlu0 %v842, 32
        %v1233 = vpop.permute.xlu0 %1232
        %1234 = vrot.lane.b32.xlu0 %v843, 32
        %v1235 = vpop.permute.xlu0 %1234
        %1236 = vrot.lane.b32.xlu0 %v844, 32
        %v1237 = vpop.permute.xlu0 %1236
        %1238 = vrot.lane.b32.xlu0 %v845, 32
        %v1239 = vpop.permute.xlu0 %1238
        %1240 = vrot.lane.b32.xlu0 %v846, 32
        %v1241 = vpop.permute.xlu0 %1240
        %1242 = vrot.lane.b32.xlu0 %v847, 32
        %v1243 = vpop.permute.xlu0 %1242
        %1244 = vrot.lane.b32.xlu0 %v848, 32
        %v1245 = vpop.permute.xlu0 %1244
        %1246 = vrot.lane.b32.xlu0 %v849, 32
        %v1247 = vpop.permute.xlu0 %1246
        %1248 = vrot.lane.b32.xlu0 %v850, 32
        %v1249 = vpop.permute.xlu0 %1248
        %1250 = vrot.lane.b32.xlu0 %v851, 32
        %v1251 = vpop.permute.xlu0 %1250
        %1252 = vrot.lane.b32.xlu0 %v852, 32
        %v1253 = vpop.permute.xlu0 %1252
        %1254 = vrot.lane.b32.xlu0 %v853, 32
        %v1255 = vpop.permute.xlu0 %1254
        %1256 = vrot.lane.b32.xlu0 %v854, 32
        %v1257 = vpop.permute.xlu0 %1256
        %1258 = vrot.lane.b32.xlu0 %v855, 32
        %v1259 = vpop.permute.xlu0 %1258
        %1260 = vrot.lane.b32.xlu0 %v856, 32
        %v1261 = vpop.permute.xlu0 %1260
        %1262 = vrot.lane.b32.xlu0 %v857, 32
        %v1263 = vpop.permute.xlu0 %1262
        %1264 = vrot.lane.b32.xlu0 %v858, 32
        %v1265 = vpop.permute.xlu0 %1264
        %1266 = vrot.lane.b32.xlu0 %v859, 32
        %v1267 = vpop.permute.xlu0 %1266
        %1268 = vrot.lane.b32.xlu0 %v860, 32
        %v1269 = vpop.permute.xlu0 %1268
        %1270 = vrot.lane.b32.xlu0 %v861, 32
        %v1271 = vpop.permute.xlu0 %1270
        %1272 = vrot.lane.b32.xlu0 %v862, 32
        %v1273 = vpop.permute.xlu0 %1272
        %1274 = vrot.lane.b32.xlu0 %v863, 32
        %v1275 = vpop.permute.xlu0 %1274
        %1276 = vrot.lane.b32.xlu0 %v864, 32
        %v1277 = vpop.permute.xlu0 %1276
        %1278 = vrot.lane.b32.xlu0 %v865, 32
        %v1279 = vpop.permute.xlu0 %1278
        %1280 = vrot.lane.b32.xlu0 %v866, 32
        %v1281 = vpop.permute.xlu0 %1280
        %1282 = vrot.lane.b32.xlu0 %v867, 32
        %v1283 = vpop.permute.xlu0 %1282
        %1284 = vrot.lane.b32.xlu0 %v868, 32
        %v1285 = vpop.permute.xlu0 %1284
        %1350 = vrot.lane.b32.xlu0 %v869, 48
        %v1351 = vpop.permute.xlu0 %1350
        %1352 = vrot.lane.b32.xlu0 %v870, 48
        %v1353 = vpop.permute.xlu0 %1352
        %1354 = vrot.lane.b32.xlu0 %v871, 48
        %v1355 = vpop.permute.xlu0 %1354
        %1356 = vrot.lane.b32.xlu0 %v872, 48
        %v1357 = vpop.permute.xlu0 %1356
        %1358 = vrot.lane.b32.xlu0 %v873, 48
        %v1359 = vpop.permute.xlu0 %1358
        %1360 = vrot.lane.b32.xlu0 %v874, 48
        %v1361 = vpop.permute.xlu0 %1360
        %1362 = vrot.lane.b32.xlu0 %v875, 48
        %v1363 = vpop.permute.xlu0 %1362
        %1364 = vrot.lane.b32.xlu0 %v876, 48
        %v1365 = vpop.permute.xlu0 %1364
        %1366 = vrot.lane.b32.xlu0 %v877, 48
        %v1367 = vpop.permute.xlu0 %1366
        %1368 = vrot.lane.b32.xlu0 %v878, 48
        %v1369 = vpop.permute.xlu0 %1368
        %1370 = vrot.lane.b32.xlu0 %v879, 48
        %v1371 = vpop.permute.xlu0 %1370
        %1372 = vrot.lane.b32.xlu0 %v880, 48
        %v1373 = vpop.permute.xlu0 %1372
        %1374 = vrot.lane.b32.xlu0 %v881, 48
        %v1375 = vpop.permute.xlu0 %1374
        %1376 = vrot.lane.b32.xlu0 %v882, 48
        %v1377 = vpop.permute.xlu0 %1376
        %1378 = vrot.lane.b32.xlu0 %v883, 48
        %v1379 = vpop.permute.xlu0 %1378
        %1380 = vrot.lane.b32.xlu0 %v884, 48
        %v1381 = vpop.permute.xlu0 %1380
        %1382 = vrot.lane.b32.xlu0 %v885, 48
        %v1383 = vpop.permute.xlu0 %1382
        %1384 = vrot.lane.b32.xlu0 %v886, 48
        %v1385 = vpop.permute.xlu0 %1384
        %1386 = vrot.lane.b32.xlu0 %v887, 48
        %v1387 = vpop.permute.xlu0 %1386
        %1388 = vrot.lane.b32.xlu0 %v888, 48
        %v1389 = vpop.permute.xlu0 %1388
        %1390 = vrot.lane.b32.xlu0 %v889, 48
        %v1391 = vpop.permute.xlu0 %1390
        %1392 = vrot.lane.b32.xlu0 %v890, 48
        %v1393 = vpop.permute.xlu0 %1392
        %1394 = vrot.lane.b32.xlu0 %v891, 48
        %v1395 = vpop.permute.xlu0 %1394
        %1396 = vrot.lane.b32.xlu0 %v892, 48
        %v1397 = vpop.permute.xlu0 %1396
        %1398 = vrot.lane.b32.xlu0 %v893, 48
        %v1399 = vpop.permute.xlu0 %1398
        %1400 = vrot.lane.b32.xlu0 %v894, 48
        %v1401 = vpop.permute.xlu0 %1400
        %1402 = vrot.lane.b32.xlu0 %v895, 48
        %v1403 = vpop.permute.xlu0 %1402
        %1404 = vrot.lane.b32.xlu0 %v896, 48
        %v1405 = vpop.permute.xlu0 %1404
        %1406 = vrot.lane.b32.xlu0 %v897, 48
        %v1407 = vpop.permute.xlu0 %1406
        %1408 = vrot.lane.b32.xlu0 %v898, 48
        %v1409 = vpop.permute.xlu0 %1408
        %1410 = vrot.lane.b32.xlu0 %v899, 48
        %v1411 = vpop.permute.xlu0 %1410
        %1412 = vrot.lane.b32.xlu0 %v900, 48
        %v1413 = vpop.permute.xlu0 %1412
        %1478 = vrot.lane.b32.xlu0 %v901, 64
        %v1479 = vpop.permute.xlu0 %1478
        %1480 = vrot.lane.b32.xlu0 %v902, 64
        %v1481 = vpop.permute.xlu0 %1480
        %1482 = vrot.lane.b32.xlu0 %v903, 64
        %v1483 = vpop.permute.xlu0 %1482
        %1484 = vrot.lane.b32.xlu0 %v904, 64
        %v1485 = vpop.permute.xlu0 %1484
        %1486 = vrot.lane.b32.xlu0 %v905, 64
        %v1487 = vpop.permute.xlu0 %1486
        %1488 = vrot.lane.b32.xlu0 %v906, 64
        %v1489 = vpop.permute.xlu0 %1488
        %1490 = vrot.lane.b32.xlu0 %v907, 64
        %v1491 = vpop.permute.xlu0 %1490
        %1492 = vrot.lane.b32.xlu0 %v908, 64
        %v1493 = vpop.permute.xlu0 %1492
        %1494 = vrot.lane.b32.xlu0 %v909, 64
        %v1495 = vpop.permute.xlu0 %1494
        %1496 = vrot.lane.b32.xlu0 %v910, 64
        %v1497 = vpop.permute.xlu0 %1496
        %1498 = vrot.lane.b32.xlu0 %v911, 64
        %v1499 = vpop.permute.xlu0 %1498
        %1500 = vrot.lane.b32.xlu0 %v912, 64
        %v1501 = vpop.permute.xlu0 %1500
        %1502 = vrot.lane.b32.xlu0 %v913, 64
        %v1503 = vpop.permute.xlu0 %1502
        %1504 = vrot.lane.b32.xlu0 %v914, 64
        %v1505 = vpop.permute.xlu0 %1504
        %1506 = vrot.lane.b32.xlu0 %v915, 64
        %v1507 = vpop.permute.xlu0 %1506
        %1508 = vrot.lane.b32.xlu0 %v916, 64
        %v1509 = vpop.permute.xlu0 %1508
        %1510 = vrot.lane.b32.xlu0 %v917, 64
        %v1511 = vpop.permute.xlu0 %1510
        %1512 = vrot.lane.b32.xlu0 %v918, 64
        %v1513 = vpop.permute.xlu0 %1512
        %1514 = vrot.lane.b32.xlu0 %v919, 64
        %v1515 = vpop.permute.xlu0 %1514
        %1516 = vrot.lane.b32.xlu0 %v920, 64
        %v1517 = vpop.permute.xlu0 %1516
        %1518 = vrot.lane.b32.xlu0 %v921, 64
        %v1519 = vpop.permute.xlu0 %1518
        %1520 = vrot.lane.b32.xlu0 %v922, 64
        %v1521 = vpop.permute.xlu0 %1520
        %1522 = vrot.lane.b32.xlu0 %v923, 64
        %v1523 = vpop.permute.xlu0 %1522
        %1524 = vrot.lane.b32.xlu0 %v924, 64
        %v1525 = vpop.permute.xlu0 %1524
        %1526 = vrot.lane.b32.xlu0 %v925, 64
        %v1527 = vpop.permute.xlu0 %1526
        %1528 = vrot.lane.b32.xlu0 %v926, 64
        %v1529 = vpop.permute.xlu0 %1528
        %1530 = vrot.lane.b32.xlu0 %v927, 64
        %v1531 = vpop.permute.xlu0 %1530
        %1532 = vrot.lane.b32.xlu0 %v928, 64
        %v1533 = vpop.permute.xlu0 %1532
        %1534 = vrot.lane.b32.xlu0 %v929, 64
        %v1535 = vpop.permute.xlu0 %1534
        %1536 = vrot.lane.b32.xlu0 %v930, 64
        %v1537 = vpop.permute.xlu0 %1536
        %1538 = vrot.lane.b32.xlu0 %v931, 64
        %v1539 = vpop.permute.xlu0 %1538
        %1540 = vrot.lane.b32.xlu0 %v932, 64
        %v1541 = vpop.permute.xlu0 %1540
        %1606 = vrot.lane.b32.xlu0 %v933, 80
        %v1607 = vpop.permute.xlu0 %1606
        %1608 = vrot.lane.b32.xlu0 %v934, 80
        %v1609 = vpop.permute.xlu0 %1608
        %1610 = vrot.lane.b32.xlu0 %v935, 80
        %v1611 = vpop.permute.xlu0 %1610
        %1612 = vrot.lane.b32.xlu0 %v936, 80
        %v1613 = vpop.permute.xlu0 %1612
        %1614 = vrot.lane.b32.xlu0 %v937, 80
        %v1615 = vpop.permute.xlu0 %1614
        %1616 = vrot.lane.b32.xlu0 %v938, 80
        %v1617 = vpop.permute.xlu0 %1616
        %1618 = vrot.lane.b32.xlu0 %v939, 80
        %v1619 = vpop.permute.xlu0 %1618
        %1620 = vrot.lane.b32.xlu0 %v940, 80
        %v1621 = vpop.permute.xlu0 %1620
        %1622 = vrot.lane.b32.xlu0 %v941, 80
        %v1623 = vpop.permute.xlu0 %1622
        %1624 = vrot.lane.b32.xlu0 %v942, 80
        %v1625 = vpop.permute.xlu0 %1624
        %1626 = vrot.lane.b32.xlu0 %v943, 80
        %v1627 = vpop.permute.xlu0 %1626
        %1628 = vrot.lane.b32.xlu0 %v944, 80
        %v1629 = vpop.permute.xlu0 %1628
        %1630 = vrot.lane.b32.xlu0 %v945, 80
        %v1631 = vpop.permute.xlu0 %1630
        %1632 = vrot.lane.b32.xlu0 %v946, 80
        %v1633 = vpop.permute.xlu0 %1632
        %1634 = vrot.lane.b32.xlu0 %v947, 80
        %v1635 = vpop.permute.xlu0 %1634
        %1636 = vrot.lane.b32.xlu0 %v948, 80
        %v1637 = vpop.permute.xlu0 %1636
        %1638 = vrot.lane.b32.xlu0 %v949, 80
        %v1639 = vpop.permute.xlu0 %1638
        %1640 = vrot.lane.b32.xlu0 %v950, 80
        %v1641 = vpop.permute.xlu0 %1640
        %1642 = vrot.lane.b32.xlu0 %v951, 80
        %v1643 = vpop.permute.xlu0 %1642
        %1644 = vrot.lane.b32.xlu0 %v952, 80
        %v1645 = vpop.permute.xlu0 %1644
        %1646 = vrot.lane.b32.xlu0 %v953, 80
        %v1647 = vpop.permute.xlu0 %1646
        %1648 = vrot.lane.b32.xlu0 %v954, 80
        %v1649 = vpop.permute.xlu0 %1648
        %1650 = vrot.lane.b32.xlu0 %v955, 80
        %v1651 = vpop.permute.xlu0 %1650
        %1652 = vrot.lane.b32.xlu0 %v956, 80
        %v1653 = vpop.permute.xlu0 %1652
        %1654 = vrot.lane.b32.xlu0 %v957, 80
        %v1655 = vpop.permute.xlu0 %1654
        %1656 = vrot.lane.b32.xlu0 %v958, 80
        %v1657 = vpop.permute.xlu0 %1656
        %1658 = vrot.lane.b32.xlu0 %v959, 80
        %v1659 = vpop.permute.xlu0 %1658
        %1660 = vrot.lane.b32.xlu0 %v960, 80
        %v1661 = vpop.permute.xlu0 %1660
        %1662 = vrot.lane.b32.xlu0 %v961, 80
        %v1663 = vpop.permute.xlu0 %1662
        %1664 = vrot.lane.b32.xlu0 %v962, 80
        %v1665 = vpop.permute.xlu0 %1664
        %1666 = vrot.lane.b32.xlu0 %v963, 80
        %v1667 = vpop.permute.xlu0 %1666
        %1668 = vrot.lane.b32.xlu0 %v964, 80
        %v1669 = vpop.permute.xlu0 %1668
        %1734 = vrot.lane.b32.xlu0 %v966, 96
        %v1735 = vpop.permute.xlu0 %1734
        %1736 = vrot.lane.b32.xlu0 %v967, 96
        %v1737 = vpop.permute.xlu0 %1736
        %1738 = vrot.lane.b32.xlu0 %v968, 96
        %v1739 = vpop.permute.xlu0 %1738
        %1740 = vrot.lane.b32.xlu0 %v969, 96
        %v1741 = vpop.permute.xlu0 %1740
        %1742 = vrot.lane.b32.xlu0 %v970, 96
        %v1743 = vpop.permute.xlu0 %1742
        %1744 = vrot.lane.b32.xlu0 %v971, 96
        %v1745 = vpop.permute.xlu0 %1744
        %1746 = vrot.lane.b32.xlu0 %v972, 96
        %v1747 = vpop.permute.xlu0 %1746
        %1748 = vrot.lane.b32.xlu0 %v973, 96
        %v1749 = vpop.permute.xlu0 %1748
        %1750 = vrot.lane.b32.xlu0 %v974, 96
        %v1751 = vpop.permute.xlu0 %1750
        %1752 = vrot.lane.b32.xlu0 %v975, 96
        %v1753 = vpop.permute.xlu0 %1752
        %1754 = vrot.lane.b32.xlu0 %v976, 96
        %v1755 = vpop.permute.xlu0 %1754
        %1756 = vrot.lane.b32.xlu0 %v977, 96
        %v1757 = vpop.permute.xlu0 %1756
        %1758 = vrot.lane.b32.xlu0 %v978, 96
        %v1759 = vpop.permute.xlu0 %1758
        %1760 = vrot.lane.b32.xlu0 %v979, 96
        %v1761 = vpop.permute.xlu0 %1760
        %1762 = vrot.lane.b32.xlu0 %v980, 96
        %v1763 = vpop.permute.xlu0 %1762
        %1764 = vrot.lane.b32.xlu0 %v981, 96
        %v1765 = vpop.permute.xlu0 %1764
        %1766 = vrot.lane.b32.xlu0 %v982, 96
        %v1767 = vpop.permute.xlu0 %1766
        %1768 = vrot.lane.b32.xlu0 %v983, 96
        %v1769 = vpop.permute.xlu0 %1768
        %1770 = vrot.lane.b32.xlu0 %v984, 96
        %v1771 = vpop.permute.xlu0 %1770
        %1772 = vrot.lane.b32.xlu0 %v985, 96
        %v1773 = vpop.permute.xlu0 %1772
        %1774 = vrot.lane.b32.xlu0 %v986, 96
        %v1775 = vpop.permute.xlu0 %1774
        %1776 = vrot.lane.b32.xlu0 %v987, 96
        %v1777 = vpop.permute.xlu0 %1776
        %1778 = vrot.lane.b32.xlu0 %v988, 96
        %v1779 = vpop.permute.xlu0 %1778
        %1780 = vrot.lane.b32.xlu0 %v989, 96
        %v1781 = vpop.permute.xlu0 %1780
        %1782 = vrot.lane.b32.xlu0 %v990, 96
        %v1783 = vpop.permute.xlu0 %1782
        %1784 = vrot.lane.b32.xlu0 %v991, 96
        %v1785 = vpop.permute.xlu0 %1784
        %1786 = vrot.lane.b32.xlu0 %v992, 96
        %v1787 = vpop.permute.xlu0 %1786
        %1788 = vrot.lane.b32.xlu0 %v993, 96
        %v1789 = vpop.permute.xlu0 %1788
        %1790 = vrot.lane.b32.xlu0 %v994, 96
        %v1791 = vpop.permute.xlu0 %1790
        %1792 = vrot.lane.b32.xlu0 %v995, 96
        %v1793 = vpop.permute.xlu0 %1792
        %1794 = vrot.lane.b32.xlu0 %v996, 96
        %v1795 = vpop.permute.xlu0 %1794
        %1796 = vrot.lane.b32.xlu0 %v997, 96
        %v1797 = vpop.permute.xlu0 %1796
        %1862 = vrot.lane.b32.xlu0 %v998, 112
        %v1863 = vpop.permute.xlu0 %1862
        %1864 = vrot.lane.b32.xlu0 %v999, 112
        %v1865 = vpop.permute.xlu0 %1864
        %1866 = vrot.lane.b32.xlu0 %v1000, 112
        %v1867 = vpop.permute.xlu0 %1866
        %1868 = vrot.lane.b32.xlu0 %v1001, 112
        %v1869 = vpop.permute.xlu0 %1868
        %1870 = vrot.lane.b32.xlu0 %v1002, 112
        %v1871 = vpop.permute.xlu0 %1870
        %1872 = vrot.lane.b32.xlu0 %v1003, 112
        %v1873 = vpop.permute.xlu0 %1872
        %1874 = vrot.lane.b32.xlu0 %v1004, 112
        %v1875 = vpop.permute.xlu0 %1874
        %1876 = vrot.lane.b32.xlu0 %v1005, 112
        %v1877 = vpop.permute.xlu0 %1876
        %1878 = vrot.lane.b32.xlu0 %v1006, 112
        %v1879 = vpop.permute.xlu0 %1878
        %1880 = vrot.lane.b32.xlu0 %v1007, 112
        %v1881 = vpop.permute.xlu0 %1880
        %1882 = vrot.lane.b32.xlu0 %v1008, 112
        %v1883 = vpop.permute.xlu0 %1882
        %1884 = vrot.lane.b32.xlu0 %v1009, 112
        %v1885 = vpop.permute.xlu0 %1884
        %1886 = vrot.lane.b32.xlu0 %v1010, 112
        %v1887 = vpop.permute.xlu0 %1886
        %1888 = vrot.lane.b32.xlu0 %v1011, 112
        %v1889 = vpop.permute.xlu0 %1888
        %1890 = vrot.lane.b32.xlu0 %v1012, 112
        %v1891 = vpop.permute.xlu0 %1890
        %1892 = vrot.lane.b32.xlu0 %v1013, 112
        %v1893 = vpop.permute.xlu0 %1892
        %1894 = vrot.lane.b32.xlu0 %v1014, 112
        %v1895 = vpop.permute.xlu0 %1894
        %1896 = vrot.lane.b32.xlu0 %v1015, 112
        %v1897 = vpop.permute.xlu0 %1896
        %1898 = vrot.lane.b32.xlu0 %v1016, 112
        %v1899 = vpop.permute.xlu0 %1898
        %1900 = vrot.lane.b32.xlu0 %v1017, 112
        %v1901 = vpop.permute.xlu0 %1900
        %1902 = vrot.lane.b32.xlu0 %v1018, 112
        %v1903 = vpop.permute.xlu0 %1902
        %1904 = vrot.lane.b32.xlu0 %v1019, 112
        %v1905 = vpop.permute.xlu0 %1904
        %1906 = vrot.lane.b32.xlu0 %v1020, 112
        %v1907 = vpop.permute.xlu0 %1906
        %1908 = vrot.lane.b32.xlu0 %v1021, 112
        %v1909 = vpop.permute.xlu0 %1908
        %1910 = vrot.lane.b32.xlu0 %v1022, 112
        %v1911 = vpop.permute.xlu0 %1910
        %1912 = vrot.lane.b32.xlu0 %v1023, 112
        %v1913 = vpop.permute.xlu0 %1912
        %1914 = vrot.lane.b32.xlu0 %v1024, 112
        %v1915 = vpop.permute.xlu0 %1914
        %1916 = vrot.lane.b32.xlu0 %v1025, 112
        %v1917 = vpop.permute.xlu0 %1916
        %1918 = vrot.lane.b32.xlu0 %v1026, 112
        %v1919 = vpop.permute.xlu0 %1918
        %1920 = vrot.lane.b32.xlu0 %v1027, 112
        %v1921 = vpop.permute.xlu0 %1920
        %1922 = vrot.lane.b32.xlu0 %v1028, 112
        %v1923 = vpop.permute.xlu0 %1922
        %1924 = vrot.lane.b32.xlu0 %v1029, 112
        %v1925 = vpop.permute.xlu0 %1924
        %v1958 = vsel %vm694, %v773, %v1095
        %v1959 = vsel %vm694, %v774, %v1097
        %v1960 = vsel %vm694, %v775, %v1099
        %v1961 = vsel %vm694, %v776, %v1101
        %v1962 = vsel %vm694, %v777, %v1103
        %v1963 = vsel %vm694, %v778, %v1105
        %v1964 = vsel %vm694, %v779, %v1107
        %v1965 = vsel %vm694, %v780, %v1109
        %v1966 = vsel %vm694, %v781, %v1111
        %v1967 = vsel %vm694, %v782, %v1113
        %v1968 = vsel %vm694, %v783, %v1115
        %v1969 = vsel %vm694, %v784, %v1117
        %v1970 = vsel %vm694, %v785, %v1119
        %v1971 = vsel %vm694, %v786, %v1121
        %v1972 = vsel %vm694, %v787, %v1123
        %v1973 = vsel %vm694, %v788, %v1125
        %v1974 = vsel %vm694, %v789, %v1127
        %v1975 = vsel %vm694, %v790, %v1129
        %v1976 = vsel %vm694, %v791, %v1131
        %v1977 = vsel %vm694, %v792, %v1133
        %v1978 = vsel %vm694, %v793, %v1135
        %v1979 = vsel %vm694, %v794, %v1137
        %v1980 = vsel %vm694, %v795, %v1139
        %v1981 = vsel %vm694, %v796, %v1141
        %v1982 = vsel %vm694, %v797, %v1143
        %v1983 = vsel %vm694, %v798, %v1145
        %v1984 = vsel %vm694, %v799, %v1147
        %v1985 = vsel %vm694, %v800, %v1149
        %v1986 = vsel %vm694, %v801, %v1151
        %v1987 = vsel %vm694, %v802, %v1153
        %v1988 = vsel %vm694, %v803, %v1155
        %v1989 = vsel %vm694, %v804, %v1157
        %vm1990 = vcmask 261120
        %v1991 = vsel %vm1990, %v1958, %v1223
        %v1992 = vsel %vm1990, %v1959, %v1225
        %v1993 = vsel %vm1990, %v1960, %v1227
        %v1994 = vsel %vm1990, %v1961, %v1229
        %v1995 = vsel %vm1990, %v1962, %v1231
        %v1996 = vsel %vm1990, %v1963, %v1233
        %v1997 = vsel %vm1990, %v1964, %v1235
        %v1998 = vsel %vm1990, %v1965, %v1237
        %v1999 = vsel %vm1990, %v1966, %v1239
        %v2000 = vsel %vm1990, %v1967, %v1241
        %v2001 = vsel %vm1990, %v1968, %v1243
        %v2002 = vsel %vm1990, %v1969, %v1245
        %v2003 = vsel %vm1990, %v1970, %v1247
        %v2004 = vsel %vm1990, %v1971, %v1249
        %v2005 = vsel %vm1990, %v1972, %v1251
        %v2006 = vsel %vm1990, %v1973, %v1253
        %v2007 = vsel %vm1990, %v1974, %v1255
        %v2008 = vsel %vm1990, %v1975, %v1257
        %v2009 = vsel %vm1990, %v1976, %v1259
        %v2010 = vsel %vm1990, %v1977, %v1261
        %v2011 = vsel %vm1990, %v1978, %v1263
        %v2012 = vsel %vm1990, %v1979, %v1265
        %v2013 = vsel %vm1990, %v1980, %v1267
        %v2014 = vsel %vm1990, %v1981, %v1269
        %v2015 = vsel %vm1990, %v1982, %v1271
        %v2016 = vsel %vm1990, %v1983, %v1273
        %v2017 = vsel %vm1990, %v1984, %v1275
        %v2018 = vsel %vm1990, %v1985, %v1277
        %v2019 = vsel %vm1990, %v1986, %v1279
        %v2020 = vsel %vm1990, %v1987, %v1281
        %v2021 = vsel %vm1990, %v1988, %v1283
        %v2022 = vsel %vm1990, %v1989, %v1285
        %vm2023 = vcmask 392192
        %v2024 = vsel %vm2023, %v1991, %v1351
        %v2025 = vsel %vm2023, %v1992, %v1353
        %v2026 = vsel %vm2023, %v1993, %v1355
        %v2027 = vsel %vm2023, %v1994, %v1357
        %v2028 = vsel %vm2023, %v1995, %v1359
        %v2029 = vsel %vm2023, %v1996, %v1361
        %v2030 = vsel %vm2023, %v1997, %v1363
        %v2031 = vsel %vm2023, %v1998, %v1365
        %v2032 = vsel %vm2023, %v1999, %v1367
        %v2033 = vsel %vm2023, %v2000, %v1369
        %v2034 = vsel %vm2023, %v2001, %v1371
        %v2035 = vsel %vm2023, %v2002, %v1373
        %v2036 = vsel %vm2023, %v2003, %v1375
        %v2037 = vsel %vm2023, %v2004, %v1377
        %v2038 = vsel %vm2023, %v2005, %v1379
        %v2039 = vsel %vm2023, %v2006, %v1381
        %v2040 = vsel %vm2023, %v2007, %v1383
        %v2041 = vsel %vm2023, %v2008, %v1385
        %v2042 = vsel %vm2023, %v2009, %v1387
        %v2043 = vsel %vm2023, %v2010, %v1389
        %v2044 = vsel %vm2023, %v2011, %v1391
        %v2045 = vsel %vm2023, %v2012, %v1393
        %v2046 = vsel %vm2023, %v2013, %v1395
        %v2047 = vsel %vm2023, %v2014, %v1397
        %v2048 = vsel %vm2023, %v2015, %v1399
        %v2049 = vsel %vm2023, %v2016, %v1401
        %v2050 = vsel %vm2023, %v2017, %v1403
        %v2051 = vsel %vm2023, %v2018, %v1405
        %v2052 = vsel %vm2023, %v2019, %v1407
        %v2053 = vsel %vm2023, %v2020, %v1409
        %v2054 = vsel %vm2023, %v2021, %v1411
        %v2055 = vsel %vm2023, %v2022, %v1413
        %vm2056 = vcmask 523264
        %v2057 = vsel %vm2056, %v2024, %v1479
        %v2058 = vsel %vm2056, %v2025, %v1481
        %v2059 = vsel %vm2056, %v2026, %v1483
        %v2060 = vsel %vm2056, %v2027, %v1485
        %v2061 = vsel %vm2056, %v2028, %v1487
        %v2062 = vsel %vm2056, %v2029, %v1489
        %v2063 = vsel %vm2056, %v2030, %v1491
        %v2064 = vsel %vm2056, %v2031, %v1493
        %v2065 = vsel %vm2056, %v2032, %v1495
        %v2066 = vsel %vm2056, %v2033, %v1497
        %v2067 = vsel %vm2056, %v2034, %v1499
        %v2068 = vsel %vm2056, %v2035, %v1501
        %v2069 = vsel %vm2056, %v2036, %v1503
        %v2070 = vsel %vm2056, %v2037, %v1505
        %v2071 = vsel %vm2056, %v2038, %v1507
        %v2072 = vsel %vm2056, %v2039, %v1509
        %v2073 = vsel %vm2056, %v2040, %v1511
        %v2074 = vsel %vm2056, %v2041, %v1513
        %v2075 = vsel %vm2056, %v2042, %v1515
        %v2076 = vsel %vm2056, %v2043, %v1517
        %v2077 = vsel %vm2056, %v2044, %v1519
        %v2078 = vsel %vm2056, %v2045, %v1521
        %v2079 = vsel %vm2056, %v2046, %v1523
        %v2080 = vsel %vm2056, %v2047, %v1525
        %v2081 = vsel %vm2056, %v2048, %v1527
        %v2082 = vsel %vm2056, %v2049, %v1529
        %v2083 = vsel %vm2056, %v2050, %v1531
        %v2084 = vsel %vm2056, %v2051, %v1533
        %v2085 = vsel %vm2056, %v2052, %v1535
        %v2086 = vsel %vm2056, %v2053, %v1537
        %v2087 = vsel %vm2056, %v2054, %v1539
        %v2088 = vsel %vm2056, %v2055, %v1541
        %vm2089 = vcmask 654336
        %v2090 = vsel %vm2089, %v2057, %v1607
        %v2091 = vsel %vm2089, %v2058, %v1609
        %v2092 = vsel %vm2089, %v2059, %v1611
        %v2093 = vsel %vm2089, %v2060, %v1613
        %v2094 = vsel %vm2089, %v2061, %v1615
        %v2095 = vsel %vm2089, %v2062, %v1617
        %v2096 = vsel %vm2089, %v2063, %v1619
        %v2097 = vsel %vm2089, %v2064, %v1621
        %v2098 = vsel %vm2089, %v2065, %v1623
        %v2099 = vsel %vm2089, %v2066, %v1625
        %v2100 = vsel %vm2089, %v2067, %v1627
        %v2101 = vsel %vm2089, %v2068, %v1629
        %v2102 = vsel %vm2089, %v2069, %v1631
        %v2103 = vsel %vm2089, %v2070, %v1633
        %v2104 = vsel %vm2089, %v2071, %v1635
        %v2105 = vsel %vm2089, %v2072, %v1637
        %v2106 = vsel %vm2089, %v2073, %v1639
        %v2107 = vsel %vm2089, %v2074, %v1641
        %v2108 = vsel %vm2089, %v2075, %v1643
        %v2109 = vsel %vm2089, %v2076, %v1645
        %v2110 = vsel %vm2089, %v2077, %v1647
        %v2111 = vsel %vm2089, %v2078, %v1649
        %v2112 = vsel %vm2089, %v2079, %v1651
        %v2113 = vsel %vm2089, %v2080, %v1653
        %v2114 = vsel %vm2089, %v2081, %v1655
        %v2115 = vsel %vm2089, %v2082, %v1657
        %v2116 = vsel %vm2089, %v2083, %v1659
        %v2117 = vsel %vm2089, %v2084, %v1661
        %v2118 = vsel %vm2089, %v2085, %v1663
        %v2119 = vsel %vm2089, %v2086, %v1665
        %v2120 = vsel %vm2089, %v2087, %v1667
        %v2121 = vsel %vm2089, %v2088, %v1669
        %vm2122 = vcmask 785408
        %v2123 = vsel %vm2122, %v2090, %v1735
        %v2124 = vsel %vm2122, %v2091, %v1737
        %v2125 = vsel %vm2122, %v2092, %v1739
        %v2126 = vsel %vm2122, %v2093, %v1741
        %v2127 = vsel %vm2122, %v2094, %v1743
        %v2128 = vsel %vm2122, %v2095, %v1745
        %v2129 = vsel %vm2122, %v2096, %v1747
        %v2130 = vsel %vm2122, %v2097, %v1749
        %v2131 = vsel %vm2122, %v2098, %v1751
        %v2132 = vsel %vm2122, %v2099, %v1753
        %v2133 = vsel %vm2122, %v2100, %v1755
        %v2134 = vsel %vm2122, %v2101, %v1757
        %v2135 = vsel %vm2122, %v2102, %v1759
        %v2136 = vsel %vm2122, %v2103, %v1761
        %v2137 = vsel %vm2122, %v2104, %v1763
        %v2138 = vsel %vm2122, %v2105, %v1765
        %v2139 = vsel %vm2122, %v2106, %v1767
        %v2140 = vsel %vm2122, %v2107, %v1769
        %v2141 = vsel %vm2122, %v2108, %v1771
        %v2142 = vsel %vm2122, %v2109, %v1773
        %v2143 = vsel %vm2122, %v2110, %v1775
        %v2144 = vsel %vm2122, %v2111, %v1777
        %v2145 = vsel %vm2122, %v2112, %v1779
        %v2146 = vsel %vm2122, %v2113, %v1781
        %v2147 = vsel %vm2122, %v2114, %v1783
        %v2148 = vsel %vm2122, %v2115, %v1785
        %v2149 = vsel %vm2122, %v2116, %v1787
        %v2150 = vsel %vm2122, %v2117, %v1789
        %v2151 = vsel %vm2122, %v2118, %v1791
        %v2152 = vsel %vm2122, %v2119, %v1793
        %v2153 = vsel %vm2122, %v2120, %v1795
        %v2154 = vsel %vm2122, %v2121, %v1797
        %vm2155 = vcmask 916480
        %v2156 = vsel %vm2155, %v2123, %v1863
        %v2157 = vsel %vm2155, %v2124, %v1865
        %v2158 = vsel %vm2155, %v2125, %v1867
        %v2159 = vsel %vm2155, %v2126, %v1869
        %v2160 = vsel %vm2155, %v2127, %v1871
        %v2161 = vsel %vm2155, %v2128, %v1873
        %v2162 = vsel %vm2155, %v2129, %v1875
        %v2163 = vsel %vm2155, %v2130, %v1877
        %v2164 = vsel %vm2155, %v2131, %v1879
        %v2165 = vsel %vm2155, %v2132, %v1881
        %v2166 = vsel %vm2155, %v2133, %v1883
        %v2167 = vsel %vm2155, %v2134, %v1885
        %v2168 = vsel %vm2155, %v2135, %v1887
        %v2169 = vsel %vm2155, %v2136, %v1889
        %v2170 = vsel %vm2155, %v2137, %v1891
        %v2171 = vsel %vm2155, %v2138, %v1893
        %v2172 = vsel %vm2155, %v2139, %v1895
        %v2173 = vsel %vm2155, %v2140, %v1897
        %v2174 = vsel %vm2155, %v2141, %v1899
        %v2175 = vsel %vm2155, %v2142, %v1901
        %v2176 = vsel %vm2155, %v2143, %v1903
        %v2177 = vsel %vm2155, %v2144, %v1905
        %v2178 = vsel %vm2155, %v2145, %v1907
        %v2179 = vsel %vm2155, %v2146, %v1909
        %v2180 = vsel %vm2155, %v2147, %v1911
        %v2181 = vsel %vm2155, %v2148, %v1913
        %v2182 = vsel %vm2155, %v2149, %v1915
        %v2183 = vsel %vm2155, %v2150, %v1917
        %v2184 = vsel %vm2155, %v2151, %v1919
        %v2185 = vsel %vm2155, %v2152, %v1921
        %v2186 = vsel %vm2155, %v2153, %v1923
        %v2187 = vsel %vm2155, %v2154, %v1925
        %v2188 = vpack.c.bf16 %v2157, %v2156
        %v2189 = vpack.c.bf16 %v1031, %v1030
        %v2190 = vpack.c.bf16 %v2159, %v2158
        %v2191 = vpack.c.bf16 %v1033, %v1032
        %v2192 = vpack.c.bf16 %v2161, %v2160
        %v2193 = vpack.c.bf16 %v1035, %v1034
        %v2194 = vpack.c.bf16 %v2163, %v2162
        %v2195 = vpack.c.bf16 %v1037, %v1036
        %v2196 = vpack.c.bf16 %v2165, %v2164
        %v2197 = vpack.c.bf16 %v1039, %v1038
        %v2198 = vpack.c.bf16 %v2167, %v2166
        %v2199 = vpack.c.bf16 %v1041, %v1040
        %v2200 = vpack.c.bf16 %v2169, %v2168
        %v2201 = vpack.c.bf16 %v1043, %v1042
        %v2202 = vpack.c.bf16 %v2171, %v2170
        %v2203 = vpack.c.bf16 %v1045, %v1044
        %v2204 = vpack.c.bf16 %v2173, %v2172
        %v2205 = vpack.c.bf16 %v1047, %v1046
        %v2206 = vpack.c.bf16 %v2175, %v2174
        %v2207 = vpack.c.bf16 %v1049, %v1048
        %v2208 = vpack.c.bf16 %v2177, %v2176
        %v2209 = vpack.c.bf16 %v1051, %v1050
        %v2210 = vpack.c.bf16 %v2179, %v2178
        %v2211 = vpack.c.bf16 %v1053, %v1052
        %v2212 = vpack.c.bf16 %v2181, %v2180
        %v2213 = vpack.c.bf16 %v1055, %v1054
        %v2214 = vpack.c.bf16 %v2183, %v2182
        %v2215 = vpack.c.bf16 %v1057, %v1056
        %v2216 = vpack.c.bf16 %v2185, %v2184
        %v2217 = vpack.c.bf16 %v1059, %v1058
        %v2218 = vpack.c.bf16 %v2187, %v2186
        %v2219 = vpack.c.bf16 %v1061, %v1060
        %v2220 = vld [vmem:[%s3] sm:$0xf]
        %v2221 = vld [vmem:[%s3 + $0x4] sm:$0xf]
        %v2222 = vld [vmem:[%s3 + $0x8] sm:$0xf]
        %v2223 = vld [vmem:[%s3 + $0xc] sm:$0xf]
        %v2224 = vld [vmem:[%s3 + $0x10] sm:$0xf]
        %v2225 = vld [vmem:[%s3 + $0x14] sm:$0xf]
        %v2226 = vld [vmem:[%s3 + $0x18] sm:$0xf]
        %v2227 = vld [vmem:[%s3 + $0x1c] sm:$0xf]
        %v2228 = vld [vmem:[%s3 + $0x20] sm:$0xf]
        %v2229 = vld [vmem:[%s3 + $0x24] sm:$0xf]
        %v2230 = vld [vmem:[%s3 + $0x28] sm:$0xf]
        %v2231 = vld [vmem:[%s3 + $0x2c] sm:$0xf]
        %v2232 = vld [vmem:[%s3 + $0x30] sm:$0xf]
        %v2233 = vld [vmem:[%s3 + $0x34] sm:$0xf]
        %v2234 = vld [vmem:[%s3 + $0x38] sm:$0xf]
        %v2235 = vld [vmem:[%s3 + $0x3c] sm:$0xf]
        %v2236 = vld [vmem:[%s3 + $0x40] sm:$0xf]
        %v2237 = vld [vmem:[%s3 + $0x44] sm:$0xf]
        %v2256 = vunpack.c.l.b16 %v2220
        %v2257 = vunpack.c.l.b16 %v2221
        %v2258 = vunpack.c.l.b16 %v2222
        %v2259 = vunpack.c.l.b16 %v2223
        %v2260 = vunpack.c.l.b16 %v2224
        %v2261 = vunpack.c.l.b16 %v2225
        %v2262 = vunpack.c.l.b16 %v2226
        %v2263 = vunpack.c.l.b16 %v2227
        %v2264 = vunpack.c.l.b16 %v2228
        %v2265 = vunpack.c.l.b16 %v2229
        %v2266 = vunpack.c.l.b16 %v2230
        %v2267 = vunpack.c.l.b16 %v2231
        %v2268 = vunpack.c.l.b16 %v2232
        %v2269 = vunpack.c.l.b16 %v2233
        %v2270 = vunpack.c.l.b16 %v2234
        %v2271 = vunpack.c.l.b16 %v2235
        %v2272 = vunpack.c.l.b16 %v2236
        %v2273 = vunpack.c.l.b16 %v2237
        %v2274 = vpack.c.b16 %v2257, %v2256
        %v2275 = vpack.c.b16 %v2259, %v2258
        %v2276 = vpack.c.b16 %v2261, %v2260
        %v2277 = vpack.c.b16 %v2263, %v2262
        %v2278 = vpack.c.b16 %v2265, %v2264
        %v2279 = vpack.c.b16 %v2267, %v2266
        %v2280 = vpack.c.b16 %v2269, %v2268
        %v2281 = vpack.c.b16 %v2271, %v2270
        %v2282 = vpack.c.b16 %v2273, %v2272
        %v2293 = vsel %vm694, %v2189, 0
        %v2296 = vsel %vm694, %v2191, 0
        %v2299 = vsel %vm694, %v2193, 0
        %v2302 = vsel %vm694, %v2195, 0
        %v2305 = vsel %vm694, %v2197, 0
        %v2308 = vsel %vm694, %v2199, 0
        %v2311 = vsel %vm694, %v2201, 0
        %v2314 = vsel %vm694, %v2203, 0
        %v2317 = vsel %vm694, %v2205, 0
        %v2320 = vsel %vm694, %v2207, 0
        %v2323 = vsel %vm694, %v2209, 0
        %v2326 = vsel %vm694, %v2211, 0
        %v2329 = vsel %vm694, %v2213, 0
        %v2332 = vsel %vm694, %v2215, 0
        %v2335 = vsel %vm694, %v2217, 0
        %v2338 = vsel %vm694, %v2219, 0
        %2340 = vmatprep.subr.bf16.mxu0 0
        %2341 = vmatpush1.bf16.msra.mxu0 %v2281
        %2342 = vmatprep.subr.bf16.mxu0 0
        %2343 = vmatpush1.bf16.msra.mxu0 %v2280
        %2344 = vmatprep.subr.bf16.mxu0 0
        %2345 = vmatpush1.bf16.msra.mxu0 %v2279
        %2346 = vmatprep.subr.bf16.mxu0 0
        %2347 = vmatpush1.bf16.msra.mxu0 %v2278
        %2348 = vmatprep.subr.bf16.mxu0 0
        %2349 = vmatpush1.bf16.msra.mxu0 %v2277
        %2350 = vmatprep.subr.bf16.mxu0 0
        %2351 = vmatpush1.bf16.msra.mxu0 %v2276
        %2352 = vmatprep.subr.bf16.mxu0 0
        %2353 = vmatpush1.bf16.msra.mxu0 %v2275
        %2354 = vmatprep.subr.bf16.mxu0 0
        %2355 = vmatpush1.bf16.msra.mxu0 %v2274
        %2356 = vmatprep.subr.bf16.mxu0 0
        %2357 = vmatpush2.bf16.msra.mxu0 0
        %2358 = vmatprep.subr.bf16.mxu0 0
        %2359 = vmatpush2.bf16.msra.mxu0 0
        %2360 = vmatprep.subr.bf16.mxu0 0
        %2361 = vmatpush2.bf16.msra.mxu0 0
        %2362 = vmatprep.subr.bf16.mxu0 0
        %2363 = vmatpush2.bf16.msra.mxu0 0
        %2364 = vmatprep.subr.bf16.mxu0 0
        %2365 = vmatpush2.bf16.msra.mxu0 0
        %2366 = vmatprep.subr.bf16.mxu0 0
        %2367 = vmatpush2.bf16.msra.mxu0 0
        %2368 = vmatprep.subr.bf16.mxu0 0
        %2369 = vmatpush2.bf16.msra.mxu0 0
        %2370 = vmatprep.subr.bf16.mxu0 0
        %2371 = vmatpush2.bf16.msra.mxu0 %v2282
        %2372 = vmatprep.mubr.bf16.mxu0 %v2293
        %2373 = vmatmul.mubr.bf16.gmra.mxu0 %v2188
        %v2374 = vpop.f32.mrf.mxu0
        %v2375 = vadd.f32 0.0, %v2374
        %v2376 = vpop.f32.mrf.mxu0
        %v2377 = vpop.f32.mrf.mxu0
        %v2378 = vadd.f32 0.0, %v2377
        %v2379 = vpop.f32.mrf.mxu0
        %2380 = vmatprep.mubr.bf16.mxu0 %v2296
        %2381 = vmatmul.mubr.bf16.gmra.mxu0 %v2190
        %v2382 = vpop.f32.mrf.mxu0
        %v2383 = vadd.f32 0.0, %v2382
        %v2384 = vpop.f32.mrf.mxu0
        %v2385 = vpop.f32.mrf.mxu0
        %v2386 = vadd.f32 0.0, %v2385
        %v2387 = vpop.f32.mrf.mxu0
        %2388 = vmatprep.mubr.bf16.mxu0 %v2299
        %2389 = vmatmul.mubr.bf16.gmra.mxu0 %v2192
        %v2390 = vpop.f32.mrf.mxu0
        %v2391 = vadd.f32 0.0, %v2390
        %v2392 = vpop.f32.mrf.mxu0
        %v2393 = vpop.f32.mrf.mxu0
        %v2394 = vadd.f32 0.0, %v2393
        %v2395 = vpop.f32.mrf.mxu0
        %2396 = vmatprep.mubr.bf16.mxu0 %v2302
        %2397 = vmatmul.mubr.bf16.gmra.mxu0 %v2194
        %v2398 = vpop.f32.mrf.mxu0
        %v2399 = vadd.f32 0.0, %v2398
        %v2400 = vpop.f32.mrf.mxu0
        %v2401 = vpop.f32.mrf.mxu0
        %v2402 = vadd.f32 0.0, %v2401
        %v2403 = vpop.f32.mrf.mxu0
        %2404 = vmatprep.mubr.bf16.mxu0 %v2305
        %2405 = vmatmul.mubr.bf16.gmra.mxu0 %v2196
        %v2406 = vpop.f32.mrf.mxu0
        %v2407 = vadd.f32 0.0, %v2406
        %v2408 = vpop.f32.mrf.mxu0
        %v2409 = vpop.f32.mrf.mxu0
        %v2410 = vadd.f32 0.0, %v2409
        %v2411 = vpop.f32.mrf.mxu0
        %2412 = vmatprep.mubr.bf16.mxu0 %v2308
        %2413 = vmatmul.mubr.bf16.gmra.mxu0 %v2198
        %v2414 = vpop.f32.mrf.mxu0
        %v2415 = vadd.f32 0.0, %v2414
        %v2416 = vpop.f32.mrf.mxu0
        %v2417 = vpop.f32.mrf.mxu0
        %v2418 = vadd.f32 0.0, %v2417
        %v2419 = vpop.f32.mrf.mxu0
        %2420 = vmatprep.mubr.bf16.mxu0 %v2311
        %2421 = vmatmul.mubr.bf16.gmra.mxu0 %v2200
        %v2422 = vpop.f32.mrf.mxu0
        %v2423 = vadd.f32 0.0, %v2422
        %v2424 = vpop.f32.mrf.mxu0
        %v2425 = vpop.f32.mrf.mxu0
        %v2426 = vadd.f32 0.0, %v2425
        %v2427 = vpop.f32.mrf.mxu0
        %2428 = vmatprep.mubr.bf16.mxu0 %v2314
        %2429 = vmatmul.mubr.bf16.gmra.mxu0 %v2202
        %v2430 = vpop.f32.mrf.mxu0
        %v2431 = vadd.f32 0.0, %v2430
        %v2432 = vpop.f32.mrf.mxu0
        %v2433 = vpop.f32.mrf.mxu0
        %v2434 = vadd.f32 0.0, %v2433
        %v2435 = vpop.f32.mrf.mxu0
        %2436 = vmatprep.mubr.bf16.mxu0 %v2317
        %2437 = vmatmul.mubr.bf16.gmra.mxu0 %v2204
        %v2438 = vpop.f32.mrf.mxu0
        %v2439 = vadd.f32 0.0, %v2438
        %v2440 = vpop.f32.mrf.mxu0
        %v2441 = vpop.f32.mrf.mxu0
        %v2442 = vadd.f32 0.0, %v2441
        %v2443 = vpop.f32.mrf.mxu0
        %2444 = vmatprep.mubr.bf16.mxu0 %v2320
        %2445 = vmatmul.mubr.bf16.gmra.mxu0 %v2206
        %v2446 = vpop.f32.mrf.mxu0
        %v2447 = vadd.f32 0.0, %v2446
        %v2448 = vpop.f32.mrf.mxu0
        %v2449 = vpop.f32.mrf.mxu0
        %v2450 = vadd.f32 0.0, %v2449
        %v2451 = vpop.f32.mrf.mxu0
        %2452 = vmatprep.mubr.bf16.mxu0 %v2323
        %2453 = vmatmul.mubr.bf16.gmra.mxu0 %v2208
        %v2454 = vpop.f32.mrf.mxu0
        %v2455 = vadd.f32 0.0, %v2454
        %v2456 = vpop.f32.mrf.mxu0
        %v2457 = vpop.f32.mrf.mxu0
        %v2458 = vadd.f32 0.0, %v2457
        %v2459 = vpop.f32.mrf.mxu0
        %2460 = vmatprep.mubr.bf16.mxu0 %v2326
        %2461 = vmatmul.mubr.bf16.gmra.mxu0 %v2210
        %v2462 = vpop.f32.mrf.mxu0
        %v2463 = vadd.f32 0.0, %v2462
        %v2464 = vpop.f32.mrf.mxu0
        %v2465 = vpop.f32.mrf.mxu0
        %v2466 = vadd.f32 0.0, %v2465
        %v2467 = vpop.f32.mrf.mxu0
        %2468 = vmatprep.mubr.bf16.mxu0 %v2329
        %2469 = vmatmul.mubr.bf16.gmra.mxu0 %v2212
        %v2470 = vpop.f32.mrf.mxu0
        %v2471 = vadd.f32 0.0, %v2470
        %v2472 = vpop.f32.mrf.mxu0
        %v2473 = vpop.f32.mrf.mxu0
        %v2474 = vadd.f32 0.0, %v2473
        %v2475 = vpop.f32.mrf.mxu0
        %2476 = vmatprep.mubr.bf16.mxu0 %v2332
        %2477 = vmatmul.mubr.bf16.gmra.mxu0 %v2214
        %v2478 = vpop.f32.mrf.mxu0
        %v2479 = vadd.f32 0.0, %v2478
        %v2480 = vpop.f32.mrf.mxu0
        %v2481 = vpop.f32.mrf.mxu0
        %v2482 = vadd.f32 0.0, %v2481
        %v2483 = vpop.f32.mrf.mxu0
        %2484 = vmatprep.mubr.bf16.mxu0 %v2335
        %2485 = vmatmul.mubr.bf16.gmra.mxu0 %v2216
        %v2486 = vpop.f32.mrf.mxu0
        %v2487 = vadd.f32 0.0, %v2486
        %v2488 = vpop.f32.mrf.mxu0
        %v2489 = vpop.f32.mrf.mxu0
        %v2490 = vadd.f32 0.0, %v2489
        %v2491 = vpop.f32.mrf.mxu0
        %2492 = vmatprep.mubr.bf16.mxu0 %v2338
        %2493 = vmatmul.mubr.bf16.gmra.mxu0 %v2218
        %v2494 = vpop.f32.mrf.mxu0
        %v2495 = vadd.f32 0.0, %v2494
        %v2496 = vpop.f32.mrf.mxu0
        %v2497 = vpop.f32.mrf.mxu0
        %v2498 = vadd.f32 0.0, %v2497
        %v2499 = vpop.f32.mrf.mxu0
        %2500 = vdwg.mxu0
        %v2501 = vld [vmem:[%s4] sm:$0x1]
        %v2503 = vlaneseq
        %v2504 = vshrl.u32 %v2503, 7
        %v2505 = vsub.s32 0, %v2504
        %v2506 = vrot.slane %v2501, %v2505
        %v2508 = vmul.f32 %v2375, %v2506
        %v2509 = vmul.f32 %v2378, %v2506
        %v2510 = vmul.f32 %v2383, %v2506
        %v2511 = vmul.f32 %v2386, %v2506
        %v2512 = vmul.f32 %v2391, %v2506
        %v2513 = vmul.f32 %v2394, %v2506
        %v2514 = vmul.f32 %v2399, %v2506
        %v2515 = vmul.f32 %v2402, %v2506
        %v2516 = vmul.f32 %v2407, %v2506
        %v2517 = vmul.f32 %v2410, %v2506
        %v2518 = vmul.f32 %v2415, %v2506
        %v2519 = vmul.f32 %v2418, %v2506
        %v2520 = vmul.f32 %v2423, %v2506
        %v2521 = vmul.f32 %v2426, %v2506
        %v2522 = vmul.f32 %v2431, %v2506
        %v2523 = vmul.f32 %v2434, %v2506
        %v2524 = vmul.f32 %v2439, %v2506
        %v2525 = vmul.f32 %v2442, %v2506
        %v2526 = vmul.f32 %v2447, %v2506
        %v2527 = vmul.f32 %v2450, %v2506
        %v2528 = vmul.f32 %v2455, %v2506
        %v2529 = vmul.f32 %v2458, %v2506
        %v2530 = vmul.f32 %v2463, %v2506
        %v2531 = vmul.f32 %v2466, %v2506
        %v2532 = vmul.f32 %v2471, %v2506
        %v2533 = vmul.f32 %v2474, %v2506
        %v2534 = vmul.f32 %v2479, %v2506
        %v2535 = vmul.f32 %v2482, %v2506
        %v2536 = vmul.f32 %v2487, %v2506
        %v2537 = vmul.f32 %v2490, %v2506
        %v2538 = vmul.f32 %v2495, %v2506
        %v2539 = vmul.f32 %v2498, %v2506
        %v2540 = vld [vmem:[%s5] sm:$0x1]
        %v2542 = vlaneseq
        %v2543 = vshrl.u32 %v2542, 7
        %v2544 = vsub.s32 0, %v2543
        %v2545 = vrot.slane %v2540, %v2544
        %v2547 = vadd.f32 %v2508, %v2545
        %v2548 = vadd.f32 %v2509, %v2545
        %v2549 = vadd.f32 %v2510, %v2545
        %v2550 = vadd.f32 %v2511, %v2545
        %v2551 = vadd.f32 %v2512, %v2545
        %v2552 = vadd.f32 %v2513, %v2545
        %v2553 = vadd.f32 %v2514, %v2545
        %v2554 = vadd.f32 %v2515, %v2545
        %v2555 = vadd.f32 %v2516, %v2545
        %v2556 = vadd.f32 %v2517, %v2545
        %v2557 = vadd.f32 %v2518, %v2545
        %v2558 = vadd.f32 %v2519, %v2545
        %v2559 = vadd.f32 %v2520, %v2545
        %v2560 = vadd.f32 %v2521, %v2545
        %v2561 = vadd.f32 %v2522, %v2545
        %v2562 = vadd.f32 %v2523, %v2545
        %v2563 = vadd.f32 %v2524, %v2545
        %v2564 = vadd.f32 %v2525, %v2545
        %v2565 = vadd.f32 %v2526, %v2545
        %v2566 = vadd.f32 %v2527, %v2545
        %v2567 = vadd.f32 %v2528, %v2545
        %v2568 = vadd.f32 %v2529, %v2545
        %v2569 = vadd.f32 %v2530, %v2545
        %v2570 = vadd.f32 %v2531, %v2545
        %v2571 = vadd.f32 %v2532, %v2545
        %v2572 = vadd.f32 %v2533, %v2545
        %v2573 = vadd.f32 %v2534, %v2545
        %v2574 = vadd.f32 %v2535, %v2545
        %v2575 = vadd.f32 %v2536, %v2545
        %v2576 = vadd.f32 %v2537, %v2545
        %v2577 = vadd.f32 %v2538, %v2545
        %v2578 = vadd.f32 %v2539, %v2545
        %vm2579 = vcmp.gt.f32.partialorder %v2547, 0.0
        %vm2580 = vcmp.gt.f32.partialorder %v2548, 0.0
        %vm2581 = vcmp.gt.f32.partialorder %v2549, 0.0
        %vm2582 = vcmp.gt.f32.partialorder %v2550, 0.0
        %vm2583 = vcmp.gt.f32.partialorder %v2551, 0.0
        %vm2584 = vcmp.gt.f32.partialorder %v2552, 0.0
        %vm2585 = vcmp.gt.f32.partialorder %v2553, 0.0
        %vm2586 = vcmp.gt.f32.partialorder %v2554, 0.0
        %vm2587 = vcmp.gt.f32.partialorder %v2555, 0.0
        %vm2588 = vcmp.gt.f32.partialorder %v2556, 0.0
        %vm2589 = vcmp.gt.f32.partialorder %v2557, 0.0
        %vm2590 = vcmp.gt.f32.partialorder %v2558, 0.0
        %vm2591 = vcmp.gt.f32.partialorder %v2559, 0.0
        %vm2592 = vcmp.gt.f32.partialorder %v2560, 0.0
        %vm2593 = vcmp.gt.f32.partialorder %v2561, 0.0
        %vm2594 = vcmp.gt.f32.partialorder %v2562, 0.0
        %vm2595 = vcmp.gt.f32.partialorder %v2563, 0.0
        %vm2596 = vcmp.gt.f32.partialorder %v2564, 0.0
        %vm2597 = vcmp.gt.f32.partialorder %v2565, 0.0
        %vm2598 = vcmp.gt.f32.partialorder %v2566, 0.0
        %vm2599 = vcmp.gt.f32.partialorder %v2567, 0.0
        %vm2600 = vcmp.gt.f32.partialorder %v2568, 0.0
        %vm2601 = vcmp.gt.f32.partialorder %v2569, 0.0
        %vm2602 = vcmp.gt.f32.partialorder %v2570, 0.0
        %vm2603 = vcmp.gt.f32.partialorder %v2571, 0.0
        %vm2604 = vcmp.gt.f32.partialorder %v2572, 0.0
        %vm2605 = vcmp.gt.f32.partialorder %v2573, 0.0
        %vm2606 = vcmp.gt.f32.partialorder %v2574, 0.0
        %vm2607 = vcmp.gt.f32.partialorder %v2575, 0.0
        %vm2608 = vcmp.gt.f32.partialorder %v2576, 0.0
        %vm2609 = vcmp.gt.f32.partialorder %v2577, 0.0
        %vm2610 = vcmp.gt.f32.partialorder %v2578, 0.0
        %v2611 = vld [vmem:[%s6] sm:$0x1]
        %v2613 = vlaneseq
        %v2614 = vshrl.u32 %v2613, 7
        %v2615 = vsub.s32 0, %v2614
        %v2616 = vrot.slane %v2611, %v2615
        %v2618 = vmul.f32 %v2616, %v2547
        %v2619 = vmul.f32 %v2616, %v2548
        %v2620 = vmul.f32 %v2616, %v2549
        %v2621 = vmul.f32 %v2616, %v2550
        %v2622 = vmul.f32 %v2616, %v2551
        %v2623 = vmul.f32 %v2616, %v2552
        %v2624 = vmul.f32 %v2616, %v2553
        %v2625 = vmul.f32 %v2616, %v2554
        %v2626 = vmul.f32 %v2616, %v2555
        %v2627 = vmul.f32 %v2616, %v2556
        %v2628 = vmul.f32 %v2616, %v2557
        %v2629 = vmul.f32 %v2616, %v2558
        %v2630 = vmul.f32 %v2616, %v2559
        %v2631 = vmul.f32 %v2616, %v2560
        %v2632 = vmul.f32 %v2616, %v2561
        %v2633 = vmul.f32 %v2616, %v2562
        %v2634 = vmul.f32 %v2616, %v2563
        %v2635 = vmul.f32 %v2616, %v2564
        %v2636 = vmul.f32 %v2616, %v2565
        %v2637 = vmul.f32 %v2616, %v2566
        %v2638 = vmul.f32 %v2616, %v2567
        %v2639 = vmul.f32 %v2616, %v2568
        %v2640 = vmul.f32 %v2616, %v2569
        %v2641 = vmul.f32 %v2616, %v2570
        %v2642 = vmul.f32 %v2616, %v2571
        %v2643 = vmul.f32 %v2616, %v2572
        %v2644 = vmul.f32 %v2616, %v2573
        %v2645 = vmul.f32 %v2616, %v2574
        %v2646 = vmul.f32 %v2616, %v2575
        %v2647 = vmul.f32 %v2616, %v2576
        %v2648 = vmul.f32 %v2616, %v2577
        %v2649 = vmul.f32 %v2616, %v2578
        %v2650 = vsel %vm2579, %v2547, %v2618
        %v2651 = vsel %vm2580, %v2548, %v2619
        %v2652 = vsel %vm2581, %v2549, %v2620
        %v2653 = vsel %vm2582, %v2550, %v2621
        %v2654 = vsel %vm2583, %v2551, %v2622
        %v2655 = vsel %vm2584, %v2552, %v2623
        %v2656 = vsel %vm2585, %v2553, %v2624
        %v2657 = vsel %vm2586, %v2554, %v2625
        %v2658 = vsel %vm2587, %v2555, %v2626
        %v2659 = vsel %vm2588, %v2556, %v2627
        %v2660 = vsel %vm2589, %v2557, %v2628
        %v2661 = vsel %vm2590, %v2558, %v2629
        %v2662 = vsel %vm2591, %v2559, %v2630
        %v2663 = vsel %vm2592, %v2560, %v2631
        %v2664 = vsel %vm2593, %v2561, %v2632
        %v2665 = vsel %vm2594, %v2562, %v2633
        %v2666 = vsel %vm2595, %v2563, %v2634
        %v2667 = vsel %vm2596, %v2564, %v2635
        %v2668 = vsel %vm2597, %v2565, %v2636
        %v2669 = vsel %vm2598, %v2566, %v2637
        %v2670 = vsel %vm2599, %v2567, %v2638
        %v2671 = vsel %vm2600, %v2568, %v2639
        %v2672 = vsel %vm2601, %v2569, %v2640
        %v2673 = vsel %vm2602, %v2570, %v2641
        %v2674 = vsel %vm2603, %v2571, %v2642
        %v2675 = vsel %vm2604, %v2572, %v2643
        %v2676 = vsel %vm2605, %v2573, %v2644
        %v2677 = vsel %vm2606, %v2574, %v2645
        %v2678 = vsel %vm2607, %v2575, %v2646
        %v2679 = vsel %vm2608, %v2576, %v2647
        %v2680 = vsel %vm2609, %v2577, %v2648
        %v2681 = vsel %vm2610, %v2578, %v2649
        %2682 = vst.msk [vmem:[#allocation3] sm:$0xff] %vm1990, 0.0
        %2683 = vst.msk [vmem:[#allocation3 + $0x8] sm:$0xff] %vm1990, 0.0
        %vm2684 = vcmask 254976
        %2685 = vst.msk [vmem:[#allocation3 + $0x10] sm:$0x3] %vm2684, 0.0
        %s2686 = scalar_lea.vmem [#allocation3], 408
        %2687 = vst.msk [vmem:[%s2686] sm:$0xff] %vm1990, 0.0
        %2688 = vst.msk [vmem:[%s2686 + $0x8] sm:$0xff] %vm1990, 0.0
        %2689 = vst.msk [vmem:[%s2686 + $0x10] sm:$0x3] %vm2684, 0.0
        %vm2690 = vcmask 253952
        %2691 = vst.msk [vmem:[#allocation3] sm:$0x1] %vm2690, 0.0
        %2692 = vst.msk [vmem:[#allocation3 + $0x18] sm:$0x1] %vm2690, 0.0
        %2693 = vst.msk [vmem:[#allocation3 + $0x30] sm:$0x1] %vm2690, 0.0
        %2694 = vst.msk [vmem:[#allocation3 + $0x48] sm:$0x1] %vm2690, 0.0
        %2695 = vst.msk [vmem:[#allocation3 + $0x60] sm:$0x1] %vm2690, 0.0
        %2696 = vst.msk [vmem:[#allocation3 + $0x78] sm:$0x1] %vm2690, 0.0
        %2697 = vst.msk [vmem:[#allocation3 + $0x90] sm:$0x1] %vm2690, 0.0
        %2698 = vst.msk [vmem:[#allocation3 + $0xa8] sm:$0x1] %vm2690, 0.0
        %2699 = vst.msk [vmem:[#allocation3 + $0xc0] sm:$0x1] %vm2690, 0.0
        %2700 = vst.msk [vmem:[#allocation3 + $0xd8] sm:$0x1] %vm2690, 0.0
        %2701 = vst.msk [vmem:[#allocation3 + $0xf0] sm:$0x1] %vm2690, 0.0
        %2702 = vst.msk [vmem:[#allocation3 + $0x108] sm:$0x1] %vm2690, 0.0
        %2703 = vst.msk [vmem:[#allocation3 + $0x120] sm:$0x1] %vm2690, 0.0
        %2704 = vst.msk [vmem:[#allocation3 + $0x138] sm:$0x1] %vm2690, 0.0
        %2705 = vst.msk [vmem:[#allocation3 + $0x150] sm:$0x1] %vm2690, 0.0
        %2706 = vst.msk [vmem:[#allocation3 + $0x168] sm:$0x1] %vm2690, 0.0
        %2707 = vst.msk [vmem:[#allocation3 + $0x180] sm:$0x1] %vm2690, 0.0
        %2708 = vst.msk [vmem:[#allocation3 + $0x198] sm:$0x1] %vm2690, 0.0
        %2709 = vst.msk [vmem:[#allocation3 + $0x11] sm:$0x1] %vm2690, 0.0
        %2710 = vst.msk [vmem:[#allocation3 + $0x29] sm:$0x1] %vm2690, 0.0
        %2711 = vst.msk [vmem:[#allocation3 + $0x41] sm:$0x1] %vm2690, 0.0
        %2712 = vst.msk [vmem:[#allocation3 + $0x59] sm:$0x1] %vm2690, 0.0
        %2713 = vst.msk [vmem:[#allocation3 + $0x71] sm:$0x1] %vm2690, 0.0
        %2714 = vst.msk [vmem:[#allocation3 + $0x89] sm:$0x1] %vm2690, 0.0
        %2715 = vst.msk [vmem:[#allocation3 + $0xa1] sm:$0x1] %vm2690, 0.0
        %2716 = vst.msk [vmem:[#allocation3 + $0xb9] sm:$0x1] %vm2690, 0.0
        %2717 = vst.msk [vmem:[#allocation3 + $0xd1] sm:$0x1] %vm2690, 0.0
        %2718 = vst.msk [vmem:[#allocation3 + $0xe9] sm:$0x1] %vm2690, 0.0
        %2719 = vst.msk [vmem:[#allocation3 + $0x101] sm:$0x1] %vm2690, 0.0
        %2720 = vst.msk [vmem:[#allocation3 + $0x119] sm:$0x1] %vm2690, 0.0
        %2721 = vst.msk [vmem:[#allocation3 + $0x131] sm:$0x1] %vm2690, 0.0
        %2722 = vst.msk [vmem:[#allocation3 + $0x149] sm:$0x1] %vm2690, 0.0
        %2723 = vst.msk [vmem:[#allocation3 + $0x161] sm:$0x1] %vm2690, 0.0
        %2724 = vst.msk [vmem:[#allocation3 + $0x179] sm:$0x1] %vm2690, 0.0
        %2725 = vst.msk [vmem:[#allocation3 + $0x191] sm:$0x1] %vm2690, 0.0
        %2726 = vst.msk [vmem:[#allocation3 + $0x1a9] sm:$0x1] %vm2690, 0.0
        %s2727 = scalar_lea.vmem [#allocation3], 24
        %2728 = vst.msk [vmem:[%s2727 + $0x1] sm:$0xff] %vm1990, %v2650
        %2729 = vst.msk [vmem:[%s2727 + $0x9] sm:$0xff] %vm1990, %v2651
        %2730 = vst.msk [vmem:[%s2727 + $0x19] sm:$0xff] %vm1990, %v2652
        %2731 = vst.msk [vmem:[%s2727 + $0x21] sm:$0xff] %vm1990, %v2653
        %2732 = vst.msk [vmem:[%s2727 + $0x31] sm:$0xff] %vm1990, %v2654
        %2733 = vst.msk [vmem:[%s2727 + $0x39] sm:$0xff] %vm1990, %v2655
        %2734 = vst.msk [vmem:[%s2727 + $0x49] sm:$0xff] %vm1990, %v2656
        %2735 = vst.msk [vmem:[%s2727 + $0x51] sm:$0xff] %vm1990, %v2657
        %2736 = vst.msk [vmem:[%s2727 + $0x61] sm:$0xff] %vm1990, %v2658
        %2737 = vst.msk [vmem:[%s2727 + $0x69] sm:$0xff] %vm1990, %v2659
        %2738 = vst.msk [vmem:[%s2727 + $0x79] sm:$0xff] %vm1990, %v2660
        %2739 = vst.msk [vmem:[%s2727 + $0x81] sm:$0xff] %vm1990, %v2661
        %2740 = vst.msk [vmem:[%s2727 + $0x91] sm:$0xff] %vm1990, %v2662
        %2741 = vst.msk [vmem:[%s2727 + $0x99] sm:$0xff] %vm1990, %v2663
        %2742 = vst.msk [vmem:[%s2727 + $0xa9] sm:$0xff] %vm1990, %v2664
        %2743 = vst.msk [vmem:[%s2727 + $0xb1] sm:$0xff] %vm1990, %v2665
        %2744 = vst.msk [vmem:[%s2727 + $0xc1] sm:$0xff] %vm1990, %v2666
        %2745 = vst.msk [vmem:[%s2727 + $0xc9] sm:$0xff] %vm1990, %v2667
        %2746 = vst.msk [vmem:[%s2727 + $0xd9] sm:$0xff] %vm1990, %v2668
        %2747 = vst.msk [vmem:[%s2727 + $0xe1] sm:$0xff] %vm1990, %v2669
        %2748 = vst.msk [vmem:[%s2727 + $0xf1] sm:$0xff] %vm1990, %v2670
        %2749 = vst.msk [vmem:[%s2727 + $0xf9] sm:$0xff] %vm1990, %v2671
        %2750 = vst.msk [vmem:[%s2727 + $0x109] sm:$0xff] %vm1990, %v2672
        %2751 = vst.msk [vmem:[%s2727 + $0x111] sm:$0xff] %vm1990, %v2673
        %2752 = vst.msk [vmem:[%s2727 + $0x121] sm:$0xff] %vm1990, %v2674
        %2753 = vst.msk [vmem:[%s2727 + $0x129] sm:$0xff] %vm1990, %v2675
        %2754 = vst.msk [vmem:[%s2727 + $0x139] sm:$0xff] %vm1990, %v2676
        %2755 = vst.msk [vmem:[%s2727 + $0x141] sm:$0xff] %vm1990, %v2677
        %2756 = vst.msk [vmem:[%s2727 + $0x151] sm:$0xff] %vm1990, %v2678
        %2757 = vst.msk [vmem:[%s2727 + $0x159] sm:$0xff] %vm1990, %v2679
        %2758 = vst.msk [vmem:[%s2727 + $0x169] sm:$0xff] %vm1990, %v2680
        %2759 = vst.msk [vmem:[%s2727 + $0x171] sm:$0xff] %vm1990, %v2681
        %v2760 = vld [vmem:[#allocation3] sm:$0xff]
        %v2761 = vld [vmem:[#allocation3 + $0x8] sm:$0xff]
        %v2762 = vld [vmem:[#allocation3 + $0x18] sm:$0xff]
        %v2763 = vld [vmem:[#allocation3 + $0x20] sm:$0xff]
        %v2764 = vld [vmem:[#allocation3 + $0x30] sm:$0xff]
        %v2765 = vld [vmem:[#allocation3 + $0x38] sm:$0xff]
        %v2766 = vld [vmem:[#allocation3 + $0x48] sm:$0xff]
        %v2767 = vld [vmem:[#allocation3 + $0x50] sm:$0xff]
        %v2768 = vld [vmem:[#allocation3 + $0x60] sm:$0xff]
        %v2769 = vld [vmem:[#allocation3 + $0x68] sm:$0xff]
        %v2770 = vld [vmem:[#allocation3 + $0x78] sm:$0xff]
        %v2771 = vld [vmem:[#allocation3 + $0x80] sm:$0xff]
        %v2772 = vld [vmem:[#allocation3 + $0x90] sm:$0xff]
        %v2773 = vld [vmem:[#allocation3 + $0x98] sm:$0xff]
        %v2774 = vld [vmem:[#allocation3 + $0xa8] sm:$0xff]
        %v2775 = vld [vmem:[#allocation3 + $0xb0] sm:$0xff]
        %v2776 = vld [vmem:[#allocation3 + $0xc0] sm:$0xff]
        %v2777 = vld [vmem:[#allocation3 + $0xc8] sm:$0xff]
        %v2778 = vld [vmem:[#allocation3 + $0xd8] sm:$0xff]
        %v2779 = vld [vmem:[#allocation3 + $0xe0] sm:$0xff]
        %v2780 = vld [vmem:[#allocation3 + $0xf0] sm:$0xff]
        %v2781 = vld [vmem:[#allocation3 + $0xf8] sm:$0xff]
        %v2782 = vld [vmem:[#allocation3 + $0x108] sm:$0xff]
        %v2783 = vld [vmem:[#allocation3 + $0x110] sm:$0xff]
        %v2784 = vld [vmem:[#allocation3 + $0x120] sm:$0xff]
        %v2785 = vld [vmem:[#allocation3 + $0x128] sm:$0xff]
        %v2786 = vld [vmem:[#allocation3 + $0x138] sm:$0xff]
        %v2787 = vld [vmem:[#allocation3 + $0x140] sm:$0xff]
        %v2788 = vld [vmem:[#allocation3 + $0x150] sm:$0xff]
        %v2789 = vld [vmem:[#allocation3 + $0x158] sm:$0xff]
        %v2790 = vld [vmem:[#allocation3 + $0x168] sm:$0xff]
        %v2791 = vld [vmem:[#allocation3 + $0x170] sm:$0xff]
        %v2792 = vld [vmem:[#allocation3 + $0x1] sm:$0xff]
        %v2793 = vld [vmem:[#allocation3 + $0x9] sm:$0xff]
        %v2794 = vld [vmem:[#allocation3 + $0x19] sm:$0xff]
        %v2795 = vld [vmem:[#allocation3 + $0x21] sm:$0xff]
        %v2796 = vld [vmem:[#allocation3 + $0x31] sm:$0xff]
        %v2797 = vld [vmem:[#allocation3 + $0x39] sm:$0xff]
        %v2798 = vld [vmem:[#allocation3 + $0x49] sm:$0xff]
        %v2799 = vld [vmem:[#allocation3 + $0x51] sm:$0xff]
        %v2800 = vld [vmem:[#allocation3 + $0x61] sm:$0xff]
        %v2801 = vld [vmem:[#allocation3 + $0x69] sm:$0xff]
        %v2802 = vld [vmem:[#allocation3 + $0x79] sm:$0xff]
        %v2803 = vld [vmem:[#allocation3 + $0x81] sm:$0xff]
        %v2804 = vld [vmem:[#allocation3 + $0x91] sm:$0xff]
        %v2805 = vld [vmem:[#allocation3 + $0x99] sm:$0xff]
        %v2806 = vld [vmem:[#allocation3 + $0xa9] sm:$0xff]
        %v2807 = vld [vmem:[#allocation3 + $0xb1] sm:$0xff]
        %v2808 = vld [vmem:[#allocation3 + $0xc1] sm:$0xff]
        %v2809 = vld [vmem:[#allocation3 + $0xc9] sm:$0xff]
        %v2810 = vld [vmem:[#allocation3 + $0xd9] sm:$0xff]
        %v2811 = vld [vmem:[#allocation3 + $0xe1] sm:$0xff]
        %v2812 = vld [vmem:[#allocation3 + $0xf1] sm:$0xff]
        %v2813 = vld [vmem:[#allocation3 + $0xf9] sm:$0xff]
        %v2814 = vld [vmem:[#allocation3 + $0x109] sm:$0xff]
        %v2815 = vld [vmem:[#allocation3 + $0x111] sm:$0xff]
        %v2816 = vld [vmem:[#allocation3 + $0x121] sm:$0xff]
        %v2817 = vld [vmem:[#allocation3 + $0x129] sm:$0xff]
        %v2818 = vld [vmem:[#allocation3 + $0x139] sm:$0xff]
        %v2819 = vld [vmem:[#allocation3 + $0x141] sm:$0xff]
        %v2820 = vld [vmem:[#allocation3 + $0x151] sm:$0xff]
        %v2821 = vld [vmem:[#allocation3 + $0x159] sm:$0xff]
        %v2822 = vld [vmem:[#allocation3 + $0x169] sm:$0xff]
        %v2823 = vld [vmem:[#allocation3 + $0x171] sm:$0xff]
        %v2824 = vld [vmem:[#allocation3 + $0x2] sm:$0xff]
        %v2825 = vld [vmem:[#allocation3 + $0xa] sm:$0xff]
        %v2826 = vld [vmem:[#allocation3 + $0x1a] sm:$0xff]
        %v2827 = vld [vmem:[#allocation3 + $0x22] sm:$0xff]
        %v2828 = vld [vmem:[#allocation3 + $0x32] sm:$0xff]
        %v2829 = vld [vmem:[#allocation3 + $0x3a] sm:$0xff]
        %v2830 = vld [vmem:[#allocation3 + $0x4a] sm:$0xff]
        %v2831 = vld [vmem:[#allocation3 + $0x52] sm:$0xff]
        %v2832 = vld [vmem:[#allocation3 + $0x62] sm:$0xff]
        %v2833 = vld [vmem:[#allocation3 + $0x6a] sm:$0xff]
        %v2834 = vld [vmem:[#allocation3 + $0x7a] sm:$0xff]
        %v2835 = vld [vmem:[#allocation3 + $0x82] sm:$0xff]
        %v2836 = vld [vmem:[#allocation3 + $0x92] sm:$0xff]
        %v2837 = vld [vmem:[#allocation3 + $0x9a] sm:$0xff]
        %v2838 = vld [vmem:[#allocation3 + $0xaa] sm:$0xff]
        %v2839 = vld [vmem:[#allocation3 + $0xb2] sm:$0xff]
        %v2840 = vld [vmem:[#allocation3 + $0xc2] sm:$0xff]
        %v2841 = vld [vmem:[#allocation3 + $0xca] sm:$0xff]
        %v2842 = vld [vmem:[#allocation3 + $0xda] sm:$0xff]
        %v2843 = vld [vmem:[#allocation3 + $0xe2] sm:$0xff]
        %v2844 = vld [vmem:[#allocation3 + $0xf2] sm:$0xff]
        %v2845 = vld [vmem:[#allocation3 + $0xfa] sm:$0xff]
        %v2846 = vld [vmem:[#allocation3 + $0x10a] sm:$0xff]
        %v2847 = vld [vmem:[#allocation3 + $0x112] sm:$0xff]
        %v2848 = vld [vmem:[#allocation3 + $0x122] sm:$0xff]
        %v2849 = vld [vmem:[#allocation3 + $0x12a] sm:$0xff]
        %v2850 = vld [vmem:[#allocation3 + $0x13a] sm:$0xff]
        %v2851 = vld [vmem:[#allocation3 + $0x142] sm:$0xff]
        %v2852 = vld [vmem:[#allocation3 + $0x152] sm:$0xff]
        %v2853 = vld [vmem:[#allocation3 + $0x15a] sm:$0xff]
        %v2854 = vld [vmem:[#allocation3 + $0x16a] sm:$0xff]
        %v2855 = vld [vmem:[#allocation3 + $0x172] sm:$0xff]
        %v2856 = vld [vmem:[%s2727] sm:$0xff]
        %v2857 = vld [vmem:[%s2727 + $0x8] sm:$0xff]
        %v2858 = vld [vmem:[%s2727 + $0x18] sm:$0xff]
        %v2859 = vld [vmem:[%s2727 + $0x20] sm:$0xff]
        %v2860 = vld [vmem:[%s2727 + $0x30] sm:$0xff]
        %v2861 = vld [vmem:[%s2727 + $0x38] sm:$0xff]
        %v2862 = vld [vmem:[%s2727 + $0x48] sm:$0xff]
        %v2863 = vld [vmem:[%s2727 + $0x50] sm:$0xff]
        %v2864 = vld [vmem:[%s2727 + $0x60] sm:$0xff]
        %v2865 = vld [vmem:[%s2727 + $0x68] sm:$0xff]
        %v2866 = vld [vmem:[%s2727 + $0x78] sm:$0xff]
        %v2867 = vld [vmem:[%s2727 + $0x80] sm:$0xff]
        %v2868 = vld [vmem:[%s2727 + $0x90] sm:$0xff]
        %v2869 = vld [vmem:[%s2727 + $0x98] sm:$0xff]
        %v2870 = vld [vmem:[%s2727 + $0xa8] sm:$0xff]
        %v2871 = vld [vmem:[%s2727 + $0xb0] sm:$0xff]
        %v2872 = vld [vmem:[%s2727 + $0xc0] sm:$0xff]
        %v2873 = vld [vmem:[%s2727 + $0xc8] sm:$0xff]
        %v2874 = vld [vmem:[%s2727 + $0xd8] sm:$0xff]
        %v2875 = vld [vmem:[%s2727 + $0xe0] sm:$0xff]
        %v2876 = vld [vmem:[%s2727 + $0xf0] sm:$0xff]
        %v2877 = vld [vmem:[%s2727 + $0xf8] sm:$0xff]
        %v2878 = vld [vmem:[%s2727 + $0x108] sm:$0xff]
        %v2879 = vld [vmem:[%s2727 + $0x110] sm:$0xff]
        %v2880 = vld [vmem:[%s2727 + $0x120] sm:$0xff]
        %v2881 = vld [vmem:[%s2727 + $0x128] sm:$0xff]
        %v2882 = vld [vmem:[%s2727 + $0x138] sm:$0xff]
        %v2883 = vld [vmem:[%s2727 + $0x140] sm:$0xff]
        %v2884 = vld [vmem:[%s2727 + $0x150] sm:$0xff]
        %v2885 = vld [vmem:[%s2727 + $0x158] sm:$0xff]
        %v2886 = vld [vmem:[%s2727 + $0x168] sm:$0xff]
        %v2887 = vld [vmem:[%s2727 + $0x170] sm:$0xff]
        %v2888 = vld [vmem:[%s2727 + $0x1] sm:$0xff]
        %v2889 = vld [vmem:[%s2727 + $0x9] sm:$0xff]
        %v2890 = vld [vmem:[%s2727 + $0x19] sm:$0xff]
        %v2891 = vld [vmem:[%s2727 + $0x21] sm:$0xff]
        %v2892 = vld [vmem:[%s2727 + $0x31] sm:$0xff]
        %v2893 = vld [vmem:[%s2727 + $0x39] sm:$0xff]
        %v2894 = vld [vmem:[%s2727 + $0x49] sm:$0xff]
        %v2895 = vld [vmem:[%s2727 + $0x51] sm:$0xff]
        %v2896 = vld [vmem:[%s2727 + $0x61] sm:$0xff]
        %v2897 = vld [vmem:[%s2727 + $0x69] sm:$0xff]
        %v2898 = vld [vmem:[%s2727 + $0x79] sm:$0xff]
        %v2899 = vld [vmem:[%s2727 + $0x81] sm:$0xff]
        %v2900 = vld [vmem:[%s2727 + $0x91] sm:$0xff]
        %v2901 = vld [vmem:[%s2727 + $0x99] sm:$0xff]
        %v2902 = vld [vmem:[%s2727 + $0xa9] sm:$0xff]
        %v2903 = vld [vmem:[%s2727 + $0xb1] sm:$0xff]
        %v2904 = vld [vmem:[%s2727 + $0xc1] sm:$0xff]
        %v2905 = vld [vmem:[%s2727 + $0xc9] sm:$0xff]
        %v2906 = vld [vmem:[%s2727 + $0xd9] sm:$0xff]
        %v2907 = vld [vmem:[%s2727 + $0xe1] sm:$0xff]
        %v2908 = vld [vmem:[%s2727 + $0xf1] sm:$0xff]
        %v2909 = vld [vmem:[%s2727 + $0xf9] sm:$0xff]
        %v2910 = vld [vmem:[%s2727 + $0x109] sm:$0xff]
        %v2911 = vld [vmem:[%s2727 + $0x111] sm:$0xff]
        %v2912 = vld [vmem:[%s2727 + $0x121] sm:$0xff]
        %v2913 = vld [vmem:[%s2727 + $0x129] sm:$0xff]
        %v2914 = vld [vmem:[%s2727 + $0x139] sm:$0xff]
        %v2915 = vld [vmem:[%s2727 + $0x141] sm:$0xff]
        %v2916 = vld [vmem:[%s2727 + $0x151] sm:$0xff]
        %v2917 = vld [vmem:[%s2727 + $0x159] sm:$0xff]
        %v2918 = vld [vmem:[%s2727 + $0x169] sm:$0xff]
        %v2919 = vld [vmem:[%s2727 + $0x171] sm:$0xff]
        %v2920 = vld [vmem:[%s2727 + $0x2] sm:$0xff]
        %v2921 = vld [vmem:[%s2727 + $0xa] sm:$0xff]
        %v2922 = vld [vmem:[%s2727 + $0x1a] sm:$0xff]
        %v2923 = vld [vmem:[%s2727 + $0x22] sm:$0xff]
        %v2924 = vld [vmem:[%s2727 + $0x32] sm:$0xff]
        %v2925 = vld [vmem:[%s2727 + $0x3a] sm:$0xff]
        %v2926 = vld [vmem:[%s2727 + $0x4a] sm:$0xff]
        %v2927 = vld [vmem:[%s2727 + $0x52] sm:$0xff]
        %v2928 = vld [vmem:[%s2727 + $0x62] sm:$0xff]
        %v2929 = vld [vmem:[%s2727 + $0x6a] sm:$0xff]
        %v2930 = vld [vmem:[%s2727 + $0x7a] sm:$0xff]
        %v2931 = vld [vmem:[%s2727 + $0x82] sm:$0xff]
        %v2932 = vld [vmem:[%s2727 + $0x92] sm:$0xff]
        %v2933 = vld [vmem:[%s2727 + $0x9a] sm:$0xff]
        %v2934 = vld [vmem:[%s2727 + $0xaa] sm:$0xff]
        %v2935 = vld [vmem:[%s2727 + $0xb2] sm:$0xff]
        %v2936 = vld [vmem:[%s2727 + $0xc2] sm:$0xff]
        %v2937 = vld [vmem:[%s2727 + $0xca] sm:$0xff]
        %v2938 = vld [vmem:[%s2727 + $0xda] sm:$0xff]
        %v2939 = vld [vmem:[%s2727 + $0xe2] sm:$0xff]
        %v2940 = vld [vmem:[%s2727 + $0xf2] sm:$0xff]
        %v2941 = vld [vmem:[%s2727 + $0xfa] sm:$0xff]
        %v2942 = vld [vmem:[%s2727 + $0x10a] sm:$0xff]
        %v2943 = vld [vmem:[%s2727 + $0x112] sm:$0xff]
        %v2944 = vld [vmem:[%s2727 + $0x122] sm:$0xff]
        %v2945 = vld [vmem:[%s2727 + $0x12a] sm:$0xff]
        %v2946 = vld [vmem:[%s2727 + $0x13a] sm:$0xff]
        %v2947 = vld [vmem:[%s2727 + $0x142] sm:$0xff]
        %v2948 = vld [vmem:[%s2727 + $0x152] sm:$0xff]
        %v2949 = vld [vmem:[%s2727 + $0x15a] sm:$0xff]
        %v2950 = vld [vmem:[%s2727 + $0x16a] sm:$0xff]
        %v2951 = vld [vmem:[%s2727 + $0x172] sm:$0xff]
        %s2952 = scalar_lea.vmem [#allocation3], 48
        %v2953 = vld [vmem:[%s2952] sm:$0xff]
        %v2954 = vld [vmem:[%s2952 + $0x8] sm:$0xff]
        %v2955 = vld [vmem:[%s2952 + $0x18] sm:$0xff]
        %v2956 = vld [vmem:[%s2952 + $0x20] sm:$0xff]
        %v2957 = vld [vmem:[%s2952 + $0x30] sm:$0xff]
        %v2958 = vld [vmem:[%s2952 + $0x38] sm:$0xff]
        %v2959 = vld [vmem:[%s2952 + $0x48] sm:$0xff]
        %v2960 = vld [vmem:[%s2952 + $0x50] sm:$0xff]
        %v2961 = vld [vmem:[%s2952 + $0x60] sm:$0xff]
        %v2962 = vld [vmem:[%s2952 + $0x68] sm:$0xff]
        %v2963 = vld [vmem:[%s2952 + $0x78] sm:$0xff]
        %v2964 = vld [vmem:[%s2952 + $0x80] sm:$0xff]
        %v2965 = vld [vmem:[%s2952 + $0x90] sm:$0xff]
        %v2966 = vld [vmem:[%s2952 + $0x98] sm:$0xff]
        %v2967 = vld [vmem:[%s2952 + $0xa8] sm:$0xff]
        %v2968 = vld [vmem:[%s2952 + $0xb0] sm:$0xff]
        %v2969 = vld [vmem:[%s2952 + $0xc0] sm:$0xff]
        %v2970 = vld [vmem:[%s2952 + $0xc8] sm:$0xff]
        %v2971 = vld [vmem:[%s2952 + $0xd8] sm:$0xff]
        %v2972 = vld [vmem:[%s2952 + $0xe0] sm:$0xff]
        %v2973 = vld [vmem:[%s2952 + $0xf0] sm:$0xff]
        %v2974 = vld [vmem:[%s2952 + $0xf8] sm:$0xff]
        %v2975 = vld [vmem:[%s2952 + $0x108] sm:$0xff]
        %v2976 = vld [vmem:[%s2952 + $0x110] sm:$0xff]
        %v2977 = vld [vmem:[%s2952 + $0x120] sm:$0xff]
        %v2978 = vld [vmem:[%s2952 + $0x128] sm:$0xff]
        %v2979 = vld [vmem:[%s2952 + $0x138] sm:$0xff]
        %v2980 = vld [vmem:[%s2952 + $0x140] sm:$0xff]
        %v2981 = vld [vmem:[%s2952 + $0x150] sm:$0xff]
        %v2982 = vld [vmem:[%s2952 + $0x158] sm:$0xff]
        %v2983 = vld [vmem:[%s2952 + $0x168] sm:$0xff]
        %v2984 = vld [vmem:[%s2952 + $0x170] sm:$0xff]
        %v2985 = vld [vmem:[%s2952 + $0x1] sm:$0xff]
        %v2986 = vld [vmem:[%s2952 + $0x9] sm:$0xff]
        %v2987 = vld [vmem:[%s2952 + $0x19] sm:$0xff]
        %v2988 = vld [vmem:[%s2952 + $0x21] sm:$0xff]
        %v2989 = vld [vmem:[%s2952 + $0x31] sm:$0xff]
        %v2990 = vld [vmem:[%s2952 + $0x39] sm:$0xff]
        %v2991 = vld [vmem:[%s2952 + $0x49] sm:$0xff]
        %v2992 = vld [vmem:[%s2952 + $0x51] sm:$0xff]
        %v2993 = vld [vmem:[%s2952 + $0x61] sm:$0xff]
        %v2994 = vld [vmem:[%s2952 + $0x69] sm:$0xff]
        %v2995 = vld [vmem:[%s2952 + $0x79] sm:$0xff]
        %v2996 = vld [vmem:[%s2952 + $0x81] sm:$0xff]
        %v2997 = vld [vmem:[%s2952 + $0x91] sm:$0xff]
        %v2998 = vld [vmem:[%s2952 + $0x99] sm:$0xff]
        %v2999 = vld [vmem:[%s2952 + $0xa9] sm:$0xff]
        %v3000 = vld [vmem:[%s2952 + $0xb1] sm:$0xff]
        %v3001 = vld [vmem:[%s2952 + $0xc1] sm:$0xff]
        %v3002 = vld [vmem:[%s2952 + $0xc9] sm:$0xff]
        %v3003 = vld [vmem:[%s2952 + $0xd9] sm:$0xff]
        %v3004 = vld [vmem:[%s2952 + $0xe1] sm:$0xff]
        %v3005 = vld [vmem:[%s2952 + $0xf1] sm:$0xff]
        %v3006 = vld [vmem:[%s2952 + $0xf9] sm:$0xff]
        %v3007 = vld [vmem:[%s2952 + $0x109] sm:$0xff]
        %v3008 = vld [vmem:[%s2952 + $0x111] sm:$0xff]
        %v3009 = vld [vmem:[%s2952 + $0x121] sm:$0xff]
        %v3010 = vld [vmem:[%s2952 + $0x129] sm:$0xff]
        %v3011 = vld [vmem:[%s2952 + $0x139] sm:$0xff]
        %v3012 = vld [vmem:[%s2952 + $0x141] sm:$0xff]
        %v3013 = vld [vmem:[%s2952 + $0x151] sm:$0xff]
        %v3014 = vld [vmem:[%s2952 + $0x159] sm:$0xff]
        %v3015 = vld [vmem:[%s2952 + $0x169] sm:$0xff]
        %v3016 = vld [vmem:[%s2952 + $0x171] sm:$0xff]
        %v3017 = vld [vmem:[%s2952 + $0x2] sm:$0xff]
        %v3018 = vld [vmem:[%s2952 + $0xa] sm:$0xff]
        %v3019 = vld [vmem:[%s2952 + $0x1a] sm:$0xff]
        %v3020 = vld [vmem:[%s2952 + $0x22] sm:$0xff]
        %v3021 = vld [vmem:[%s2952 + $0x32] sm:$0xff]
        %v3022 = vld [vmem:[%s2952 + $0x3a] sm:$0xff]
        %v3023 = vld [vmem:[%s2952 + $0x4a] sm:$0xff]
        %v3024 = vld [vmem:[%s2952 + $0x52] sm:$0xff]
        %v3025 = vld [vmem:[%s2952 + $0x62] sm:$0xff]
        %v3026 = vld [vmem:[%s2952 + $0x6a] sm:$0xff]
        %v3027 = vld [vmem:[%s2952 + $0x7a] sm:$0xff]
        %v3028 = vld [vmem:[%s2952 + $0x82] sm:$0xff]
        %v3029 = vld [vmem:[%s2952 + $0x92] sm:$0xff]
        %v3030 = vld [vmem:[%s2952 + $0x9a] sm:$0xff]
        %v3031 = vld [vmem:[%s2952 + $0xaa] sm:$0xff]
        %v3032 = vld [vmem:[%s2952 + $0xb2] sm:$0xff]
        %v3033 = vld [vmem:[%s2952 + $0xc2] sm:$0xff]
        %v3034 = vld [vmem:[%s2952 + $0xca] sm:$0xff]
        %v3035 = vld [vmem:[%s2952 + $0xda] sm:$0xff]
        %v3036 = vld [vmem:[%s2952 + $0xe2] sm:$0xff]
        %v3037 = vld [vmem:[%s2952 + $0xf2] sm:$0xff]
        %v3038 = vld [vmem:[%s2952 + $0xfa] sm:$0xff]
        %v3039 = vld [vmem:[%s2952 + $0x10a] sm:$0xff]
        %v3040 = vld [vmem:[%s2952 + $0x112] sm:$0xff]
        %v3041 = vld [vmem:[%s2952 + $0x122] sm:$0xff]
        %v3042 = vld [vmem:[%s2952 + $0x12a] sm:$0xff]
        %v3043 = vld [vmem:[%s2952 + $0x13a] sm:$0xff]
        %v3044 = vld [vmem:[%s2952 + $0x142] sm:$0xff]
        %v3045 = vld [vmem:[%s2952 + $0x152] sm:$0xff]
        %v3046 = vld [vmem:[%s2952 + $0x15a] sm:$0xff]
        %v3047 = vld [vmem:[%s2952 + $0x16a] sm:$0xff]
        %v3048 = vld [vmem:[%s2952 + $0x172] sm:$0xff]
        %3081 = vrot.lane.b32.xlu0 %v2792, 32
        %v3082 = vpop.permute.xlu0 %3081
        %3083 = vrot.lane.b32.xlu0 %v2793, 32
        %v3084 = vpop.permute.xlu0 %3083
        %3085 = vrot.lane.b32.xlu0 %v2794, 32
        %v3086 = vpop.permute.xlu0 %3085
        %3087 = vrot.lane.b32.xlu0 %v2795, 32
        %v3088 = vpop.permute.xlu0 %3087
        %3089 = vrot.lane.b32.xlu0 %v2796, 32
        %v3090 = vpop.permute.xlu0 %3089
        %3091 = vrot.lane.b32.xlu0 %v2797, 32
        %v3092 = vpop.permute.xlu0 %3091
        %3093 = vrot.lane.b32.xlu0 %v2798, 32
        %v3094 = vpop.permute.xlu0 %3093
        %3095 = vrot.lane.b32.xlu0 %v2799, 32
        %v3096 = vpop.permute.xlu0 %3095
        %3097 = vrot.lane.b32.xlu0 %v2800, 32
        %v3098 = vpop.permute.xlu0 %3097
        %3099 = vrot.lane.b32.xlu0 %v2801, 32
        %v3100 = vpop.permute.xlu0 %3099
        %3101 = vrot.lane.b32.xlu0 %v2802, 32
        %v3102 = vpop.permute.xlu0 %3101
        %3103 = vrot.lane.b32.xlu0 %v2803, 32
        %v3104 = vpop.permute.xlu0 %3103
        %3105 = vrot.lane.b32.xlu0 %v2804, 32
        %v3106 = vpop.permute.xlu0 %3105
        %3107 = vrot.lane.b32.xlu0 %v2805, 32
        %v3108 = vpop.permute.xlu0 %3107
        %3109 = vrot.lane.b32.xlu0 %v2806, 32
        %v3110 = vpop.permute.xlu0 %3109
        %3111 = vrot.lane.b32.xlu0 %v2807, 32
        %v3112 = vpop.permute.xlu0 %3111
        %3113 = vrot.lane.b32.xlu0 %v2808, 32
        %v3114 = vpop.permute.xlu0 %3113
        %3115 = vrot.lane.b32.xlu0 %v2809, 32
        %v3116 = vpop.permute.xlu0 %3115
        %3117 = vrot.lane.b32.xlu0 %v2810, 32
        %v3118 = vpop.permute.xlu0 %3117
        %3119 = vrot.lane.b32.xlu0 %v2811, 32
        %v3120 = vpop.permute.xlu0 %3119
        %3121 = vrot.lane.b32.xlu0 %v2812, 32
        %v3122 = vpop.permute.xlu0 %3121
        %3123 = vrot.lane.b32.xlu0 %v2813, 32
        %v3124 = vpop.permute.xlu0 %3123
        %3125 = vrot.lane.b32.xlu0 %v2814, 32
        %v3126 = vpop.permute.xlu0 %3125
        %3127 = vrot.lane.b32.xlu0 %v2815, 32
        %v3128 = vpop.permute.xlu0 %3127
        %3129 = vrot.lane.b32.xlu0 %v2816, 32
        %v3130 = vpop.permute.xlu0 %3129
        %3131 = vrot.lane.b32.xlu0 %v2817, 32
        %v3132 = vpop.permute.xlu0 %3131
        %3133 = vrot.lane.b32.xlu0 %v2818, 32
        %v3134 = vpop.permute.xlu0 %3133
        %3135 = vrot.lane.b32.xlu0 %v2819, 32
        %v3136 = vpop.permute.xlu0 %3135
        %3137 = vrot.lane.b32.xlu0 %v2820, 32
        %v3138 = vpop.permute.xlu0 %3137
        %3139 = vrot.lane.b32.xlu0 %v2821, 32
        %v3140 = vpop.permute.xlu0 %3139
        %3141 = vrot.lane.b32.xlu0 %v2822, 32
        %v3142 = vpop.permute.xlu0 %3141
        %3143 = vrot.lane.b32.xlu0 %v2823, 32
        %v3144 = vpop.permute.xlu0 %3143
        %3209 = vrot.lane.b32.xlu0 %v2824, 64
        %v3210 = vpop.permute.xlu0 %3209
        %3211 = vrot.lane.b32.xlu0 %v2825, 64
        %v3212 = vpop.permute.xlu0 %3211
        %3213 = vrot.lane.b32.xlu0 %v2826, 64
        %v3214 = vpop.permute.xlu0 %3213
        %3215 = vrot.lane.b32.xlu0 %v2827, 64
        %v3216 = vpop.permute.xlu0 %3215
        %3217 = vrot.lane.b32.xlu0 %v2828, 64
        %v3218 = vpop.permute.xlu0 %3217
        %3219 = vrot.lane.b32.xlu0 %v2829, 64
        %v3220 = vpop.permute.xlu0 %3219
        %3221 = vrot.lane.b32.xlu0 %v2830, 64
        %v3222 = vpop.permute.xlu0 %3221
        %3223 = vrot.lane.b32.xlu0 %v2831, 64
        %v3224 = vpop.permute.xlu0 %3223
        %3225 = vrot.lane.b32.xlu0 %v2832, 64
        %v3226 = vpop.permute.xlu0 %3225
        %3227 = vrot.lane.b32.xlu0 %v2833, 64
        %v3228 = vpop.permute.xlu0 %3227
        %3229 = vrot.lane.b32.xlu0 %v2834, 64
        %v3230 = vpop.permute.xlu0 %3229
        %3231 = vrot.lane.b32.xlu0 %v2835, 64
        %v3232 = vpop.permute.xlu0 %3231
        %3233 = vrot.lane.b32.xlu0 %v2836, 64
        %v3234 = vpop.permute.xlu0 %3233
        %3235 = vrot.lane.b32.xlu0 %v2837, 64
        %v3236 = vpop.permute.xlu0 %3235
        %3237 = vrot.lane.b32.xlu0 %v2838, 64
        %v3238 = vpop.permute.xlu0 %3237
        %3239 = vrot.lane.b32.xlu0 %v2839, 64
        %v3240 = vpop.permute.xlu0 %3239
        %3241 = vrot.lane.b32.xlu0 %v2840, 64
        %v3242 = vpop.permute.xlu0 %3241
        %3243 = vrot.lane.b32.xlu0 %v2841, 64
        %v3244 = vpop.permute.xlu0 %3243
        %3245 = vrot.lane.b32.xlu0 %v2842, 64
        %v3246 = vpop.permute.xlu0 %3245
        %3247 = vrot.lane.b32.xlu0 %v2843, 64
        %v3248 = vpop.permute.xlu0 %3247
        %3249 = vrot.lane.b32.xlu0 %v2844, 64
        %v3250 = vpop.permute.xlu0 %3249
        %3251 = vrot.lane.b32.xlu0 %v2845, 64
        %v3252 = vpop.permute.xlu0 %3251
        %3253 = vrot.lane.b32.xlu0 %v2846, 64
        %v3254 = vpop.permute.xlu0 %3253
        %3255 = vrot.lane.b32.xlu0 %v2847, 64
        %v3256 = vpop.permute.xlu0 %3255
        %3257 = vrot.lane.b32.xlu0 %v2848, 64
        %v3258 = vpop.permute.xlu0 %3257
        %3259 = vrot.lane.b32.xlu0 %v2849, 64
        %v3260 = vpop.permute.xlu0 %3259
        %3261 = vrot.lane.b32.xlu0 %v2850, 64
        %v3262 = vpop.permute.xlu0 %3261
        %3263 = vrot.lane.b32.xlu0 %v2851, 64
        %v3264 = vpop.permute.xlu0 %3263
        %3265 = vrot.lane.b32.xlu0 %v2852, 64
        %v3266 = vpop.permute.xlu0 %3265
        %3267 = vrot.lane.b32.xlu0 %v2853, 64
        %v3268 = vpop.permute.xlu0 %3267
        %3269 = vrot.lane.b32.xlu0 %v2854, 64
        %v3270 = vpop.permute.xlu0 %3269
        %3271 = vrot.lane.b32.xlu0 %v2855, 64
        %v3272 = vpop.permute.xlu0 %3271
        %3337 = vrot.lane.b32.xlu0 %v2856, 96
        %v3338 = vpop.permute.xlu0 %3337
        %3339 = vrot.lane.b32.xlu0 %v2857, 96
        %v3340 = vpop.permute.xlu0 %3339
        %3341 = vrot.lane.b32.xlu0 %v2858, 96
        %v3342 = vpop.permute.xlu0 %3341
        %3343 = vrot.lane.b32.xlu0 %v2859, 96
        %v3344 = vpop.permute.xlu0 %3343
        %3345 = vrot.lane.b32.xlu0 %v2860, 96
        %v3346 = vpop.permute.xlu0 %3345
        %3347 = vrot.lane.b32.xlu0 %v2861, 96
        %v3348 = vpop.permute.xlu0 %3347
        %3349 = vrot.lane.b32.xlu0 %v2862, 96
        %v3350 = vpop.permute.xlu0 %3349
        %3351 = vrot.lane.b32.xlu0 %v2863, 96
        %v3352 = vpop.permute.xlu0 %3351
        %3353 = vrot.lane.b32.xlu0 %v2864, 96
        %v3354 = vpop.permute.xlu0 %3353
        %3355 = vrot.lane.b32.xlu0 %v2865, 96
        %v3356 = vpop.permute.xlu0 %3355
        %3357 = vrot.lane.b32.xlu0 %v2866, 96
        %v3358 = vpop.permute.xlu0 %3357
        %3359 = vrot.lane.b32.xlu0 %v2867, 96
        %v3360 = vpop.permute.xlu0 %3359
        %3361 = vrot.lane.b32.xlu0 %v2868, 96
        %v3362 = vpop.permute.xlu0 %3361
        %3363 = vrot.lane.b32.xlu0 %v2869, 96
        %v3364 = vpop.permute.xlu0 %3363
        %3365 = vrot.lane.b32.xlu0 %v2870, 96
        %v3366 = vpop.permute.xlu0 %3365
        %3367 = vrot.lane.b32.xlu0 %v2871, 96
        %v3368 = vpop.permute.xlu0 %3367
        %3369 = vrot.lane.b32.xlu0 %v2872, 96
        %v3370 = vpop.permute.xlu0 %3369
        %3371 = vrot.lane.b32.xlu0 %v2873, 96
        %v3372 = vpop.permute.xlu0 %3371
        %3373 = vrot.lane.b32.xlu0 %v2874, 96
        %v3374 = vpop.permute.xlu0 %3373
        %3375 = vrot.lane.b32.xlu0 %v2875, 96
        %v3376 = vpop.permute.xlu0 %3375
        %3377 = vrot.lane.b32.xlu0 %v2876, 96
        %v3378 = vpop.permute.xlu0 %3377
        %3379 = vrot.lane.b32.xlu0 %v2877, 96
        %v3380 = vpop.permute.xlu0 %3379
        %3381 = vrot.lane.b32.xlu0 %v2878, 96
        %v3382 = vpop.permute.xlu0 %3381
        %3383 = vrot.lane.b32.xlu0 %v2879, 96
        %v3384 = vpop.permute.xlu0 %3383
        %3385 = vrot.lane.b32.xlu0 %v2880, 96
        %v3386 = vpop.permute.xlu0 %3385
        %3387 = vrot.lane.b32.xlu0 %v2881, 96
        %v3388 = vpop.permute.xlu0 %3387
        %3389 = vrot.lane.b32.xlu0 %v2882, 96
        %v3390 = vpop.permute.xlu0 %3389
        %3391 = vrot.lane.b32.xlu0 %v2883, 96
        %v3392 = vpop.permute.xlu0 %3391
        %3393 = vrot.lane.b32.xlu0 %v2884, 96
        %v3394 = vpop.permute.xlu0 %3393
        %3395 = vrot.lane.b32.xlu0 %v2885, 96
        %v3396 = vpop.permute.xlu0 %3395
        %3397 = vrot.lane.b32.xlu0 %v2886, 96
        %v3398 = vpop.permute.xlu0 %3397
        %3399 = vrot.lane.b32.xlu0 %v2887, 96
        %v3400 = vpop.permute.xlu0 %3399
        %3465 = vrot.lane.b32.xlu0 %v2920, 32
        %v3466 = vpop.permute.xlu0 %3465
        %3467 = vrot.lane.b32.xlu0 %v2921, 32
        %v3468 = vpop.permute.xlu0 %3467
        %3469 = vrot.lane.b32.xlu0 %v2922, 32
        %v3470 = vpop.permute.xlu0 %3469
        %3471 = vrot.lane.b32.xlu0 %v2923, 32
        %v3472 = vpop.permute.xlu0 %3471
        %3473 = vrot.lane.b32.xlu0 %v2924, 32
        %v3474 = vpop.permute.xlu0 %3473
        %3475 = vrot.lane.b32.xlu0 %v2925, 32
        %v3476 = vpop.permute.xlu0 %3475
        %3477 = vrot.lane.b32.xlu0 %v2926, 32
        %v3478 = vpop.permute.xlu0 %3477
        %3479 = vrot.lane.b32.xlu0 %v2927, 32
        %v3480 = vpop.permute.xlu0 %3479
        %3481 = vrot.lane.b32.xlu0 %v2928, 32
        %v3482 = vpop.permute.xlu0 %3481
        %3483 = vrot.lane.b32.xlu0 %v2929, 32
        %v3484 = vpop.permute.xlu0 %3483
        %3485 = vrot.lane.b32.xlu0 %v2930, 32
        %v3486 = vpop.permute.xlu0 %3485
        %3487 = vrot.lane.b32.xlu0 %v2931, 32
        %v3488 = vpop.permute.xlu0 %3487
        %3489 = vrot.lane.b32.xlu0 %v2932, 32
        %v3490 = vpop.permute.xlu0 %3489
        %3491 = vrot.lane.b32.xlu0 %v2933, 32
        %v3492 = vpop.permute.xlu0 %3491
        %3493 = vrot.lane.b32.xlu0 %v2934, 32
        %v3494 = vpop.permute.xlu0 %3493
        %3495 = vrot.lane.b32.xlu0 %v2935, 32
        %v3496 = vpop.permute.xlu0 %3495
        %3497 = vrot.lane.b32.xlu0 %v2936, 32
        %v3498 = vpop.permute.xlu0 %3497
        %3499 = vrot.lane.b32.xlu0 %v2937, 32
        %v3500 = vpop.permute.xlu0 %3499
        %3501 = vrot.lane.b32.xlu0 %v2938, 32
        %v3502 = vpop.permute.xlu0 %3501
        %3503 = vrot.lane.b32.xlu0 %v2939, 32
        %v3504 = vpop.permute.xlu0 %3503
        %3505 = vrot.lane.b32.xlu0 %v2940, 32
        %v3506 = vpop.permute.xlu0 %3505
        %3507 = vrot.lane.b32.xlu0 %v2941, 32
        %v3508 = vpop.permute.xlu0 %3507
        %3509 = vrot.lane.b32.xlu0 %v2942, 32
        %v3510 = vpop.permute.xlu0 %3509
        %3511 = vrot.lane.b32.xlu0 %v2943, 32
        %v3512 = vpop.permute.xlu0 %3511
        %3513 = vrot.lane.b32.xlu0 %v2944, 32
        %v3514 = vpop.permute.xlu0 %3513
        %3515 = vrot.lane.b32.xlu0 %v2945, 32
        %v3516 = vpop.permute.xlu0 %3515
        %3517 = vrot.lane.b32.xlu0 %v2946, 32
        %v3518 = vpop.permute.xlu0 %3517
        %3519 = vrot.lane.b32.xlu0 %v2947, 32
        %v3520 = vpop.permute.xlu0 %3519
        %3521 = vrot.lane.b32.xlu0 %v2948, 32
        %v3522 = vpop.permute.xlu0 %3521
        %3523 = vrot.lane.b32.xlu0 %v2949, 32
        %v3524 = vpop.permute.xlu0 %3523
        %3525 = vrot.lane.b32.xlu0 %v2950, 32
        %v3526 = vpop.permute.xlu0 %3525
        %3527 = vrot.lane.b32.xlu0 %v2951, 32
        %v3528 = vpop.permute.xlu0 %3527
        %3593 = vrot.lane.b32.xlu0 %v2953, 64
        %v3594 = vpop.permute.xlu0 %3593
        %3595 = vrot.lane.b32.xlu0 %v2954, 64
        %v3596 = vpop.permute.xlu0 %3595
        %3597 = vrot.lane.b32.xlu0 %v2955, 64
        %v3598 = vpop.permute.xlu0 %3597
        %3599 = vrot.lane.b32.xlu0 %v2956, 64
        %v3600 = vpop.permute.xlu0 %3599
        %3601 = vrot.lane.b32.xlu0 %v2957, 64
        %v3602 = vpop.permute.xlu0 %3601
        %3603 = vrot.lane.b32.xlu0 %v2958, 64
        %v3604 = vpop.permute.xlu0 %3603
        %3605 = vrot.lane.b32.xlu0 %v2959, 64
        %v3606 = vpop.permute.xlu0 %3605
        %3607 = vrot.lane.b32.xlu0 %v2960, 64
        %v3608 = vpop.permute.xlu0 %3607
        %3609 = vrot.lane.b32.xlu0 %v2961, 64
        %v3610 = vpop.permute.xlu0 %3609
        %3611 = vrot.lane.b32.xlu0 %v2962, 64
        %v3612 = vpop.permute.xlu0 %3611
        %3613 = vrot.lane.b32.xlu0 %v2963, 64
        %v3614 = vpop.permute.xlu0 %3613
        %3615 = vrot.lane.b32.xlu0 %v2964, 64
        %v3616 = vpop.permute.xlu0 %3615
        %3617 = vrot.lane.b32.xlu0 %v2965, 64
        %v3618 = vpop.permute.xlu0 %3617
        %3619 = vrot.lane.b32.xlu0 %v2966, 64
        %v3620 = vpop.permute.xlu0 %3619
        %3621 = vrot.lane.b32.xlu0 %v2967, 64
        %v3622 = vpop.permute.xlu0 %3621
        %3623 = vrot.lane.b32.xlu0 %v2968, 64
        %v3624 = vpop.permute.xlu0 %3623
        %3625 = vrot.lane.b32.xlu0 %v2969, 64
        %v3626 = vpop.permute.xlu0 %3625
        %3627 = vrot.lane.b32.xlu0 %v2970, 64
        %v3628 = vpop.permute.xlu0 %3627
        %3629 = vrot.lane.b32.xlu0 %v2971, 64
        %v3630 = vpop.permute.xlu0 %3629
        %3631 = vrot.lane.b32.xlu0 %v2972, 64
        %v3632 = vpop.permute.xlu0 %3631
        %3633 = vrot.lane.b32.xlu0 %v2973, 64
        %v3634 = vpop.permute.xlu0 %3633
        %3635 = vrot.lane.b32.xlu0 %v2974, 64
        %v3636 = vpop.permute.xlu0 %3635
        %3637 = vrot.lane.b32.xlu0 %v2975, 64
        %v3638 = vpop.permute.xlu0 %3637
        %3639 = vrot.lane.b32.xlu0 %v2976, 64
        %v3640 = vpop.permute.xlu0 %3639
        %3641 = vrot.lane.b32.xlu0 %v2977, 64
        %v3642 = vpop.permute.xlu0 %3641
        %3643 = vrot.lane.b32.xlu0 %v2978, 64
        %v3644 = vpop.permute.xlu0 %3643
        %3645 = vrot.lane.b32.xlu0 %v2979, 64
        %v3646 = vpop.permute.xlu0 %3645
        %3647 = vrot.lane.b32.xlu0 %v2980, 64
        %v3648 = vpop.permute.xlu0 %3647
        %3649 = vrot.lane.b32.xlu0 %v2981, 64
        %v3650 = vpop.permute.xlu0 %3649
        %3651 = vrot.lane.b32.xlu0 %v2982, 64
        %v3652 = vpop.permute.xlu0 %3651
        %3653 = vrot.lane.b32.xlu0 %v2983, 64
        %v3654 = vpop.permute.xlu0 %3653
        %3655 = vrot.lane.b32.xlu0 %v2984, 64
        %v3656 = vpop.permute.xlu0 %3655
        %3721 = vrot.lane.b32.xlu0 %v2985, 96
        %v3722 = vpop.permute.xlu0 %3721
        %3723 = vrot.lane.b32.xlu0 %v2986, 96
        %v3724 = vpop.permute.xlu0 %3723
        %3725 = vrot.lane.b32.xlu0 %v2987, 96
        %v3726 = vpop.permute.xlu0 %3725
        %3727 = vrot.lane.b32.xlu0 %v2988, 96
        %v3728 = vpop.permute.xlu0 %3727
        %3729 = vrot.lane.b32.xlu0 %v2989, 96
        %v3730 = vpop.permute.xlu0 %3729
        %3731 = vrot.lane.b32.xlu0 %v2990, 96
        %v3732 = vpop.permute.xlu0 %3731
        %3733 = vrot.lane.b32.xlu0 %v2991, 96
        %v3734 = vpop.permute.xlu0 %3733
        %3735 = vrot.lane.b32.xlu0 %v2992, 96
        %v3736 = vpop.permute.xlu0 %3735
        %3737 = vrot.lane.b32.xlu0 %v2993, 96
        %v3738 = vpop.permute.xlu0 %3737
        %3739 = vrot.lane.b32.xlu0 %v2994, 96
        %v3740 = vpop.permute.xlu0 %3739
        %3741 = vrot.lane.b32.xlu0 %v2995, 96
        %v3742 = vpop.permute.xlu0 %3741
        %3743 = vrot.lane.b32.xlu0 %v2996, 96
        %v3744 = vpop.permute.xlu0 %3743
        %3745 = vrot.lane.b32.xlu0 %v2997, 96
        %v3746 = vpop.permute.xlu0 %3745
        %3747 = vrot.lane.b32.xlu0 %v2998, 96
        %v3748 = vpop.permute.xlu0 %3747
        %3749 = vrot.lane.b32.xlu0 %v2999, 96
        %v3750 = vpop.permute.xlu0 %3749
        %3751 = vrot.lane.b32.xlu0 %v3000, 96
        %v3752 = vpop.permute.xlu0 %3751
        %3753 = vrot.lane.b32.xlu0 %v3001, 96
        %v3754 = vpop.permute.xlu0 %3753
        %3755 = vrot.lane.b32.xlu0 %v3002, 96
        %v3756 = vpop.permute.xlu0 %3755
        %3757 = vrot.lane.b32.xlu0 %v3003, 96
        %v3758 = vpop.permute.xlu0 %3757
        %3759 = vrot.lane.b32.xlu0 %v3004, 96
        %v3760 = vpop.permute.xlu0 %3759
        %3761 = vrot.lane.b32.xlu0 %v3005, 96
        %v3762 = vpop.permute.xlu0 %3761
        %3763 = vrot.lane.b32.xlu0 %v3006, 96
        %v3764 = vpop.permute.xlu0 %3763
        %3765 = vrot.lane.b32.xlu0 %v3007, 96
        %v3766 = vpop.permute.xlu0 %3765
        %3767 = vrot.lane.b32.xlu0 %v3008, 96
        %v3768 = vpop.permute.xlu0 %3767
        %3769 = vrot.lane.b32.xlu0 %v3009, 96
        %v3770 = vpop.permute.xlu0 %3769
        %3771 = vrot.lane.b32.xlu0 %v3010, 96
        %v3772 = vpop.permute.xlu0 %3771
        %3773 = vrot.lane.b32.xlu0 %v3011, 96
        %v3774 = vpop.permute.xlu0 %3773
        %3775 = vrot.lane.b32.xlu0 %v3012, 96
        %v3776 = vpop.permute.xlu0 %3775
        %3777 = vrot.lane.b32.xlu0 %v3013, 96
        %v3778 = vpop.permute.xlu0 %3777
        %3779 = vrot.lane.b32.xlu0 %v3014, 96
        %v3780 = vpop.permute.xlu0 %3779
        %3781 = vrot.lane.b32.xlu0 %v3015, 96
        %v3782 = vpop.permute.xlu0 %3781
        %3783 = vrot.lane.b32.xlu0 %v3016, 96
        %v3784 = vpop.permute.xlu0 %3783
        %v3817 = vsel %vm1990, %v2760, %v3082
        %v3818 = vsel %vm1990, %v2761, %v3084
        %v3819 = vsel %vm1990, %v2762, %v3086
        %v3820 = vsel %vm1990, %v2763, %v3088
        %v3821 = vsel %vm1990, %v2764, %v3090
        %v3822 = vsel %vm1990, %v2765, %v3092
        %v3823 = vsel %vm1990, %v2766, %v3094
        %v3824 = vsel %vm1990, %v2767, %v3096
        %v3825 = vsel %vm1990, %v2768, %v3098
        %v3826 = vsel %vm1990, %v2769, %v3100
        %v3827 = vsel %vm1990, %v2770, %v3102
        %v3828 = vsel %vm1990, %v2771, %v3104
        %v3829 = vsel %vm1990, %v2772, %v3106
        %v3830 = vsel %vm1990, %v2773, %v3108
        %v3831 = vsel %vm1990, %v2774, %v3110
        %v3832 = vsel %vm1990, %v2775, %v3112
        %v3833 = vsel %vm1990, %v2776, %v3114
        %v3834 = vsel %vm1990, %v2777, %v3116
        %v3835 = vsel %vm1990, %v2778, %v3118
        %v3836 = vsel %vm1990, %v2779, %v3120
        %v3837 = vsel %vm1990, %v2780, %v3122
        %v3838 = vsel %vm1990, %v2781, %v3124
        %v3839 = vsel %vm1990, %v2782, %v3126
        %v3840 = vsel %vm1990, %v2783, %v3128
        %v3841 = vsel %vm1990, %v2784, %v3130
        %v3842 = vsel %vm1990, %v2785, %v3132
        %v3843 = vsel %vm1990, %v2786, %v3134
        %v3844 = vsel %vm1990, %v2787, %v3136
        %v3845 = vsel %vm1990, %v2788, %v3138
        %v3846 = vsel %vm1990, %v2789, %v3140
        %v3847 = vsel %vm1990, %v2790, %v3142
        %v3848 = vsel %vm1990, %v2791, %v3144
        %v3849 = vsel %vm2056, %v3817, %v3210
        %v3850 = vsel %vm2056, %v3818, %v3212
        %v3851 = vsel %vm2056, %v3819, %v3214
        %v3852 = vsel %vm2056, %v3820, %v3216
        %v3853 = vsel %vm2056, %v3821, %v3218
        %v3854 = vsel %vm2056, %v3822, %v3220
        %v3855 = vsel %vm2056, %v3823, %v3222
        %v3856 = vsel %vm2056, %v3824, %v3224
        %v3857 = vsel %vm2056, %v3825, %v3226
        %v3858 = vsel %vm2056, %v3826, %v3228
        %v3859 = vsel %vm2056, %v3827, %v3230
        %v3860 = vsel %vm2056, %v3828, %v3232
        %v3861 = vsel %vm2056, %v3829, %v3234
        %v3862 = vsel %vm2056, %v3830, %v3236
        %v3863 = vsel %vm2056, %v3831, %v3238
        %v3864 = vsel %vm2056, %v3832, %v3240
        %v3865 = vsel %vm2056, %v3833, %v3242
        %v3866 = vsel %vm2056, %v3834, %v3244
        %v3867 = vsel %vm2056, %v3835, %v3246
        %v3868 = vsel %vm2056, %v3836, %v3248
        %v3869 = vsel %vm2056, %v3837, %v3250
        %v3870 = vsel %vm2056, %v3838, %v3252
        %v3871 = vsel %vm2056, %v3839, %v3254
        %v3872 = vsel %vm2056, %v3840, %v3256
        %v3873 = vsel %vm2056, %v3841, %v3258
        %v3874 = vsel %vm2056, %v3842, %v3260
        %v3875 = vsel %vm2056, %v3843, %v3262
        %v3876 = vsel %vm2056, %v3844, %v3264
        %v3877 = vsel %vm2056, %v3845, %v3266
        %v3878 = vsel %vm2056, %v3846, %v3268
        %v3879 = vsel %vm2056, %v3847, %v3270
        %v3880 = vsel %vm2056, %v3848, %v3272
        %v3881 = vsel %vm2122, %v3849, %v3338
        %v3882 = vsel %vm2122, %v3850, %v3340
        %v3883 = vsel %vm2122, %v3851, %v3342
        %v3884 = vsel %vm2122, %v3852, %v3344
        %v3885 = vsel %vm2122, %v3853, %v3346
        %v3886 = vsel %vm2122, %v3854, %v3348
        %v3887 = vsel %vm2122, %v3855, %v3350
        %v3888 = vsel %vm2122, %v3856, %v3352
        %v3889 = vsel %vm2122, %v3857, %v3354
        %v3890 = vsel %vm2122, %v3858, %v3356
        %v3891 = vsel %vm2122, %v3859, %v3358
        %v3892 = vsel %vm2122, %v3860, %v3360
        %v3893 = vsel %vm2122, %v3861, %v3362
        %v3894 = vsel %vm2122, %v3862, %v3364
        %v3895 = vsel %vm2122, %v3863, %v3366
        %v3896 = vsel %vm2122, %v3864, %v3368
        %v3897 = vsel %vm2122, %v3865, %v3370
        %v3898 = vsel %vm2122, %v3866, %v3372
        %v3899 = vsel %vm2122, %v3867, %v3374
        %v3900 = vsel %vm2122, %v3868, %v3376
        %v3901 = vsel %vm2122, %v3869, %v3378
        %v3902 = vsel %vm2122, %v3870, %v3380
        %v3903 = vsel %vm2122, %v3871, %v3382
        %v3904 = vsel %vm2122, %v3872, %v3384
        %v3905 = vsel %vm2122, %v3873, %v3386
        %v3906 = vsel %vm2122, %v3874, %v3388
        %v3907 = vsel %vm2122, %v3875, %v3390
        %v3908 = vsel %vm2122, %v3876, %v3392
        %v3909 = vsel %vm2122, %v3877, %v3394
        %v3910 = vsel %vm2122, %v3878, %v3396
        %v3911 = vsel %vm2122, %v3879, %v3398
        %v3912 = vsel %vm2122, %v3880, %v3400
        %v3913 = vsel %vm1990, %v2888, %v3466
        %v3914 = vsel %vm1990, %v2889, %v3468
        %v3915 = vsel %vm1990, %v2890, %v3470
        %v3916 = vsel %vm1990, %v2891, %v3472
        %v3917 = vsel %vm1990, %v2892, %v3474
        %v3918 = vsel %vm1990, %v2893, %v3476
        %v3919 = vsel %vm1990, %v2894, %v3478
        %v3920 = vsel %vm1990, %v2895, %v3480
        %v3921 = vsel %vm1990, %v2896, %v3482
        %v3922 = vsel %vm1990, %v2897, %v3484
        %v3923 = vsel %vm1990, %v2898, %v3486
        %v3924 = vsel %vm1990, %v2899, %v3488
        %v3925 = vsel %vm1990, %v2900, %v3490
        %v3926 = vsel %vm1990, %v2901, %v3492
        %v3927 = vsel %vm1990, %v2902, %v3494
        %v3928 = vsel %vm1990, %v2903, %v3496
        %v3929 = vsel %vm1990, %v2904, %v3498
        %v3930 = vsel %vm1990, %v2905, %v3500
        %v3931 = vsel %vm1990, %v2906, %v3502
        %v3932 = vsel %vm1990, %v2907, %v3504
        %v3933 = vsel %vm1990, %v2908, %v3506
        %v3934 = vsel %vm1990, %v2909, %v3508
        %v3935 = vsel %vm1990, %v2910, %v3510
        %v3936 = vsel %vm1990, %v2911, %v3512
        %v3937 = vsel %vm1990, %v2912, %v3514
        %v3938 = vsel %vm1990, %v2913, %v3516
        %v3939 = vsel %vm1990, %v2914, %v3518
        %v3940 = vsel %vm1990, %v2915, %v3520
        %v3941 = vsel %vm1990, %v2916, %v3522
        %v3942 = vsel %vm1990, %v2917, %v3524
        %v3943 = vsel %vm1990, %v2918, %v3526
        %v3944 = vsel %vm1990, %v2919, %v3528
        %v3945 = vsel %vm2056, %v3913, %v3594
        %v3946 = vsel %vm2056, %v3914, %v3596
        %v3947 = vsel %vm2056, %v3915, %v3598
        %v3948 = vsel %vm2056, %v3916, %v3600
        %v3949 = vsel %vm2056, %v3917, %v3602
        %v3950 = vsel %vm2056, %v3918, %v3604
        %v3951 = vsel %vm2056, %v3919, %v3606
        %v3952 = vsel %vm2056, %v3920, %v3608
        %v3953 = vsel %vm2056, %v3921, %v3610
        %v3954 = vsel %vm2056, %v3922, %v3612
        %v3955 = vsel %vm2056, %v3923, %v3614
        %v3956 = vsel %vm2056, %v3924, %v3616
        %v3957 = vsel %vm2056, %v3925, %v3618
        %v3958 = vsel %vm2056, %v3926, %v3620
        %v3959 = vsel %vm2056, %v3927, %v3622
        %v3960 = vsel %vm2056, %v3928, %v3624
        %v3961 = vsel %vm2056, %v3929, %v3626
        %v3962 = vsel %vm2056, %v3930, %v3628
        %v3963 = vsel %vm2056, %v3931, %v3630
        %v3964 = vsel %vm2056, %v3932, %v3632
        %v3965 = vsel %vm2056, %v3933, %v3634
        %v3966 = vsel %vm2056, %v3934, %v3636
        %v3967 = vsel %vm2056, %v3935, %v3638
        %v3968 = vsel %vm2056, %v3936, %v3640
        %v3969 = vsel %vm2056, %v3937, %v3642
        %v3970 = vsel %vm2056, %v3938, %v3644
        %v3971 = vsel %vm2056, %v3939, %v3646
        %v3972 = vsel %vm2056, %v3940, %v3648
        %v3973 = vsel %vm2056, %v3941, %v3650
        %v3974 = vsel %vm2056, %v3942, %v3652
        %v3975 = vsel %vm2056, %v3943, %v3654
        %v3976 = vsel %vm2056, %v3944, %v3656
        %v3977 = vsel %vm2122, %v3945, %v3722
        %v3978 = vsel %vm2122, %v3946, %v3724
        %v3979 = vsel %vm2122, %v3947, %v3726
        %v3980 = vsel %vm2122, %v3948, %v3728
        %v3981 = vsel %vm2122, %v3949, %v3730
        %v3982 = vsel %vm2122, %v3950, %v3732
        %v3983 = vsel %vm2122, %v3951, %v3734
        %v3984 = vsel %vm2122, %v3952, %v3736
        %v3985 = vsel %vm2122, %v3953, %v3738
        %v3986 = vsel %vm2122, %v3954, %v3740
        %v3987 = vsel %vm2122, %v3955, %v3742
        %v3988 = vsel %vm2122, %v3956, %v3744
        %v3989 = vsel %vm2122, %v3957, %v3746
        %v3990 = vsel %vm2122, %v3958, %v3748
        %v3991 = vsel %vm2122, %v3959, %v3750
        %v3992 = vsel %vm2122, %v3960, %v3752
        %v3993 = vsel %vm2122, %v3961, %v3754
        %v3994 = vsel %vm2122, %v3962, %v3756
        %v3995 = vsel %vm2122, %v3963, %v3758
        %v3996 = vsel %vm2122, %v3964, %v3760
        %v3997 = vsel %vm2122, %v3965, %v3762
        %v3998 = vsel %vm2122, %v3966, %v3764
        %v3999 = vsel %vm2122, %v3967, %v3766
        %v4000 = vsel %vm2122, %v3968, %v3768
        %v4001 = vsel %vm2122, %v3969, %v3770
        %v4002 = vsel %vm2122, %v3970, %v3772
        %v4003 = vsel %vm2122, %v3971, %v3774
        %v4004 = vsel %vm2122, %v3972, %v3776
        %v4005 = vsel %vm2122, %v3973, %v3778
        %v4006 = vsel %vm2122, %v3974, %v3780
        %v4007 = vsel %vm2122, %v3975, %v3782
        %v4008 = vsel %vm2122, %v3976, %v3784
        %v4009 = vpack.c.bf16 %v3882, %v3881
        %v4010 = vpack.c.bf16 %v3978, %v3977
        %v4011 = vpack.c.bf16 %v3018, %v3017
        %v4012 = vpack.c.bf16 %v3884, %v3883
        %v4013 = vpack.c.bf16 %v3980, %v3979
        %v4014 = vpack.c.bf16 %v3020, %v3019
        %v4015 = vpack.c.bf16 %v3886, %v3885
        %v4016 = vpack.c.bf16 %v3982, %v3981
        %v4017 = vpack.c.bf16 %v3022, %v3021
        %v4018 = vpack.c.bf16 %v3888, %v3887
        %v4019 = vpack.c.bf16 %v3984, %v3983
        %v4020 = vpack.c.bf16 %v3024, %v3023
        %v4021 = vpack.c.bf16 %v3890, %v3889
        %v4022 = vpack.c.bf16 %v3986, %v3985
        %v4023 = vpack.c.bf16 %v3026, %v3025
        %v4024 = vpack.c.bf16 %v3892, %v3891
        %v4025 = vpack.c.bf16 %v3988, %v3987
        %v4026 = vpack.c.bf16 %v3028, %v3027
        %v4027 = vpack.c.bf16 %v3894, %v3893
        %v4028 = vpack.c.bf16 %v3990, %v3989
        %v4029 = vpack.c.bf16 %v3030, %v3029
        %v4030 = vpack.c.bf16 %v3896, %v3895
        %v4031 = vpack.c.bf16 %v3992, %v3991
        %v4032 = vpack.c.bf16 %v3032, %v3031
        %v4033 = vpack.c.bf16 %v3898, %v3897
        %v4034 = vpack.c.bf16 %v3994, %v3993
        %v4035 = vpack.c.bf16 %v3034, %v3033
        %v4036 = vpack.c.bf16 %v3900, %v3899
        %v4037 = vpack.c.bf16 %v3996, %v3995
        %v4038 = vpack.c.bf16 %v3036, %v3035
        %v4039 = vpack.c.bf16 %v3902, %v3901
        %v4040 = vpack.c.bf16 %v3998, %v3997
        %v4041 = vpack.c.bf16 %v3038, %v3037
        %v4042 = vpack.c.bf16 %v3904, %v3903
        %v4043 = vpack.c.bf16 %v4000, %v3999
        %v4044 = vpack.c.bf16 %v3040, %v3039
        %v4045 = vpack.c.bf16 %v3906, %v3905
        %v4046 = vpack.c.bf16 %v4002, %v4001
        %v4047 = vpack.c.bf16 %v3042, %v3041
        %v4048 = vpack.c.bf16 %v3908, %v3907
        %v4049 = vpack.c.bf16 %v4004, %v4003
        %v4050 = vpack.c.bf16 %v3044, %v3043
        %v4051 = vpack.c.bf16 %v3910, %v3909
        %v4052 = vpack.c.bf16 %v4006, %v4005
        %v4053 = vpack.c.bf16 %v3046, %v3045
        %v4054 = vpack.c.bf16 %v3912, %v3911
        %v4055 = vpack.c.bf16 %v4008, %v4007
        %v4056 = vpack.c.bf16 %v3048, %v3047
        %v4057 = vld [vmem:[%s7] sm:$0xf]
        %v4058 = vld [vmem:[%s7 + $0x4] sm:$0xf]
        %v4059 = vld [vmem:[%s7 + $0x8] sm:$0xf]
        %v4060 = vld [vmem:[%s7 + $0xc] sm:$0xf]
        %v4061 = vld [vmem:[%s7 + $0x10] sm:$0xf]
        %v4062 = vld [vmem:[%s7 + $0x14] sm:$0xf]
        %v4063 = vld [vmem:[%s7 + $0x18] sm:$0xf]
        %v4064 = vld [vmem:[%s7 + $0x1c] sm:$0xf]
        %v4065 = vld [vmem:[%s7 + $0x20] sm:$0xf]
        %v4066 = vld [vmem:[%s7 + $0x24] sm:$0xf]
        %v4067 = vld [vmem:[%s7 + $0x28] sm:$0xf]
        %v4068 = vld [vmem:[%s7 + $0x2c] sm:$0xf]
        %v4069 = vld [vmem:[%s7 + $0x30] sm:$0xf]
        %v4070 = vld [vmem:[%s7 + $0x34] sm:$0xf]
        %v4071 = vld [vmem:[%s7 + $0x38] sm:$0xf]
        %v4072 = vld [vmem:[%s7 + $0x3c] sm:$0xf]
        %v4073 = vld [vmem:[%s7 + $0x40] sm:$0xf]
        %v4074 = vld [vmem:[%s7 + $0x44] sm:$0xf]
        %v4075 = vld [vmem:[%s7 + $0x48] sm:$0xf]
        %v4076 = vld [vmem:[%s7 + $0x4c] sm:$0xf]
        %v4077 = vld [vmem:[%s7 + $0x50] sm:$0xf]
        %v4078 = vld [vmem:[%s7 + $0x54] sm:$0xf]
        %v4079 = vld [vmem:[%s7 + $0x58] sm:$0xf]
        %v4080 = vld [vmem:[%s7 + $0x5c] sm:$0xf]
        %v4081 = vld [vmem:[%s7 + $0x60] sm:$0xf]
        %v4082 = vld [vmem:[%s7 + $0x64] sm:$0xf]
        %v4083 = vld [vmem:[%s7 + $0x68] sm:$0xf]
        %v4084 = vld [vmem:[%s7 + $0x6c] sm:$0xf]
        %v4085 = vld [vmem:[%s7 + $0x70] sm:$0xf]
        %v4086 = vld [vmem:[%s7 + $0x74] sm:$0xf]
        %v4087 = vld [vmem:[%s7 + $0x78] sm:$0xf]
        %v4088 = vld [vmem:[%s7 + $0x7c] sm:$0xf]
        %v4089 = vld [vmem:[%s7 + $0x80] sm:$0xf]
        %v4090 = vld [vmem:[%s7 + $0x84] sm:$0xf]
        %v4091 = vld [vmem:[%s7 + $0x88] sm:$0xf]
        %v4092 = vld [vmem:[%s7 + $0x8c] sm:$0xf]
        %v4129 = vunpack.c.l.b16 %v4057
        %v4130 = vunpack.c.l.b16 %v4058
        %v4131 = vunpack.c.l.b16 %v4059
        %v4132 = vunpack.c.l.b16 %v4060
        %v4133 = vunpack.c.l.b16 %v4061
        %v4134 = vunpack.c.l.b16 %v4062
        %v4135 = vunpack.c.l.b16 %v4063
        %v4136 = vunpack.c.l.b16 %v4064
        %v4137 = vunpack.c.l.b16 %v4065
        %v4138 = vunpack.c.l.b16 %v4066
        %v4139 = vunpack.c.l.b16 %v4067
        %v4140 = vunpack.c.l.b16 %v4068
        %v4141 = vunpack.c.l.b16 %v4069
        %v4142 = vunpack.c.l.b16 %v4070
        %v4143 = vunpack.c.l.b16 %v4071
        %v4144 = vunpack.c.l.b16 %v4072
        %v4145 = vunpack.c.l.b16 %v4073
        %v4146 = vunpack.c.l.b16 %v4074
        %v4147 = vunpack.c.l.b16 %v4075
        %v4148 = vunpack.c.l.b16 %v4076
        %v4149 = vunpack.c.l.b16 %v4077
        %v4150 = vunpack.c.l.b16 %v4078
        %v4151 = vunpack.c.l.b16 %v4079
        %v4152 = vunpack.c.l.b16 %v4080
        %v4153 = vunpack.c.l.b16 %v4081
        %v4154 = vunpack.c.l.b16 %v4082
        %v4155 = vunpack.c.l.b16 %v4083
        %v4156 = vunpack.c.l.b16 %v4084
        %v4157 = vunpack.c.l.b16 %v4085
        %v4158 = vunpack.c.l.b16 %v4086
        %v4159 = vunpack.c.l.b16 %v4087
        %v4160 = vunpack.c.l.b16 %v4088
        %v4161 = vunpack.c.l.b16 %v4089
        %v4162 = vunpack.c.l.b16 %v4090
        %v4163 = vunpack.c.l.b16 %v4091
        %v4164 = vunpack.c.l.b16 %v4092
        %v4165 = vpack.c.b16 %v4130, %v4129
        %v4166 = vpack.c.b16 %v4132, %v4131
        %v4167 = vpack.c.b16 %v4134, %v4133
        %v4168 = vpack.c.b16 %v4136, %v4135
        %v4169 = vpack.c.b16 %v4138, %v4137
        %v4170 = vpack.c.b16 %v4140, %v4139
        %v4171 = vpack.c.b16 %v4142, %v4141
        %v4172 = vpack.c.b16 %v4144, %v4143
        %v4173 = vpack.c.b16 %v4146, %v4145
        %v4174 = vpack.c.b16 %v4148, %v4147
        %v4175 = vpack.c.b16 %v4150, %v4149
        %v4176 = vpack.c.b16 %v4152, %v4151
        %v4177 = vpack.c.b16 %v4154, %v4153
        %v4178 = vpack.c.b16 %v4156, %v4155
        %v4179 = vpack.c.b16 %v4158, %v4157
        %v4180 = vpack.c.b16 %v4160, %v4159
        %v4181 = vpack.c.b16 %v4162, %v4161
        %v4182 = vpack.c.b16 %v4164, %v4163
        %v4202 = vsel %vm1990, %v4011, 0
        %v4205 = vsel %vm1990, %v4014, 0
        %v4208 = vsel %vm1990, %v4017, 0
        %v4211 = vsel %vm1990, %v4020, 0
        %v4214 = vsel %vm1990, %v4023, 0
        %v4217 = vsel %vm1990, %v4026, 0
        %v4220 = vsel %vm1990, %v4029, 0
        %v4223 = vsel %vm1990, %v4032, 0
        %v4226 = vsel %vm1990, %v4035, 0
        %v4229 = vsel %vm1990, %v4038, 0
        %v4232 = vsel %vm1990, %v4041, 0
        %v4235 = vsel %vm1990, %v4044, 0
        %v4238 = vsel %vm1990, %v4047, 0
        %v4241 = vsel %vm1990, %v4050, 0
        %v4244 = vsel %vm1990, %v4053, 0
        %v4247 = vsel %vm1990, %v4056, 0
        %4249 = vmatprep.subr.bf16.mxu0 0
        %4250 = vmatpush1.bf16.msra.mxu0 %v4172
        %4251 = vmatprep.subr.bf16.mxu0 0
        %4252 = vmatpush1.bf16.msra.mxu0 %v4171
        %4253 = vmatprep.subr.bf16.mxu0 0
        %4254 = vmatpush1.bf16.msra.mxu0 %v4170
        %4255 = vmatprep.subr.bf16.mxu0 0
        %4256 = vmatpush1.bf16.msra.mxu0 %v4169
        %4257 = vmatprep.subr.bf16.mxu0 0
        %4258 = vmatpush1.bf16.msra.mxu0 %v4168
        %4259 = vmatprep.subr.bf16.mxu0 0
        %4260 = vmatpush1.bf16.msra.mxu0 %v4167
        %4261 = vmatprep.subr.bf16.mxu0 0
        %4262 = vmatpush1.bf16.msra.mxu0 %v4166
        %4263 = vmatprep.subr.bf16.mxu0 0
        %4264 = vmatpush1.bf16.msra.mxu0 %v4165
        %4265 = vmatprep.subr.bf16.mxu0 0
        %4266 = vmatpush2.bf16.msra.mxu0 %v4180
        %4267 = vmatprep.subr.bf16.mxu0 0
        %4268 = vmatpush2.bf16.msra.mxu0 %v4179
        %4269 = vmatprep.subr.bf16.mxu0 0
        %4270 = vmatpush2.bf16.msra.mxu0 %v4178
        %4271 = vmatprep.subr.bf16.mxu0 0
        %4272 = vmatpush2.bf16.msra.mxu0 %v4177
        %4273 = vmatprep.subr.bf16.mxu0 0
        %4274 = vmatpush2.bf16.msra.mxu0 %v4176
        %4275 = vmatprep.subr.bf16.mxu0 0
        %4276 = vmatpush2.bf16.msra.mxu0 %v4175
        %4277 = vmatprep.subr.bf16.mxu0 0
        %4278 = vmatpush2.bf16.msra.mxu0 %v4174
        %4279 = vmatprep.subr.bf16.mxu0 0
        %4280 = vmatpush2.bf16.msra.mxu0 %v4173
        %4281 = vmatprep.mubr.bf16.mxu0 %v4010
        %4282 = vmatmul.mubr.bf16.gmra.mxu0 %v4009
        %v4283 = vpop.f32.mrf.mxu0
        %v4284 = vadd.f32 0.0, %v4283
        %v4285 = vpop.f32.mrf.mxu0
        %v4286 = vpop.f32.mrf.mxu0
        %v4287 = vadd.f32 0.0, %v4286
        %v4288 = vpop.f32.mrf.mxu0
        %4289 = vmatprep.mubr.bf16.mxu0 %v4013
        %4290 = vmatmul.mubr.bf16.gmra.mxu0 %v4012
        %v4291 = vpop.f32.mrf.mxu0
        %v4292 = vadd.f32 0.0, %v4291
        %v4293 = vpop.f32.mrf.mxu0
        %v4294 = vpop.f32.mrf.mxu0
        %v4295 = vadd.f32 0.0, %v4294
        %v4296 = vpop.f32.mrf.mxu0
        %4297 = vmatprep.mubr.bf16.mxu0 %v4016
        %4298 = vmatmul.mubr.bf16.gmra.mxu0 %v4015
        %v4299 = vpop.f32.mrf.mxu0
        %v4300 = vadd.f32 0.0, %v4299
        %v4301 = vpop.f32.mrf.mxu0
        %v4302 = vpop.f32.mrf.mxu0
        %v4303 = vadd.f32 0.0, %v4302
        %v4304 = vpop.f32.mrf.mxu0
        %4305 = vmatprep.mubr.bf16.mxu0 %v4019
        %4306 = vmatmul.mubr.bf16.gmra.mxu0 %v4018
        %v4307 = vpop.f32.mrf.mxu0
        %v4308 = vadd.f32 0.0, %v4307
        %v4309 = vpop.f32.mrf.mxu0
        %v4310 = vpop.f32.mrf.mxu0
        %v4311 = vadd.f32 0.0, %v4310
        %v4312 = vpop.f32.mrf.mxu0
        %4313 = vmatprep.mubr.bf16.mxu0 %v4022
        %4314 = vmatmul.mubr.bf16.gmra.mxu0 %v4021
        %v4315 = vpop.f32.mrf.mxu0
        %v4316 = vadd.f32 0.0, %v4315
        %v4317 = vpop.f32.mrf.mxu0
        %v4318 = vpop.f32.mrf.mxu0
        %v4319 = vadd.f32 0.0, %v4318
        %v4320 = vpop.f32.mrf.mxu0
        %4321 = vmatprep.mubr.bf16.mxu0 %v4025
        %4322 = vmatmul.mubr.bf16.gmra.mxu0 %v4024
        %v4323 = vpop.f32.mrf.mxu0
        %v4324 = vadd.f32 0.0, %v4323
        %v4325 = vpop.f32.mrf.mxu0
        %v4326 = vpop.f32.mrf.mxu0
        %v4327 = vadd.f32 0.0, %v4326
        %v4328 = vpop.f32.mrf.mxu0
        %4329 = vmatprep.mubr.bf16.mxu0 %v4028
        %4330 = vmatmul.mubr.bf16.gmra.mxu0 %v4027
        %v4331 = vpop.f32.mrf.mxu0
        %v4332 = vadd.f32 0.0, %v4331
        %v4333 = vpop.f32.mrf.mxu0
        %v4334 = vpop.f32.mrf.mxu0
        %v4335 = vadd.f32 0.0, %v4334
        %v4336 = vpop.f32.mrf.mxu0
        %4337 = vmatprep.mubr.bf16.mxu0 %v4031
        %4338 = vmatmul.mubr.bf16.gmra.mxu0 %v4030
        %v4339 = vpop.f32.mrf.mxu0
        %v4340 = vadd.f32 0.0, %v4339
        %v4341 = vpop.f32.mrf.mxu0
        %v4342 = vpop.f32.mrf.mxu0
        %v4343 = vadd.f32 0.0, %v4342
        %v4344 = vpop.f32.mrf.mxu0
        %4345 = vmatprep.mubr.bf16.mxu0 %v4034
        %4346 = vmatmul.mubr.bf16.gmra.mxu0 %v4033
        %v4347 = vpop.f32.mrf.mxu0
        %v4348 = vadd.f32 0.0, %v4347
        %v4349 = vpop.f32.mrf.mxu0
        %v4350 = vpop.f32.mrf.mxu0
        %v4351 = vadd.f32 0.0, %v4350
        %v4352 = vpop.f32.mrf.mxu0
        %4353 = vmatprep.mubr.bf16.mxu0 %v4037
        %4354 = vmatmul.mubr.bf16.gmra.mxu0 %v4036
        %v4355 = vpop.f32.mrf.mxu0
        %v4356 = vadd.f32 0.0, %v4355
        %v4357 = vpop.f32.mrf.mxu0
        %v4358 = vpop.f32.mrf.mxu0
        %v4359 = vadd.f32 0.0, %v4358
        %v4360 = vpop.f32.mrf.mxu0
        %4361 = vmatprep.mubr.bf16.mxu0 %v4040
        %4362 = vmatmul.mubr.bf16.gmra.mxu0 %v4039
        %v4363 = vpop.f32.mrf.mxu0
        %v4364 = vadd.f32 0.0, %v4363
        %v4365 = vpop.f32.mrf.mxu0
        %v4366 = vpop.f32.mrf.mxu0
        %v4367 = vadd.f32 0.0, %v4366
        %v4368 = vpop.f32.mrf.mxu0
        %4369 = vmatprep.mubr.bf16.mxu0 %v4043
        %4370 = vmatmul.mubr.bf16.gmra.mxu0 %v4042
        %v4371 = vpop.f32.mrf.mxu0
        %v4372 = vadd.f32 0.0, %v4371
        %v4373 = vpop.f32.mrf.mxu0
        %v4374 = vpop.f32.mrf.mxu0
        %v4375 = vadd.f32 0.0, %v4374
        %v4376 = vpop.f32.mrf.mxu0
        %4377 = vmatprep.mubr.bf16.mxu0 %v4046
        %4378 = vmatmul.mubr.bf16.gmra.mxu0 %v4045
        %v4379 = vpop.f32.mrf.mxu0
        %v4380 = vadd.f32 0.0, %v4379
        %v4381 = vpop.f32.mrf.mxu0
        %v4382 = vpop.f32.mrf.mxu0
        %v4383 = vadd.f32 0.0, %v4382
        %v4384 = vpop.f32.mrf.mxu0
        %4385 = vmatprep.mubr.bf16.mxu0 %v4049
        %4386 = vmatmul.mubr.bf16.gmra.mxu0 %v4048
        %v4387 = vpop.f32.mrf.mxu0
        %v4388 = vadd.f32 0.0, %v4387
        %v4389 = vpop.f32.mrf.mxu0
        %v4390 = vpop.f32.mrf.mxu0
        %v4391 = vadd.f32 0.0, %v4390
        %v4392 = vpop.f32.mrf.mxu0
        %4393 = vmatprep.mubr.bf16.mxu0 %v4052
        %4394 = vmatmul.mubr.bf16.gmra.mxu0 %v4051
        %v4395 = vpop.f32.mrf.mxu0
        %v4396 = vadd.f32 0.0, %v4395
        %v4397 = vpop.f32.mrf.mxu0
        %v4398 = vpop.f32.mrf.mxu0
        %v4399 = vadd.f32 0.0, %v4398
        %v4400 = vpop.f32.mrf.mxu0
        %4401 = vmatprep.mubr.bf16.mxu0 %v4055
        %4402 = vmatmul.mubr.bf16.gmra.mxu0 %v4054
        %v4403 = vpop.f32.mrf.mxu0
        %v4404 = vadd.f32 0.0, %v4403
        %v4405 = vpop.f32.mrf.mxu0
        %v4406 = vpop.f32.mrf.mxu0
        %v4407 = vadd.f32 0.0, %v4406
        %v4408 = vpop.f32.mrf.mxu0
        %4409 = vdwg.mxu0
        %4410 = vmatprep.subr.bf16.mxu0 0
        %4411 = vmatpush1.bf16.msra.mxu0 0
        %4412 = vmatprep.subr.bf16.mxu0 0
        %4413 = vmatpush1.bf16.msra.mxu0 0
        %4414 = vmatprep.subr.bf16.mxu0 0
        %4415 = vmatpush1.bf16.msra.mxu0 0
        %4416 = vmatprep.subr.bf16.mxu0 0
        %4417 = vmatpush1.bf16.msra.mxu0 0
        %4418 = vmatprep.subr.bf16.mxu0 0
        %4419 = vmatpush1.bf16.msra.mxu0 0
        %4420 = vmatprep.subr.bf16.mxu0 0
        %4421 = vmatpush1.bf16.msra.mxu0 0
        %4422 = vmatprep.subr.bf16.mxu0 0
        %4423 = vmatpush1.bf16.msra.mxu0 %v4182
        %4424 = vmatprep.subr.bf16.mxu0 0
        %4425 = vmatpush1.bf16.msra.mxu0 %v4181
        %4426 = vmatprep.subr.bf16.mxu0 0
        %4427 = vmatpush2.bf16.msra.mxu0 0
        %4428 = vmatprep.subr.bf16.mxu0 0
        %4429 = vmatpush2.bf16.msra.mxu0 0
        %4430 = vmatprep.subr.bf16.mxu0 0
        %4431 = vmatpush2.bf16.msra.mxu0 0
        %4432 = vmatprep.subr.bf16.mxu0 0
        %4433 = vmatpush2.bf16.msra.mxu0 0
        %4434 = vmatprep.subr.bf16.mxu0 0
        %4435 = vmatpush2.bf16.msra.mxu0 0
        %4436 = vmatprep.subr.bf16.mxu0 0
        %4437 = vmatpush2.bf16.msra.mxu0 0
        %4438 = vmatprep.subr.bf16.mxu0 0
        %4439 = vmatpush2.bf16.msra.mxu0 0
        %4440 = vmatprep.subr.bf16.mxu0 0
        %4441 = vmatpush2.bf16.msra.mxu0 0
        %4442 = vmatprep.mubr.bf16.mxu0 0
        %4443 = vmatmul.mubr.bf16.gmra.mxu0 %v4202
        %v4444 = vpop.f32.mrf.mxu0
        %v4445 = vadd.f32 %v4284, %v4444
        %v4446 = vpop.f32.mrf.mxu0
        %v4447 = vpop.f32.mrf.mxu0
        %v4448 = vadd.f32 %v4287, %v4447
        %v4449 = vpop.f32.mrf.mxu0
        %4450 = vmatprep.mubr.bf16.mxu0 0
        %4451 = vmatmul.mubr.bf16.gmra.mxu0 %v4205
        %v4452 = vpop.f32.mrf.mxu0
        %v4453 = vadd.f32 %v4292, %v4452
        %v4454 = vpop.f32.mrf.mxu0
        %v4455 = vpop.f32.mrf.mxu0
        %v4456 = vadd.f32 %v4295, %v4455
        %v4457 = vpop.f32.mrf.mxu0
        %4458 = vmatprep.mubr.bf16.mxu0 0
        %4459 = vmatmul.mubr.bf16.gmra.mxu0 %v4208
        %v4460 = vpop.f32.mrf.mxu0
        %v4461 = vadd.f32 %v4300, %v4460
        %v4462 = vpop.f32.mrf.mxu0
        %v4463 = vpop.f32.mrf.mxu0
        %v4464 = vadd.f32 %v4303, %v4463
        %v4465 = vpop.f32.mrf.mxu0
        %4466 = vmatprep.mubr.bf16.mxu0 0
        %4467 = vmatmul.mubr.bf16.gmra.mxu0 %v4211
        %v4468 = vpop.f32.mrf.mxu0
        %v4469 = vadd.f32 %v4308, %v4468
        %v4470 = vpop.f32.mrf.mxu0
        %v4471 = vpop.f32.mrf.mxu0
        %v4472 = vadd.f32 %v4311, %v4471
        %v4473 = vpop.f32.mrf.mxu0
        %4474 = vmatprep.mubr.bf16.mxu0 0
        %4475 = vmatmul.mubr.bf16.gmra.mxu0 %v4214
        %v4476 = vpop.f32.mrf.mxu0
        %v4477 = vadd.f32 %v4316, %v4476
        %v4478 = vpop.f32.mrf.mxu0
        %v4479 = vpop.f32.mrf.mxu0
        %v4480 = vadd.f32 %v4319, %v4479
        %v4481 = vpop.f32.mrf.mxu0
        %4482 = vmatprep.mubr.bf16.mxu0 0
        %4483 = vmatmul.mubr.bf16.gmra.mxu0 %v4217
        %v4484 = vpop.f32.mrf.mxu0
        %v4485 = vadd.f32 %v4324, %v4484
        %v4486 = vpop.f32.mrf.mxu0
        %v4487 = vpop.f32.mrf.mxu0
        %v4488 = vadd.f32 %v4327, %v4487
        %v4489 = vpop.f32.mrf.mxu0
        %4490 = vmatprep.mubr.bf16.mxu0 0
        %4491 = vmatmul.mubr.bf16.gmra.mxu0 %v4220
        %v4492 = vpop.f32.mrf.mxu0
        %v4493 = vadd.f32 %v4332, %v4492
        %v4494 = vpop.f32.mrf.mxu0
        %v4495 = vpop.f32.mrf.mxu0
        %v4496 = vadd.f32 %v4335, %v4495
        %v4497 = vpop.f32.mrf.mxu0
        %4498 = vmatprep.mubr.bf16.mxu0 0
        %4499 = vmatmul.mubr.bf16.gmra.mxu0 %v4223
        %v4500 = vpop.f32.mrf.mxu0
        %v4501 = vadd.f32 %v4340, %v4500
        %v4502 = vpop.f32.mrf.mxu0
        %v4503 = vpop.f32.mrf.mxu0
        %v4504 = vadd.f32 %v4343, %v4503
        %v4505 = vpop.f32.mrf.mxu0
        %4506 = vmatprep.mubr.bf16.mxu0 0
        %4507 = vmatmul.mubr.bf16.gmra.mxu0 %v4226
        %v4508 = vpop.f32.mrf.mxu0
        %v4509 = vadd.f32 %v4348, %v4508
        %v4510 = vpop.f32.mrf.mxu0
        %v4511 = vpop.f32.mrf.mxu0
        %v4512 = vadd.f32 %v4351, %v4511
        %v4513 = vpop.f32.mrf.mxu0
        %4514 = vmatprep.mubr.bf16.mxu0 0
        %4515 = vmatmul.mubr.bf16.gmra.mxu0 %v4229
        %v4516 = vpop.f32.mrf.mxu0
        %v4517 = vadd.f32 %v4356, %v4516
        %v4518 = vpop.f32.mrf.mxu0
        %v4519 = vpop.f32.mrf.mxu0
        %v4520 = vadd.f32 %v4359, %v4519
        %v4521 = vpop.f32.mrf.mxu0
        %4522 = vmatprep.mubr.bf16.mxu0 0
        %4523 = vmatmul.mubr.bf16.gmra.mxu0 %v4232
        %v4524 = vpop.f32.mrf.mxu0
        %v4525 = vadd.f32 %v4364, %v4524
        %v4526 = vpop.f32.mrf.mxu0
        %v4527 = vpop.f32.mrf.mxu0
        %v4528 = vadd.f32 %v4367, %v4527
        %v4529 = vpop.f32.mrf.mxu0
        %4530 = vmatprep.mubr.bf16.mxu0 0
        %4531 = vmatmul.mubr.bf16.gmra.mxu0 %v4235
        %v4532 = vpop.f32.mrf.mxu0
        %v4533 = vadd.f32 %v4372, %v4532
        %v4534 = vpop.f32.mrf.mxu0
        %v4535 = vpop.f32.mrf.mxu0
        %v4536 = vadd.f32 %v4375, %v4535
        %v4537 = vpop.f32.mrf.mxu0
        %4538 = vmatprep.mubr.bf16.mxu0 0
        %4539 = vmatmul.mubr.bf16.gmra.mxu0 %v4238
        %v4540 = vpop.f32.mrf.mxu0
        %v4541 = vadd.f32 %v4380, %v4540
        %v4542 = vpop.f32.mrf.mxu0
        %v4543 = vpop.f32.mrf.mxu0
        %v4544 = vadd.f32 %v4383, %v4543
        %v4545 = vpop.f32.mrf.mxu0
        %4546 = vmatprep.mubr.bf16.mxu0 0
        %4547 = vmatmul.mubr.bf16.gmra.mxu0 %v4241
        %v4548 = vpop.f32.mrf.mxu0
        %v4549 = vadd.f32 %v4388, %v4548
        %v4550 = vpop.f32.mrf.mxu0
        %v4551 = vpop.f32.mrf.mxu0
        %v4552 = vadd.f32 %v4391, %v4551
        %v4553 = vpop.f32.mrf.mxu0
        %4554 = vmatprep.mubr.bf16.mxu0 0
        %4555 = vmatmul.mubr.bf16.gmra.mxu0 %v4244
        %v4556 = vpop.f32.mrf.mxu0
        %v4557 = vadd.f32 %v4396, %v4556
        %v4558 = vpop.f32.mrf.mxu0
        %v4559 = vpop.f32.mrf.mxu0
        %v4560 = vadd.f32 %v4399, %v4559
        %v4561 = vpop.f32.mrf.mxu0
        %4562 = vmatprep.mubr.bf16.mxu0 0
        %4563 = vmatmul.mubr.bf16.gmra.mxu0 %v4247
        %v4564 = vpop.f32.mrf.mxu0
        %v4565 = vadd.f32 %v4404, %v4564
        %v4566 = vpop.f32.mrf.mxu0
        %v4567 = vpop.f32.mrf.mxu0
        %v4568 = vadd.f32 %v4407, %v4567
        %v4569 = vpop.f32.mrf.mxu0
        %4570 = vdwg.mxu0
        %v4571 = vld [vmem:[%s13] sm:$0xff]
        %v4572 = vld [vmem:[%s13 + $0x8] sm:$0xff]
        %v4573 = vld [vmem:[%s13 + $0x10] sm:$0xff]
        %v4574 = vld [vmem:[%s13 + $0x18] sm:$0xff]
        %v4575 = vld [vmem:[%s13 + $0x20] sm:$0xff]
        %v4576 = vld [vmem:[%s13 + $0x28] sm:$0xff]
        %v4577 = vld [vmem:[%s13 + $0x30] sm:$0xff]
        %v4578 = vld [vmem:[%s13 + $0x38] sm:$0xff]
        %v4579 = vld [vmem:[%s13 + $0x40] sm:$0xff]
        %v4580 = vld [vmem:[%s13 + $0x48] sm:$0xff]
        %v4581 = vld [vmem:[%s13 + $0x50] sm:$0xff]
        %v4582 = vld [vmem:[%s13 + $0x58] sm:$0xff]
        %v4583 = vld [vmem:[%s13 + $0x60] sm:$0xff]
        %v4584 = vld [vmem:[%s13 + $0x68] sm:$0xff]
        %v4585 = vld [vmem:[%s13 + $0x70] sm:$0xff]
        %v4586 = vld [vmem:[%s13 + $0x78] sm:$0xff]
        %4587 = vmatprep.subr.mxu0 0.0
        %4588 = vmatpush1.msra.mxu0 %v4504
        %4589 = vmatprep.subr.mxu0 0.0
        %4590 = vmatpush1.msra.mxu0 %v4501
        %4591 = vmatprep.subr.mxu0 0.0
        %4592 = vmatpush1.msra.mxu0 %v4496
        %4593 = vmatprep.subr.mxu0 0.0
        %4594 = vmatpush1.msra.mxu0 %v4493
        %4595 = vmatprep.subr.mxu0 0.0
        %4596 = vmatpush1.msra.mxu0 %v4488
        %4597 = vmatprep.subr.mxu0 0.0
        %4598 = vmatpush1.msra.mxu0 %v4485
        %4599 = vmatprep.subr.mxu0 0.0
        %4600 = vmatpush1.msra.mxu0 %v4480
        %4601 = vmatprep.subr.mxu0 0.0
        %4602 = vmatpush1.msra.mxu0 %v4477
        %4603 = vmatprep.subr.mxu0 0.0
        %4604 = vmatpush1.msra.mxu0 %v4472
        %4605 = vmatprep.subr.mxu0 0.0
        %4606 = vmatpush1.msra.mxu0 %v4469
        %4607 = vmatprep.subr.mxu0 0.0
        %4608 = vmatpush1.msra.mxu0 %v4464
        %4609 = vmatprep.subr.mxu0 0.0
        %4610 = vmatpush1.msra.mxu0 %v4461
        %4611 = vmatprep.subr.mxu0 0.0
        %4612 = vmatpush1.msra.mxu0 %v4456
        %4613 = vmatprep.subr.mxu0 0.0
        %4614 = vmatpush1.msra.mxu0 %v4453
        %4615 = vmatprep.subr.mxu0 0.0
        %4616 = vmatpush1.msra.mxu0 %v4448
        %4617 = vmatprep.subr.mxu0 0.0
        %4618 = vmatpush1.msra.mxu0 %v4445
        %4619 = vmatprep.subr.mxu0 0.0
        %4620 = vmatpush2.msra.mxu0 %v4568
        %4621 = vmatprep.subr.mxu0 0.0
        %4622 = vmatpush2.msra.mxu0 %v4565
        %4623 = vmatprep.subr.mxu0 0.0
        %4624 = vmatpush2.msra.mxu0 %v4560
        %4625 = vmatprep.subr.mxu0 0.0
        %4626 = vmatpush2.msra.mxu0 %v4557
        %4627 = vmatprep.subr.mxu0 0.0
        %4628 = vmatpush2.msra.mxu0 %v4552
        %4629 = vmatprep.subr.mxu0 0.0
        %4630 = vmatpush2.msra.mxu0 %v4549
        %4631 = vmatprep.subr.mxu0 0.0
        %4632 = vmatpush2.msra.mxu0 %v4544
        %4633 = vmatprep.subr.mxu0 0.0
        %4634 = vmatpush2.msra.mxu0 %v4541
        %4635 = vmatprep.subr.mxu0 0.0
        %4636 = vmatpush2.msra.mxu0 %v4536
        %4637 = vmatprep.subr.mxu0 0.0
        %4638 = vmatpush2.msra.mxu0 %v4533
        %4639 = vmatprep.subr.mxu0 0.0
        %4640 = vmatpush2.msra.mxu0 %v4528
        %4641 = vmatprep.subr.mxu0 0.0
        %4642 = vmatpush2.msra.mxu0 %v4525
        %4643 = vmatprep.subr.mxu0 0.0
        %4644 = vmatpush2.msra.mxu0 %v4520
        %4645 = vmatprep.subr.mxu0 0.0
        %4646 = vmatpush2.msra.mxu0 %v4517
        %4647 = vmatprep.subr.mxu0 0.0
        %4648 = vmatpush2.msra.mxu0 %v4512
        %4649 = vmatprep.subr.mxu0 0.0
        %4650 = vmatpush2.msra.mxu0 %v4509
        %4651 = vmatprep.mubr.f32.mxu0 %v4572
        %4652 = vmatmul.mubr.f32.gmra.mxu0 %v4571
        %v4653 = vpop.f32.mrf.mxu0
        %v4654 = vadd.f32 0.0, %v4653
        %v4655 = vpop.f32.mrf.mxu0
        %4656 = vmatprep.mubr.f32.mxu0 %v4574
        %4657 = vmatmul.mubr.f32.gmra.mxu0 %v4573
        %v4658 = vpop.f32.mrf.mxu0
        %v4659 = vadd.f32 0.0, %v4658
        %v4660 = vpop.f32.mrf.mxu0
        %4661 = vmatprep.mubr.f32.mxu0 %v4576
        %4662 = vmatmul.mubr.f32.gmra.mxu0 %v4575
        %v4663 = vpop.f32.mrf.mxu0
        %v4664 = vadd.f32 0.0, %v4663
        %v4665 = vpop.f32.mrf.mxu0
        %4666 = vmatprep.mubr.f32.mxu0 %v4578
        %4667 = vmatmul.mubr.f32.gmra.mxu0 %v4577
        %v4668 = vpop.f32.mrf.mxu0
        %v4669 = vadd.f32 0.0, %v4668
        %v4670 = vpop.f32.mrf.mxu0
        %4671 = vmatprep.mubr.f32.mxu0 %v4580
        %4672 = vmatmul.mubr.f32.gmra.mxu0 %v4579
        %v4673 = vpop.f32.mrf.mxu0
        %v4674 = vadd.f32 0.0, %v4673
        %v4675 = vpop.f32.mrf.mxu0
        %4676 = vmatprep.mubr.f32.mxu0 %v4582
        %4677 = vmatmul.mubr.f32.gmra.mxu0 %v4581
        %v4678 = vpop.f32.mrf.mxu0
        %v4679 = vadd.f32 0.0, %v4678
        %v4680 = vpop.f32.mrf.mxu0
        %4681 = vmatprep.mubr.f32.mxu0 %v4584
        %4682 = vmatmul.mubr.f32.gmra.mxu0 %v4583
        %v4683 = vpop.f32.mrf.mxu0
        %v4684 = vadd.f32 0.0, %v4683
        %v4685 = vpop.f32.mrf.mxu0
        %4686 = vmatprep.mubr.f32.mxu0 %v4586
        %4687 = vmatmul.mubr.f32.gmra.mxu0 %v4585
        %v4688 = vpop.f32.mrf.mxu0
        %v4689 = vadd.f32 0.0, %v4688
        %v4690 = vpop.f32.mrf.mxu0
        %4691 = vdwg.mxu0
        %v4692 = vld [vmem:[%s8] sm:$0x1]
        %v4694 = vlaneseq
        %v4695 = vshrl.u32 %v4694, 7
        %v4696 = vsub.s32 0, %v4695
        %v4697 = vrot.slane %v4692, %v4696
        %v4699 = vmul.f32 %v4654, %v4697
        %v4700 = vmul.f32 %v4659, %v4697
        %v4701 = vmul.f32 %v4664, %v4697
        %v4702 = vmul.f32 %v4669, %v4697
        %v4703 = vmul.f32 %v4674, %v4697
        %v4704 = vmul.f32 %v4679, %v4697
        %v4705 = vmul.f32 %v4684, %v4697
        %v4706 = vmul.f32 %v4689, %v4697
        %v4707 = vld [vmem:[%s9] sm:$0x1]
        %v4709 = vlaneseq
        %v4710 = vshrl.u32 %v4709, 7
        %v4711 = vsub.s32 0, %v4710
        %v4712 = vrot.slane %v4707, %v4711
        %v4714 = vadd.f32 %v4699, %v4712
        %v4715 = vadd.f32 %v4700, %v4712
        %v4716 = vadd.f32 %v4701, %v4712
        %v4717 = vadd.f32 %v4702, %v4712
        %v4718 = vadd.f32 %v4703, %v4712
        %v4719 = vadd.f32 %v4704, %v4712
        %v4720 = vadd.f32 %v4705, %v4712
        %v4721 = vadd.f32 %v4706, %v4712
        %v4722 = vsel %vm1990, %v4714, 0.0
        %v4723 = vsel %vm1990, %v4715, 0.0
        %v4724 = vadd.f32 %v4722, %v4723
        %v4725 = vsel %vm1990, %v4716, 0.0
        %v4726 = vadd.f32 %v4724, %v4725
        %v4727 = vsel %vm1990, %v4717, 0.0
        %v4728 = vadd.f32 %v4726, %v4727
        %v4729 = vsel %vm1990, %v4718, 0.0
        %v4730 = vadd.f32 %v4728, %v4729
        %v4731 = vsel %vm1990, %v4719, 0.0
        %v4732 = vadd.f32 %v4730, %v4731
        %v4733 = vsel %vm1990, %v4720, 0.0
        %v4734 = vadd.f32 %v4732, %v4733
        %v4735 = vsel %vm1990, %v4721, 0.0
        %v4736 = vadd.f32 %v4734, %v4735
        %v4737 = vrot.slane %v4736, 4
        %v4738 = vadd.f32 %v4736, %v4737
        %v4739 = vrot.slane %v4738, 2
        %v4740 = vadd.f32 %v4738, %v4739
        %v4741 = vrot.slane %v4740, 1
        %v4742 = vadd.f32 %v4740, %v4741
        %v4743 = vrcp.pop 64.0
        %v4744 = vmul.f32 %v4742, %v4743
        %v4745 = vsel %vm1990, %v4714, -inf
        %v4746 = vsel %vm1990, %v4715, -inf
        %v4747 = vsel %vm1990, %v4716, -inf
        %v4748 = vsel %vm1990, %v4717, -inf
        %v4749 = vsel %vm1990, %v4718, -inf
        %v4750 = vmax.f32 %v4745, %v4749
        %v4751 = vsel %vm1990, %v4719, -inf
        %v4752 = vmax.f32 %v4746, %v4751
        %v4753 = vsel %vm1990, %v4720, -inf
        %v4754 = vmax.f32 %v4747, %v4753
        %v4755 = vsel %vm1990, %v4721, -inf
        %v4756 = vmax.f32 %v4748, %v4755
        %v4757 = vmax.f32 %v4750, %v4752
        %v4758 = vmax.f32 %v4754, %v4756
        %v4759 = vmax.f32 %v4757, %v4758
        %v4760 = vrot.slane %v4759, 4
        %v4761 = vmax.f32 %v4759, %v4760
        %v4762 = vrot.slane %v4761, 2
        %v4763 = vmax.f32 %v4761, %v4762
        %v4764 = vrot.slane %v4763, 1
        %v4765 = vmax.f32 %v4763, %v4764
        %vm4766 = vcmask 1040384
        %v4767 = vsel %vm4766, %v4744, %v4765
        %v4768 = vld [vmem:[%s10] sm:$0xff]
        %v4769 = vld [vmem:[%s10 + $0x8] sm:$0xff]
        %v4770 = vld [vmem:[%s10 + $0x10] sm:$0xff]
        %v4771 = vld [vmem:[%s10 + $0x18] sm:$0xff]
        %v4773 = vsel %vm1990, %v4767, 0
        %4775 = vmatprep.subr.mxu0 0.0
        %4776 = vmatpush1.msra.mxu0 0.0
        %4777 = vmatprep.subr.mxu0 0.0
        %4778 = vmatpush1.msra.mxu0 0.0
        %4779 = vmatprep.subr.mxu0 0.0
        %4780 = vmatpush1.msra.mxu0 0.0
        %4781 = vmatprep.subr.mxu0 0.0
        %4782 = vmatpush1.msra.mxu0 0.0
        %4783 = vmatprep.subr.mxu0 0.0
        %4784 = vmatpush1.msra.mxu0 0.0
        %4785 = vmatprep.subr.mxu0 0.0
        %4786 = vmatpush1.msra.mxu0 0.0
        %4787 = vmatprep.subr.mxu0 0.0
        %4788 = vmatpush1.msra.mxu0 0.0
        %4789 = vmatprep.subr.mxu0 0.0
        %4790 = vmatpush1.msra.mxu0 0.0
        %4791 = vmatprep.subr.mxu0 0.0
        %4792 = vmatpush1.msra.mxu0 0.0
        %4793 = vmatprep.subr.mxu0 0.0
        %4794 = vmatpush1.msra.mxu0 0.0
        %4795 = vmatprep.subr.mxu0 0.0
        %4796 = vmatpush1.msra.mxu0 0.0
        %4797 = vmatprep.subr.mxu0 0.0
        %4798 = vmatpush1.msra.mxu0 0.0
        %4799 = vmatprep.subr.mxu0 0.0
        %4800 = vmatpush1.msra.mxu0 %v4771
        %4801 = vmatprep.subr.mxu0 0.0
        %4802 = vmatpush1.msra.mxu0 %v4770
        %4803 = vmatprep.subr.mxu0 0.0
        %4804 = vmatpush1.msra.mxu0 %v4769
        %4805 = vmatprep.subr.mxu0 0.0
        %4806 = vmatpush1.msra.mxu0 %v4768
        %4807 = vmatprep.subr.mxu0 0.0
        %4808 = vmatpush2.msra.mxu0 0.0
        %4809 = vmatprep.subr.mxu0 0.0
        %4810 = vmatpush2.msra.mxu0 0.0
        %4811 = vmatprep.subr.mxu0 0.0
        %4812 = vmatpush2.msra.mxu0 0.0
        %4813 = vmatprep.subr.mxu0 0.0
        %4814 = vmatpush2.msra.mxu0 0.0
        %4815 = vmatprep.subr.mxu0 0.0
        %4816 = vmatpush2.msra.mxu0 0.0
        %4817 = vmatprep.subr.mxu0 0.0
        %4818 = vmatpush2.msra.mxu0 0.0
        %4819 = vmatprep.subr.mxu0 0.0
        %4820 = vmatpush2.msra.mxu0 0.0
        %4821 = vmatprep.subr.mxu0 0.0
        %4822 = vmatpush2.msra.mxu0 0.0
        %4823 = vmatprep.subr.mxu0 0.0
        %4824 = vmatpush2.msra.mxu0 0.0
        %4825 = vmatprep.subr.mxu0 0.0
        %4826 = vmatpush2.msra.mxu0 0.0
        %4827 = vmatprep.subr.mxu0 0.0
        %4828 = vmatpush2.msra.mxu0 0.0
        %4829 = vmatprep.subr.mxu0 0.0
        %4830 = vmatpush2.msra.mxu0 0.0
        %4831 = vmatprep.subr.mxu0 0.0
        %4832 = vmatpush2.msra.mxu0 0.0
        %4833 = vmatprep.subr.mxu0 0.0
        %4834 = vmatpush2.msra.mxu0 0.0
        %4835 = vmatprep.subr.mxu0 0.0
        %4836 = vmatpush2.msra.mxu0 0.0
        %4837 = vmatprep.subr.mxu0 0.0
        %4838 = vmatpush2.msra.mxu0 0.0
        %4839 = vmatprep.mubr.f32.mxu0 0.0
        %4840 = vmatmul.mubr.f32.gmra.mxu0 %v4773
        %v4841 = vpop.f32.mrf.mxu0
        %v4842 = vadd.f32 0.0, %v4841
        %v4843 = vpop.f32.mrf.mxu0
        %4844 = vdwg.mxu0
        %v4845 = vmax.f32 %v4842, 0.0
        %v4846 = vld [vmem:[%s11] sm:$0x3]
        %vm4847 = vcmask 15360
        %v4849 = vsel %vm4847, %v4845, 0
        %vm4851 = vcmask 1041408
        %v4853 = vsel %vm4851, %v4846, 0
        %4855 = vmatprep.subr.mxu0 0.0
        %4856 = vmatpush1.msra.mxu0 0.0
        %4857 = vmatprep.subr.mxu0 0.0
        %4858 = vmatpush1.msra.mxu0 0.0
        %4859 = vmatprep.subr.mxu0 0.0
        %4860 = vmatpush1.msra.mxu0 0.0
        %4861 = vmatprep.subr.mxu0 0.0
        %4862 = vmatpush1.msra.mxu0 0.0
        %4863 = vmatprep.subr.mxu0 0.0
        %4864 = vmatpush1.msra.mxu0 0.0
        %4865 = vmatprep.subr.mxu0 0.0
        %4866 = vmatpush1.msra.mxu0 0.0
        %4867 = vmatprep.subr.mxu0 0.0
        %4868 = vmatpush1.msra.mxu0 0.0
        %4869 = vmatprep.subr.mxu0 0.0
        %4870 = vmatpush1.msra.mxu0 0.0
        %4871 = vmatprep.subr.mxu0 0.0
        %4872 = vmatpush1.msra.mxu0 0.0
        %4873 = vmatprep.subr.mxu0 0.0
        %4874 = vmatpush1.msra.mxu0 0.0
        %4875 = vmatprep.subr.mxu0 0.0
        %4876 = vmatpush1.msra.mxu0 0.0
        %4877 = vmatprep.subr.mxu0 0.0
        %4878 = vmatpush1.msra.mxu0 0.0
        %4879 = vmatprep.subr.mxu0 0.0
        %4880 = vmatpush1.msra.mxu0 0.0
        %4881 = vmatprep.subr.mxu0 0.0
        %4882 = vmatpush1.msra.mxu0 0.0
        %4883 = vmatprep.subr.mxu0 0.0
        %4884 = vmatpush1.msra.mxu0 0.0
        %4885 = vmatprep.subr.mxu0 0.0
        %4886 = vmatpush1.msra.mxu0 %v4853
        %4887 = vmatprep.subr.mxu0 0.0
        %4888 = vmatpush2.msra.mxu0 0.0
        %4889 = vmatprep.subr.mxu0 0.0
        %4890 = vmatpush2.msra.mxu0 0.0
        %4891 = vmatprep.subr.mxu0 0.0
        %4892 = vmatpush2.msra.mxu0 0.0
        %4893 = vmatprep.subr.mxu0 0.0
        %4894 = vmatpush2.msra.mxu0 0.0
        %4895 = vmatprep.subr.mxu0 0.0
        %4896 = vmatpush2.msra.mxu0 0.0
        %4897 = vmatprep.subr.mxu0 0.0
        %4898 = vmatpush2.msra.mxu0 0.0
        %4899 = vmatprep.subr.mxu0 0.0
        %4900 = vmatpush2.msra.mxu0 0.0
        %4901 = vmatprep.subr.mxu0 0.0
        %4902 = vmatpush2.msra.mxu0 0.0
        %4903 = vmatprep.subr.mxu0 0.0
        %4904 = vmatpush2.msra.mxu0 0.0
        %4905 = vmatprep.subr.mxu0 0.0
        %4906 = vmatpush2.msra.mxu0 0.0
        %4907 = vmatprep.subr.mxu0 0.0
        %4908 = vmatpush2.msra.mxu0 0.0
        %4909 = vmatprep.subr.mxu0 0.0
        %4910 = vmatpush2.msra.mxu0 0.0
        %4911 = vmatprep.subr.mxu0 0.0
        %4912 = vmatpush2.msra.mxu0 0.0
        %4913 = vmatprep.subr.mxu0 0.0
        %4914 = vmatpush2.msra.mxu0 0.0
        %4915 = vmatprep.subr.mxu0 0.0
        %4916 = vmatpush2.msra.mxu0 0.0
        %4917 = vmatprep.subr.mxu0 0.0
        %4918 = vmatpush2.msra.mxu0 0.0
        %4919 = vmatprep.mubr.f32.mxu0 0.0
        %4920 = vmatmul.mubr.f32.gmra.mxu0 %v4849
        %v4921 = vpop.f32.mrf.mxu0
        %v4922 = vadd.f32 0.0, %v4921
        %v4923 = vpop.f32.mrf.mxu0
        %4924 = vdwg.mxu0
        %v4926 = vrot.slane %v4922, 1
        %v4928 = vadd.f32 %v4922, %v4926
        %v4929 = vsub.f32 0.0, %v4928
        %v4930 = vmul.f32 %v4929, 1.442695
        %v4931 = vpow.pop %v4930
        %v4932 = vadd.f32 %v4931, 1.0
        %v4933 = vrcp.pop %v4932
        %v4934 = vlaneseq
        %v4935 = vshrl.u32 %v4934, 7
        %v4936 = vsub.s32 0, %v4935
        %v4937 = vrot.slane %v4933, %v4936
        %v4938 = vmul.f32 %v4714, %v4937
        %v4939 = vmul.f32 %v4715, %v4937
        %v4940 = vmul.f32 %v4716, %v4937
        %v4941 = vmul.f32 %v4717, %v4937
        %v4942 = vmul.f32 %v4718, %v4937
        %v4943 = vmul.f32 %v4719, %v4937
        %v4944 = vmul.f32 %v4720, %v4937
        %v4945 = vmul.f32 %v4721, %v4937
        %4946 = vst.msk [vmem:[#allocation4] sm:$0xff] %vm4847, 0.0
        %vm4947 = vcmask 9216
        %4948 = vst.msk [vmem:[#allocation4 + $0x8] sm:$0x3] %vm4947, 0.0
        %4949 = vst.msk [vmem:[#allocation4 + $0x10] sm:$0xff] %vm4847, 0.0
        %4950 = vst.msk [vmem:[#allocation4 + $0x18] sm:$0x3] %vm4947, 0.0
        %4951 = vst.msk [vmem:[#allocation4 + $0x20] sm:$0xff] %vm4847, 0.0
        %4952 = vst.msk [vmem:[#allocation4 + $0x28] sm:$0x3] %vm4947, 0.0
        %4953 = vst.msk [vmem:[#allocation4 + $0x30] sm:$0xff] %vm4847, 0.0
        %4954 = vst.msk [vmem:[#allocation4 + $0x38] sm:$0x3] %vm4947, 0.0
        %4955 = vst.msk [vmem:[#allocation4 + $0x40] sm:$0xff] %vm4847, 0.0
        %4956 = vst.msk [vmem:[#allocation4 + $0x48] sm:$0x3] %vm4947, 0.0
        %4957 = vst.msk [vmem:[#allocation4 + $0x50] sm:$0xff] %vm4847, 0.0
        %4958 = vst.msk [vmem:[#allocation4 + $0x58] sm:$0x3] %vm4947, 0.0
        %4959 = vst.msk [vmem:[#allocation4 + $0x60] sm:$0xff] %vm4847, 0.0
        %4960 = vst.msk [vmem:[#allocation4 + $0x68] sm:$0x3] %vm4947, 0.0
        %4961 = vst.msk [vmem:[#allocation4 + $0x70] sm:$0xff] %vm4847, 0.0
        %4962 = vst.msk [vmem:[#allocation4 + $0x78] sm:$0x3] %vm4947, 0.0
        %4963 = vst.msk [vmem:[#allocation4 + $0x80] sm:$0xff] %vm4847, 0.0
        %4964 = vst.msk [vmem:[#allocation4 + $0x88] sm:$0x3] %vm4947, 0.0
        %4965 = vst.msk [vmem:[#allocation4 + $0x90] sm:$0xff] %vm4847, 0.0
        %4966 = vst.msk [vmem:[#allocation4 + $0x98] sm:$0x3] %vm4947, 0.0
        %v4967 = vsel %vm1990, %v4938, 0.0
        %4968 = vadd.xlane.f32.xlu0 %v4967
        %v4969 = vpop.xlane.xlu0 %4968
        %v4970 = vsel %vm1990, %v4939, 0.0
        %4971 = vadd.xlane.f32.xlu0 %v4970
        %v4972 = vpop.xlane.xlu0 %4971
        %v4973 = vsel %vm1990, %v4940, 0.0
        %4974 = vadd.xlane.f32.xlu0 %v4973
        %v4975 = vpop.xlane.xlu0 %4974
        %v4976 = vsel %vm1990, %v4941, 0.0
        %4977 = vadd.xlane.f32.xlu0 %v4976
        %v4978 = vpop.xlane.xlu0 %4977
        %v4979 = vsel %vm1990, %v4942, 0.0
        %4980 = vadd.xlane.f32.xlu0 %v4979
        %v4981 = vpop.xlane.xlu0 %4980
        %v4982 = vsel %vm1990, %v4943, 0.0
        %4983 = vadd.xlane.f32.xlu0 %v4982
        %v4984 = vpop.xlane.xlu0 %4983
        %v4985 = vsel %vm1990, %v4944, 0.0
        %4986 = vadd.xlane.f32.xlu0 %v4985
        %v4987 = vpop.xlane.xlu0 %4986
        %v4988 = vsel %vm1990, %v4945, 0.0
        %4989 = vadd.xlane.f32.xlu0 %v4988
        %v4990 = vpop.xlane.xlu0 %4989
        %v4991 = vrcp.pop 32.0
        %v4992 = vmul.f32 %v4969, %v4991
        %v4993 = vmul.f32 %v4972, %v4991
        %v4994 = vmul.f32 %v4975, %v4991
        %v4995 = vmul.f32 %v4978, %v4991
        %v4996 = vmul.f32 %v4981, %v4991
        %v4997 = vmul.f32 %v4984, %v4991
        %v4998 = vmul.f32 %v4987, %v4991
        %v4999 = vmul.f32 %v4990, %v4991
        %s5000 = scalar_lea.vmem [#allocation4], 16
        %vm5001 = vcmask 7168
        %5002 = vst.msk [vmem:[%s5000 + $0x1] sm:$0xff] %vm5001, %v4992
        %5003 = vst.msk [vmem:[%s5000 + $0x11] sm:$0xff] %vm5001, %v4993
        %5004 = vst.msk [vmem:[%s5000 + $0x21] sm:$0xff] %vm5001, %v4994
        %5005 = vst.msk [vmem:[%s5000 + $0x31] sm:$0xff] %vm5001, %v4995
        %5006 = vst.msk [vmem:[%s5000 + $0x41] sm:$0xff] %vm5001, %v4996
        %5007 = vst.msk [vmem:[%s5000 + $0x51] sm:$0xff] %vm5001, %v4997
        %5008 = vst.msk [vmem:[%s5000 + $0x61] sm:$0xff] %vm5001, %v4998
        %5009 = vst.msk [vmem:[%s5000 + $0x71] sm:$0xff] %vm5001, %v4999
        %v5010 = vsel %vm1990, %v4938, -inf
        %5011 = vmax.xlane.f32.xlu0 %v5010
        %v5012 = vpop.xlane.xlu0 %5011
        %v5013 = vsel %vm1990, %v4939, -inf
        %5014 = vmax.xlane.f32.xlu0 %v5013
        %v5015 = vpop.xlane.xlu0 %5014
        %v5016 = vsel %vm1990, %v4940, -inf
        %5017 = vmax.xlane.f32.xlu0 %v5016
        %v5018 = vpop.xlane.xlu0 %5017
        %v5019 = vsel %vm1990, %v4941, -inf
        %5020 = vmax.xlane.f32.xlu0 %v5019
        %v5021 = vpop.xlane.xlu0 %5020
        %v5022 = vsel %vm1990, %v4942, -inf
        %5023 = vmax.xlane.f32.xlu0 %v5022
        %v5024 = vpop.xlane.xlu0 %5023
        %v5025 = vsel %vm1990, %v4943, -inf
        %5026 = vmax.xlane.f32.xlu0 %v5025
        %v5027 = vpop.xlane.xlu0 %5026
        %v5028 = vsel %vm1990, %v4944, -inf
        %5029 = vmax.xlane.f32.xlu0 %v5028
        %v5030 = vpop.xlane.xlu0 %5029
        %v5031 = vsel %vm1990, %v4945, -inf
        %5032 = vmax.xlane.f32.xlu0 %v5031
        %v5033 = vpop.xlane.xlu0 %5032
        %vm5034 = vcmask 15368
        %5035 = vst.msk [vmem:[%s5000 + $0x1] sm:$0xff] %vm5034, %v5012
        %5036 = vst.msk [vmem:[%s5000 + $0x11] sm:$0xff] %vm5034, %v5015
        %5037 = vst.msk [vmem:[%s5000 + $0x21] sm:$0xff] %vm5034, %v5018
        %5038 = vst.msk [vmem:[%s5000 + $0x31] sm:$0xff] %vm5034, %v5021
        %5039 = vst.msk [vmem:[%s5000 + $0x41] sm:$0xff] %vm5034, %v5024
        %5040 = vst.msk [vmem:[%s5000 + $0x51] sm:$0xff] %vm5034, %v5027
        %5041 = vst.msk [vmem:[%s5000 + $0x61] sm:$0xff] %vm5034, %v5030
        %5042 = vst.msk [vmem:[%s5000 + $0x71] sm:$0xff] %vm5034, %v5033
        %v5043 = vld [vmem:[#allocation4] sm:$0xff]
        %v5044 = vld [vmem:[#allocation4 + $0x10] sm:$0xff]
        %v5045 = vld [vmem:[#allocation4 + $0x20] sm:$0xff]
        %v5046 = vld [vmem:[#allocation4 + $0x30] sm:$0xff]
        %v5047 = vld [vmem:[#allocation4 + $0x40] sm:$0xff]
        %v5048 = vld [vmem:[#allocation4 + $0x50] sm:$0xff]
        %v5049 = vld [vmem:[#allocation4 + $0x60] sm:$0xff]
        %v5050 = vld [vmem:[#allocation4 + $0x70] sm:$0xff]
        %s5051 = sld [smem:[#allocation9]]
        %v5052 = vstv %s5051
        %v5053 = vmul.f32 %v5043, %v5052
        %v5054 = vmul.f32 %v5044, %v5052
        %v5055 = vmul.f32 %v5045, %v5052
        %v5056 = vmul.f32 %v5046, %v5052
        %v5057 = vmul.f32 %v5047, %v5052
        %v5058 = vmul.f32 %v5048, %v5052
        %v5059 = vmul.f32 %v5049, %v5052
        %v5060 = vmul.f32 %v5050, %v5052
        %v5061 = vadd.f32 %v5053, 0.0
        %v5062 = vadd.f32 %v5054, 0.0
        %v5063 = vadd.f32 %v5055, 0.0
        %v5064 = vadd.f32 %v5056, 0.0
        %v5065 = vadd.f32 %v5057, 0.0
        %v5066 = vadd.f32 %v5058, 0.0
        %v5067 = vadd.f32 %v5059, 0.0
        %v5068 = vadd.f32 %v5060, 0.0
        %s5069 = sld [smem:[#allocation9 + $0x1]]
        %v5070 = vstv %s5069
        %v5071 = vmul.f32 %v5043, %v5070
        %v5072 = vmul.f32 %v5044, %v5070
        %v5073 = vmul.f32 %v5045, %v5070
        %v5074 = vmul.f32 %v5046, %v5070
        %v5075 = vmul.f32 %v5047, %v5070
        %v5076 = vmul.f32 %v5048, %v5070
        %v5077 = vmul.f32 %v5049, %v5070
        %v5078 = vmul.f32 %v5050, %v5070
        %5087 = vrot.lane.b32.xlu0 %v5071, 127
        %v5088 = vpop.permute.xlu0 %5087
        %5089 = vrot.lane.b32.xlu0 %v5072, 127
        %v5090 = vpop.permute.xlu0 %5089
        %5091 = vrot.lane.b32.xlu0 %v5073, 127
        %v5092 = vpop.permute.xlu0 %5091
        %5093 = vrot.lane.b32.xlu0 %v5074, 127
        %v5094 = vpop.permute.xlu0 %5093
        %5095 = vrot.lane.b32.xlu0 %v5075, 127
        %v5096 = vpop.permute.xlu0 %5095
        %5097 = vrot.lane.b32.xlu0 %v5076, 127
        %v5098 = vpop.permute.xlu0 %5097
        %5099 = vrot.lane.b32.xlu0 %v5077, 127
        %v5100 = vpop.permute.xlu0 %5099
        %5101 = vrot.lane.b32.xlu0 %v5078, 127
        %v5102 = vpop.permute.xlu0 %5101
        %v5111 = vadd.f32 %v5061, %v5088
        %v5112 = vadd.f32 %v5062, %v5090
        %v5113 = vadd.f32 %v5063, %v5092
        %v5114 = vadd.f32 %v5064, %v5094
        %v5115 = vadd.f32 %v5065, %v5096
        %v5116 = vadd.f32 %v5066, %v5098
        %v5117 = vadd.f32 %v5067, %v5100
        %v5118 = vadd.f32 %v5068, %v5102
        %v5119 = vld [vmem:[#allocation4 + $0x1] sm:$0xff]
        %v5120 = vld [vmem:[#allocation4 + $0x11] sm:$0xff]
        %v5121 = vld [vmem:[#allocation4 + $0x21] sm:$0xff]
        %v5122 = vld [vmem:[#allocation4 + $0x31] sm:$0xff]
        %v5123 = vld [vmem:[#allocation4 + $0x41] sm:$0xff]
        %v5124 = vld [vmem:[#allocation4 + $0x51] sm:$0xff]
        %v5125 = vld [vmem:[#allocation4 + $0x61] sm:$0xff]
        %v5126 = vld [vmem:[#allocation4 + $0x71] sm:$0xff]
        %s5127 = sld [smem:[#allocation9 + $0x80]]
        %v5128 = vstv %s5127
        %v5129 = vmul.f32 %v5119, %v5128
        %v5130 = vmul.f32 %v5120, %v5128
        %v5131 = vmul.f32 %v5121, %v5128
        %v5132 = vmul.f32 %v5122, %v5128
        %v5133 = vmul.f32 %v5123, %v5128
        %v5134 = vmul.f32 %v5124, %v5128
        %v5135 = vmul.f32 %v5125, %v5128
        %v5136 = vmul.f32 %v5126, %v5128
        %v5137 = vadd.f32 %v5111, %v5129
        %v5138 = vadd.f32 %v5112, %v5130
        %v5139 = vadd.f32 %v5113, %v5131
        %v5140 = vadd.f32 %v5114, %v5132
        %v5141 = vadd.f32 %v5115, %v5133
        %v5142 = vadd.f32 %v5116, %v5134
        %v5143 = vadd.f32 %v5117, %v5135
        %v5144 = vadd.f32 %v5118, %v5136
        %s5145 = sld [smem:[#allocation9 + $0x81]]
        %v5146 = vstv %s5145
        %v5147 = vmul.f32 %v5119, %v5146
        %v5148 = vmul.f32 %v5120, %v5146
        %v5149 = vmul.f32 %v5121, %v5146
        %v5150 = vmul.f32 %v5122, %v5146
        %v5151 = vmul.f32 %v5123, %v5146
        %v5152 = vmul.f32 %v5124, %v5146
        %v5153 = vmul.f32 %v5125, %v5146
        %v5154 = vmul.f32 %v5126, %v5146
        %5163 = vrot.lane.b32.xlu0 %v5147, 127
        %v5164 = vpop.permute.xlu0 %5163
        %5165 = vrot.lane.b32.xlu0 %v5148, 127
        %v5166 = vpop.permute.xlu0 %5165
        %5167 = vrot.lane.b32.xlu0 %v5149, 127
        %v5168 = vpop.permute.xlu0 %5167
        %5169 = vrot.lane.b32.xlu0 %v5150, 127
        %v5170 = vpop.permute.xlu0 %5169
        %5171 = vrot.lane.b32.xlu0 %v5151, 127
        %v5172 = vpop.permute.xlu0 %5171
        %5173 = vrot.lane.b32.xlu0 %v5152, 127
        %v5174 = vpop.permute.xlu0 %5173
        %5175 = vrot.lane.b32.xlu0 %v5153, 127
        %v5176 = vpop.permute.xlu0 %5175
        %5177 = vrot.lane.b32.xlu0 %v5154, 127
        %v5178 = vpop.permute.xlu0 %5177
        %v5187 = vadd.f32 %v5137, %v5164
        %v5188 = vadd.f32 %v5138, %v5166
        %v5189 = vadd.f32 %v5139, %v5168
        %v5190 = vadd.f32 %v5140, %v5170
        %v5191 = vadd.f32 %v5141, %v5172
        %v5192 = vadd.f32 %v5142, %v5174
        %v5193 = vadd.f32 %v5143, %v5176
        %v5194 = vadd.f32 %v5144, %v5178
        %v5195 = vld [vmem:[#allocation4 + $0x2] sm:$0xff]
        %v5196 = vld [vmem:[#allocation4 + $0x12] sm:$0xff]
        %v5197 = vld [vmem:[#allocation4 + $0x22] sm:$0xff]
        %v5198 = vld [vmem:[#allocation4 + $0x32] sm:$0xff]
        %v5199 = vld [vmem:[#allocation4 + $0x42] sm:$0xff]
        %v5200 = vld [vmem:[#allocation4 + $0x52] sm:$0xff]
        %v5201 = vld [vmem:[#allocation4 + $0x62] sm:$0xff]
        %v5202 = vld [vmem:[#allocation4 + $0x72] sm:$0xff]
        %s5203 = sld [smem:[#allocation9 + $0x100]]
        %v5204 = vstv %s5203
        %v5205 = vmul.f32 %v5195, %v5204
        %v5206 = vmul.f32 %v5196, %v5204
        %v5207 = vmul.f32 %v5197, %v5204
        %v5208 = vmul.f32 %v5198, %v5204
        %v5209 = vmul.f32 %v5199, %v5204
        %v5210 = vmul.f32 %v5200, %v5204
        %v5211 = vmul.f32 %v5201, %v5204
        %v5212 = vmul.f32 %v5202, %v5204
        %v5213 = vadd.f32 %v5187, %v5205
        %v5214 = vadd.f32 %v5188, %v5206
        %v5215 = vadd.f32 %v5189, %v5207
        %v5216 = vadd.f32 %v5190, %v5208
        %v5217 = vadd.f32 %v5191, %v5209
        %v5218 = vadd.f32 %v5192, %v5210
        %v5219 = vadd.f32 %v5193, %v5211
        %v5220 = vadd.f32 %v5194, %v5212
        %s5221 = sld [smem:[#allocation9 + $0x101]]
        %v5222 = vstv %s5221
        %v5223 = vmul.f32 %v5195, %v5222
        %v5224 = vmul.f32 %v5196, %v5222
        %v5225 = vmul.f32 %v5197, %v5222
        %v5226 = vmul.f32 %v5198, %v5222
        %v5227 = vmul.f32 %v5199, %v5222
        %v5228 = vmul.f32 %v5200, %v5222
        %v5229 = vmul.f32 %v5201, %v5222
        %v5230 = vmul.f32 %v5202, %v5222
        %5239 = vrot.lane.b32.xlu0 %v5223, 127
        %v5240 = vpop.permute.xlu0 %5239
        %5241 = vrot.lane.b32.xlu0 %v5224, 127
        %v5242 = vpop.permute.xlu0 %5241
        %5243 = vrot.lane.b32.xlu0 %v5225, 127
        %v5244 = vpop.permute.xlu0 %5243
        %5245 = vrot.lane.b32.xlu0 %v5226, 127
        %v5246 = vpop.permute.xlu0 %5245
        %5247 = vrot.lane.b32.xlu0 %v5227, 127
        %v5248 = vpop.permute.xlu0 %5247
        %5249 = vrot.lane.b32.xlu0 %v5228, 127
        %v5250 = vpop.permute.xlu0 %5249
        %5251 = vrot.lane.b32.xlu0 %v5229, 127
        %v5252 = vpop.permute.xlu0 %5251
        %5253 = vrot.lane.b32.xlu0 %v5230, 127
        %v5254 = vpop.permute.xlu0 %5253
        %v5263 = vadd.f32 %v5213, %v5240
        %v5264 = vadd.f32 %v5214, %v5242
        %v5265 = vadd.f32 %v5215, %v5244
        %v5266 = vadd.f32 %v5216, %v5246
        %v5267 = vadd.f32 %v5217, %v5248
        %v5268 = vadd.f32 %v5218, %v5250
        %v5269 = vadd.f32 %v5219, %v5252
        %v5270 = vadd.f32 %v5220, %v5254
        %v5271 = vld [vmem:[%s5000] sm:$0xff]
        %v5272 = vld [vmem:[%s5000 + $0x10] sm:$0xff]
        %v5273 = vld [vmem:[%s5000 + $0x20] sm:$0xff]
        %v5274 = vld [vmem:[%s5000 + $0x30] sm:$0xff]
        %v5275 = vld [vmem:[%s5000 + $0x40] sm:$0xff]
        %v5276 = vld [vmem:[%s5000 + $0x50] sm:$0xff]
        %v5277 = vld [vmem:[%s5000 + $0x60] sm:$0xff]
        %v5278 = vld [vmem:[%s5000 + $0x70] sm:$0xff]
        %s5279 = sld [smem:[#allocation9 + $0x180]]
        %v5280 = vstv %s5279
        %v5281 = vmul.f32 %v5271, %v5280
        %v5282 = vmul.f32 %v5272, %v5280
        %v5283 = vmul.f32 %v5273, %v5280
        %v5284 = vmul.f32 %v5274, %v5280
        %v5285 = vmul.f32 %v5275, %v5280
        %v5286 = vmul.f32 %v5276, %v5280
        %v5287 = vmul.f32 %v5277, %v5280
        %v5288 = vmul.f32 %v5278, %v5280
        %v5289 = vadd.f32 %v5263, %v5281
        %v5290 = vadd.f32 %v5264, %v5282
        %v5291 = vadd.f32 %v5265, %v5283
        %v5292 = vadd.f32 %v5266, %v5284
        %v5293 = vadd.f32 %v5267, %v5285
        %v5294 = vadd.f32 %v5268, %v5286
        %v5295 = vadd.f32 %v5269, %v5287
        %v5296 = vadd.f32 %v5270, %v5288
        %s5297 = sld [smem:[#allocation9 + $0x181]]
        %v5298 = vstv %s5297
        %v5299 = vmul.f32 %v5271, %v5298
        %v5300 = vmul.f32 %v5272, %v5298
        %v5301 = vmul.f32 %v5273, %v5298
        %v5302 = vmul.f32 %v5274, %v5298
        %v5303 = vmul.f32 %v5275, %v5298
        %v5304 = vmul.f32 %v5276, %v5298
        %v5305 = vmul.f32 %v5277, %v5298
        %v5306 = vmul.f32 %v5278, %v5298
        %5315 = vrot.lane.b32.xlu0 %v5299, 127
        %v5316 = vpop.permute.xlu0 %5315
        %5317 = vrot.lane.b32.xlu0 %v5300, 127
        %v5318 = vpop.permute.xlu0 %5317
        %5319 = vrot.lane.b32.xlu0 %v5301, 127
        %v5320 = vpop.permute.xlu0 %5319
        %5321 = vrot.lane.b32.xlu0 %v5302, 127
        %v5322 = vpop.permute.xlu0 %5321
        %5323 = vrot.lane.b32.xlu0 %v5303, 127
        %v5324 = vpop.permute.xlu0 %5323
        %5325 = vrot.lane.b32.xlu0 %v5304, 127
        %v5326 = vpop.permute.xlu0 %5325
        %5327 = vrot.lane.b32.xlu0 %v5305, 127
        %v5328 = vpop.permute.xlu0 %5327
        %5329 = vrot.lane.b32.xlu0 %v5306, 127
        %v5330 = vpop.permute.xlu0 %5329
        %v5339 = vadd.f32 %v5289, %v5316
        %v5340 = vadd.f32 %v5290, %v5318
        %v5341 = vadd.f32 %v5291, %v5320
        %v5342 = vadd.f32 %v5292, %v5322
        %v5343 = vadd.f32 %v5293, %v5324
        %v5344 = vadd.f32 %v5294, %v5326
        %v5345 = vadd.f32 %v5295, %v5328
        %v5346 = vadd.f32 %v5296, %v5330
        %v5347 = vld [vmem:[%s5000 + $0x1] sm:$0xff]
        %v5348 = vld [vmem:[%s5000 + $0x11] sm:$0xff]
        %v5349 = vld [vmem:[%s5000 + $0x21] sm:$0xff]
        %v5350 = vld [vmem:[%s5000 + $0x31] sm:$0xff]
        %v5351 = vld [vmem:[%s5000 + $0x41] sm:$0xff]
        %v5352 = vld [vmem:[%s5000 + $0x51] sm:$0xff]
        %v5353 = vld [vmem:[%s5000 + $0x61] sm:$0xff]
        %v5354 = vld [vmem:[%s5000 + $0x71] sm:$0xff]
        %s5355 = sld [smem:[#allocation9 + $0x200]]
        %v5356 = vstv %s5355
        %v5357 = vmul.f32 %v5347, %v5356
        %v5358 = vmul.f32 %v5348, %v5356
        %v5359 = vmul.f32 %v5349, %v5356
        %v5360 = vmul.f32 %v5350, %v5356
        %v5361 = vmul.f32 %v5351, %v5356
        %v5362 = vmul.f32 %v5352, %v5356
        %v5363 = vmul.f32 %v5353, %v5356
        %v5364 = vmul.f32 %v5354, %v5356
        %v5365 = vadd.f32 %v5339, %v5357
        %v5366 = vadd.f32 %v5340, %v5358
        %v5367 = vadd.f32 %v5341, %v5359
        %v5368 = vadd.f32 %v5342, %v5360
        %v5369 = vadd.f32 %v5343, %v5361
        %v5370 = vadd.f32 %v5344, %v5362
        %v5371 = vadd.f32 %v5345, %v5363
        %v5372 = vadd.f32 %v5346, %v5364
        %s5373 = sld [smem:[#allocation9 + $0x201]]
        %v5374 = vstv %s5373
        %v5375 = vmul.f32 %v5347, %v5374
        %v5376 = vmul.f32 %v5348, %v5374
        %v5377 = vmul.f32 %v5349, %v5374
        %v5378 = vmul.f32 %v5350, %v5374
        %v5379 = vmul.f32 %v5351, %v5374
        %v5380 = vmul.f32 %v5352, %v5374
        %v5381 = vmul.f32 %v5353, %v5374
        %v5382 = vmul.f32 %v5354, %v5374
        %5391 = vrot.lane.b32.xlu0 %v5375, 127
        %v5392 = vpop.permute.xlu0 %5391
        %5393 = vrot.lane.b32.xlu0 %v5376, 127
        %v5394 = vpop.permute.xlu0 %5393
        %5395 = vrot.lane.b32.xlu0 %v5377, 127
        %v5396 = vpop.permute.xlu0 %5395
        %5397 = vrot.lane.b32.xlu0 %v5378, 127
        %v5398 = vpop.permute.xlu0 %5397
        %5399 = vrot.lane.b32.xlu0 %v5379, 127
        %v5400 = vpop.permute.xlu0 %5399
        %5401 = vrot.lane.b32.xlu0 %v5380, 127
        %v5402 = vpop.permute.xlu0 %5401
        %5403 = vrot.lane.b32.xlu0 %v5381, 127
        %v5404 = vpop.permute.xlu0 %5403
        %5405 = vrot.lane.b32.xlu0 %v5382, 127
        %v5406 = vpop.permute.xlu0 %5405
        %v5415 = vadd.f32 %v5365, %v5392
        %v5416 = vadd.f32 %v5366, %v5394
        %v5417 = vadd.f32 %v5367, %v5396
        %v5418 = vadd.f32 %v5368, %v5398
        %v5419 = vadd.f32 %v5369, %v5400
        %v5420 = vadd.f32 %v5370, %v5402
        %v5421 = vadd.f32 %v5371, %v5404
        %v5422 = vadd.f32 %v5372, %v5406
        %v5423 = vld [vmem:[%s5000 + $0x2] sm:$0xff]
        %v5424 = vld [vmem:[%s5000 + $0x12] sm:$0xff]
        %v5425 = vld [vmem:[%s5000 + $0x22] sm:$0xff]
        %v5426 = vld [vmem:[%s5000 + $0x32] sm:$0xff]
        %v5427 = vld [vmem:[%s5000 + $0x42] sm:$0xff]
        %v5428 = vld [vmem:[%s5000 + $0x52] sm:$0xff]
        %v5429 = vld [vmem:[%s5000 + $0x62] sm:$0xff]
        %v5430 = vld [vmem:[%s5000 + $0x72] sm:$0xff]
        %s5431 = sld [smem:[#allocation9 + $0x280]]
        %v5432 = vstv %s5431
        %v5433 = vmul.f32 %v5423, %v5432
        %v5434 = vmul.f32 %v5424, %v5432
        %v5435 = vmul.f32 %v5425, %v5432
        %v5436 = vmul.f32 %v5426, %v5432
        %v5437 = vmul.f32 %v5427, %v5432
        %v5438 = vmul.f32 %v5428, %v5432
        %v5439 = vmul.f32 %v5429, %v5432
        %v5440 = vmul.f32 %v5430, %v5432
        %v5441 = vadd.f32 %v5415, %v5433
        %v5442 = vadd.f32 %v5416, %v5434
        %v5443 = vadd.f32 %v5417, %v5435
        %v5444 = vadd.f32 %v5418, %v5436
        %v5445 = vadd.f32 %v5419, %v5437
        %v5446 = vadd.f32 %v5420, %v5438
        %v5447 = vadd.f32 %v5421, %v5439
        %v5448 = vadd.f32 %v5422, %v5440
        %s5449 = sld [smem:[#allocation9 + $0x281]]
        %v5450 = vstv %s5449
        %v5451 = vmul.f32 %v5423, %v5450
        %v5452 = vmul.f32 %v5424, %v5450
        %v5453 = vmul.f32 %v5425, %v5450
        %v5454 = vmul.f32 %v5426, %v5450
        %v5455 = vmul.f32 %v5427, %v5450
        %v5456 = vmul.f32 %v5428, %v5450
        %v5457 = vmul.f32 %v5429, %v5450
        %v5458 = vmul.f32 %v5430, %v5450
        %5467 = vrot.lane.b32.xlu0 %v5451, 127
        %v5468 = vpop.permute.xlu0 %5467
        %5469 = vrot.lane.b32.xlu0 %v5452, 127
        %v5470 = vpop.permute.xlu0 %5469
        %5471 = vrot.lane.b32.xlu0 %v5453, 127
        %v5472 = vpop.permute.xlu0 %5471
        %5473 = vrot.lane.b32.xlu0 %v5454, 127
        %v5474 = vpop.permute.xlu0 %5473
        %5475 = vrot.lane.b32.xlu0 %v5455, 127
        %v5476 = vpop.permute.xlu0 %5475
        %5477 = vrot.lane.b32.xlu0 %v5456, 127
        %v5478 = vpop.permute.xlu0 %5477
        %5479 = vrot.lane.b32.xlu0 %v5457, 127
        %v5480 = vpop.permute.xlu0 %5479
        %5481 = vrot.lane.b32.xlu0 %v5458, 127
        %v5482 = vpop.permute.xlu0 %5481
        %v5491 = vadd.f32 %v5441, %v5468
        %v5492 = vadd.f32 %v5442, %v5470
        %v5493 = vadd.f32 %v5443, %v5472
        %v5494 = vadd.f32 %v5444, %v5474
        %v5495 = vadd.f32 %v5445, %v5476
        %v5496 = vadd.f32 %v5446, %v5478
        %v5497 = vadd.f32 %v5447, %v5480
        %v5498 = vadd.f32 %v5448, %v5482
        %s5499 = scalar_lea.vmem [#allocation4], 32
        %v5500 = vld [vmem:[%s5499] sm:$0xff]
        %v5501 = vld [vmem:[%s5499 + $0x10] sm:$0xff]
        %v5502 = vld [vmem:[%s5499 + $0x20] sm:$0xff]
        %v5503 = vld [vmem:[%s5499 + $0x30] sm:$0xff]
        %v5504 = vld [vmem:[%s5499 + $0x40] sm:$0xff]
        %v5505 = vld [vmem:[%s5499 + $0x50] sm:$0xff]
        %v5506 = vld [vmem:[%s5499 + $0x60] sm:$0xff]
        %v5507 = vld [vmem:[%s5499 + $0x70] sm:$0xff]
        %s5508 = sld [smem:[#allocation9 + $0x300]]
        %v5509 = vstv %s5508
        %v5510 = vmul.f32 %v5500, %v5509
        %v5511 = vmul.f32 %v5501, %v5509
        %v5512 = vmul.f32 %v5502, %v5509
        %v5513 = vmul.f32 %v5503, %v5509
        %v5514 = vmul.f32 %v5504, %v5509
        %v5515 = vmul.f32 %v5505, %v5509
        %v5516 = vmul.f32 %v5506, %v5509
        %v5517 = vmul.f32 %v5507, %v5509
        %v5518 = vadd.f32 %v5491, %v5510
        %v5519 = vadd.f32 %v5492, %v5511
        %v5520 = vadd.f32 %v5493, %v5512
        %v5521 = vadd.f32 %v5494, %v5513
        %v5522 = vadd.f32 %v5495, %v5514
        %v5523 = vadd.f32 %v5496, %v5515
        %v5524 = vadd.f32 %v5497, %v5516
        %v5525 = vadd.f32 %v5498, %v5517
        %s5526 = sld [smem:[#allocation9 + $0x301]]
        %v5527 = vstv %s5526
        %v5528 = vmul.f32 %v5500, %v5527
        %v5529 = vmul.f32 %v5501, %v5527
        %v5530 = vmul.f32 %v5502, %v5527
        %v5531 = vmul.f32 %v5503, %v5527
        %v5532 = vmul.f32 %v5504, %v5527
        %v5533 = vmul.f32 %v5505, %v5527
        %v5534 = vmul.f32 %v5506, %v5527
        %v5535 = vmul.f32 %v5507, %v5527
        %5544 = vrot.lane.b32.xlu0 %v5528, 127
        %v5545 = vpop.permute.xlu0 %5544
        %5546 = vrot.lane.b32.xlu0 %v5529, 127
        %v5547 = vpop.permute.xlu0 %5546
        %5548 = vrot.lane.b32.xlu0 %v5530, 127
        %v5549 = vpop.permute.xlu0 %5548
        %5550 = vrot.lane.b32.xlu0 %v5531, 127
        %v5551 = vpop.permute.xlu0 %5550
        %5552 = vrot.lane.b32.xlu0 %v5532, 127
        %v5553 = vpop.permute.xlu0 %5552
        %5554 = vrot.lane.b32.xlu0 %v5533, 127
        %v5555 = vpop.permute.xlu0 %5554
        %5556 = vrot.lane.b32.xlu0 %v5534, 127
        %v5557 = vpop.permute.xlu0 %5556
        %5558 = vrot.lane.b32.xlu0 %v5535, 127
        %v5559 = vpop.permute.xlu0 %5558
        %v5568 = vadd.f32 %v5518, %v5545
        %v5569 = vadd.f32 %v5519, %v5547
        %v5570 = vadd.f32 %v5520, %v5549
        %v5571 = vadd.f32 %v5521, %v5551
        %v5572 = vadd.f32 %v5522, %v5553
        %v5573 = vadd.f32 %v5523, %v5555
        %v5574 = vadd.f32 %v5524, %v5557
        %v5575 = vadd.f32 %v5525, %v5559
        %v5576 = vld [vmem:[%s5499 + $0x1] sm:$0xff]
        %v5577 = vld [vmem:[%s5499 + $0x11] sm:$0xff]
        %v5578 = vld [vmem:[%s5499 + $0x21] sm:$0xff]
        %v5579 = vld [vmem:[%s5499 + $0x31] sm:$0xff]
        %v5580 = vld [vmem:[%s5499 + $0x41] sm:$0xff]
        %v5581 = vld [vmem:[%s5499 + $0x51] sm:$0xff]
        %v5582 = vld [vmem:[%s5499 + $0x61] sm:$0xff]
        %v5583 = vld [vmem:[%s5499 + $0x71] sm:$0xff]
        %s5584 = sld [smem:[#allocation9 + $0x380]]
        %v5585 = vstv %s5584
        %v5586 = vmul.f32 %v5576, %v5585
        %v5587 = vmul.f32 %v5577, %v5585
        %v5588 = vmul.f32 %v5578, %v5585
        %v5589 = vmul.f32 %v5579, %v5585
        %v5590 = vmul.f32 %v5580, %v5585
        %v5591 = vmul.f32 %v5581, %v5585
        %v5592 = vmul.f32 %v5582, %v5585
        %v5593 = vmul.f32 %v5583, %v5585
        %v5594 = vadd.f32 %v5568, %v5586
        %v5595 = vadd.f32 %v5569, %v5587
        %v5596 = vadd.f32 %v5570, %v5588
        %v5597 = vadd.f32 %v5571, %v5589
        %v5598 = vadd.f32 %v5572, %v5590
        %v5599 = vadd.f32 %v5573, %v5591
        %v5600 = vadd.f32 %v5574, %v5592
        %v5601 = vadd.f32 %v5575, %v5593
        %s5602 = sld [smem:[#allocation9 + $0x381]]
        %v5603 = vstv %s5602
        %v5604 = vmul.f32 %v5576, %v5603
        %v5605 = vmul.f32 %v5577, %v5603
        %v5606 = vmul.f32 %v5578, %v5603
        %v5607 = vmul.f32 %v5579, %v5603
        %v5608 = vmul.f32 %v5580, %v5603
        %v5609 = vmul.f32 %v5581, %v5603
        %v5610 = vmul.f32 %v5582, %v5603
        %v5611 = vmul.f32 %v5583, %v5603
        %5620 = vrot.lane.b32.xlu0 %v5604, 127
        %v5621 = vpop.permute.xlu0 %5620
        %5622 = vrot.lane.b32.xlu0 %v5605, 127
        %v5623 = vpop.permute.xlu0 %5622
        %5624 = vrot.lane.b32.xlu0 %v5606, 127
        %v5625 = vpop.permute.xlu0 %5624
        %5626 = vrot.lane.b32.xlu0 %v5607, 127
        %v5627 = vpop.permute.xlu0 %5626
        %5628 = vrot.lane.b32.xlu0 %v5608, 127
        %v5629 = vpop.permute.xlu0 %5628
        %5630 = vrot.lane.b32.xlu0 %v5609, 127
        %v5631 = vpop.permute.xlu0 %5630
        %5632 = vrot.lane.b32.xlu0 %v5610, 127
        %v5633 = vpop.permute.xlu0 %5632
        %5634 = vrot.lane.b32.xlu0 %v5611, 127
        %v5635 = vpop.permute.xlu0 %5634
        %v5644 = vadd.f32 %v5594, %v5621
        %v5645 = vadd.f32 %v5595, %v5623
        %v5646 = vadd.f32 %v5596, %v5625
        %v5647 = vadd.f32 %v5597, %v5627
        %v5648 = vadd.f32 %v5598, %v5629
        %v5649 = vadd.f32 %v5599, %v5631
        %v5650 = vadd.f32 %v5600, %v5633
        %v5651 = vadd.f32 %v5601, %v5635
        %v5652 = vld [vmem:[%s5499 + $0x2] sm:$0xff]
        %v5653 = vld [vmem:[%s5499 + $0x12] sm:$0xff]
        %v5654 = vld [vmem:[%s5499 + $0x22] sm:$0xff]
        %v5655 = vld [vmem:[%s5499 + $0x32] sm:$0xff]
        %v5656 = vld [vmem:[%s5499 + $0x42] sm:$0xff]
        %v5657 = vld [vmem:[%s5499 + $0x52] sm:$0xff]
        %v5658 = vld [vmem:[%s5499 + $0x62] sm:$0xff]
        %v5659 = vld [vmem:[%s5499 + $0x72] sm:$0xff]
        %s5660 = sld [smem:[#allocation9 + $0x400]]
        %v5661 = vstv %s5660
        %v5662 = vmul.f32 %v5652, %v5661
        %v5663 = vmul.f32 %v5653, %v5661
        %v5664 = vmul.f32 %v5654, %v5661
        %v5665 = vmul.f32 %v5655, %v5661
        %v5666 = vmul.f32 %v5656, %v5661
        %v5667 = vmul.f32 %v5657, %v5661
        %v5668 = vmul.f32 %v5658, %v5661
        %v5669 = vmul.f32 %v5659, %v5661
        %v5670 = vadd.f32 %v5644, %v5662
        %v5671 = vadd.f32 %v5645, %v5663
        %v5672 = vadd.f32 %v5646, %v5664
        %v5673 = vadd.f32 %v5647, %v5665
        %v5674 = vadd.f32 %v5648, %v5666
        %v5675 = vadd.f32 %v5649, %v5667
        %v5676 = vadd.f32 %v5650, %v5668
        %v5677 = vadd.f32 %v5651, %v5669
        %s5678 = sld [smem:[#allocation9 + $0x401]]
        %v5679 = vstv %s5678
        %v5680 = vmul.f32 %v5652, %v5679
        %v5681 = vmul.f32 %v5653, %v5679
        %v5682 = vmul.f32 %v5654, %v5679
        %v5683 = vmul.f32 %v5655, %v5679
        %v5684 = vmul.f32 %v5656, %v5679
        %v5685 = vmul.f32 %v5657, %v5679
        %v5686 = vmul.f32 %v5658, %v5679
        %v5687 = vmul.f32 %v5659, %v5679
        %5696 = vrot.lane.b32.xlu0 %v5680, 127
        %v5697 = vpop.permute.xlu0 %5696
        %5698 = vrot.lane.b32.xlu0 %v5681, 127
        %v5699 = vpop.permute.xlu0 %5698
        %5700 = vrot.lane.b32.xlu0 %v5682, 127
        %v5701 = vpop.permute.xlu0 %5700
        %5702 = vrot.lane.b32.xlu0 %v5683, 127
        %v5703 = vpop.permute.xlu0 %5702
        %5704 = vrot.lane.b32.xlu0 %v5684, 127
        %v5705 = vpop.permute.xlu0 %5704
        %5706 = vrot.lane.b32.xlu0 %v5685, 127
        %v5707 = vpop.permute.xlu0 %5706
        %5708 = vrot.lane.b32.xlu0 %v5686, 127
        %v5709 = vpop.permute.xlu0 %5708
        %5710 = vrot.lane.b32.xlu0 %v5687, 127
        %v5711 = vpop.permute.xlu0 %5710
        %v5720 = vadd.f32 %v5670, %v5697
        %v5721 = vadd.f32 %v5671, %v5699
        %v5722 = vadd.f32 %v5672, %v5701
        %v5723 = vadd.f32 %v5673, %v5703
        %v5724 = vadd.f32 %v5674, %v5705
        %v5725 = vadd.f32 %v5675, %v5707
        %v5726 = vadd.f32 %v5676, %v5709
        %v5727 = vadd.f32 %v5677, %v5711
        %v5728 = vsub.f32 0.0, %v5720
        %v5729 = vsub.f32 0.0, %v5721
        %v5730 = vsub.f32 0.0, %v5722
        %v5731 = vsub.f32 0.0, %v5723
        %v5732 = vsub.f32 0.0, %v5724
        %v5733 = vsub.f32 0.0, %v5725
        %v5734 = vsub.f32 0.0, %v5726
        %v5735 = vsub.f32 0.0, %v5727
        %v5736 = vmul.f32 %v5728, 1.442695
        %v5737 = vpow.pop %v5736
        %v5738 = vmul.f32 %v5729, 1.442695
        %v5739 = vpow.pop %v5738
        %v5740 = vmul.f32 %v5730, 1.442695
        %v5741 = vpow.pop %v5740
        %v5742 = vmul.f32 %v5731, 1.442695
        %v5743 = vpow.pop %v5742
        %v5744 = vmul.f32 %v5732, 1.442695
        %v5745 = vpow.pop %v5744
        %v5746 = vmul.f32 %v5733, 1.442695
        %v5747 = vpow.pop %v5746
        %v5748 = vmul.f32 %v5734, 1.442695
        %v5749 = vpow.pop %v5748
        %v5750 = vmul.f32 %v5735, 1.442695
        %v5751 = vpow.pop %v5750
        %v5752 = vadd.f32 %v5737, 1.0
        %v5753 = vadd.f32 %v5739, 1.0
        %v5754 = vadd.f32 %v5741, 1.0
        %v5755 = vadd.f32 %v5743, 1.0
        %v5756 = vadd.f32 %v5745, 1.0
        %v5757 = vadd.f32 %v5747, 1.0
        %v5758 = vadd.f32 %v5749, 1.0
        %v5759 = vadd.f32 %v5751, 1.0
        %v5760 = vrcp.pop %v5752
        %v5761 = vrcp.pop %v5753
        %v5762 = vrcp.pop %v5754
        %v5763 = vrcp.pop %v5755
        %v5764 = vrcp.pop %v5756
        %v5765 = vrcp.pop %v5757
        %v5766 = vrcp.pop %v5758
        %v5767 = vrcp.pop %v5759
        %5769 = vset.pattern.permute.xlu0 0
        %5770 = vperm.xlu0 %5769, %v5760
        %v5771 = vpop.permute.xlu0 %5770
        %5774 = vset.pattern.permute.xlu0 0
        %5775 = vperm.xlu0 %5774, %v5761
        %v5776 = vpop.permute.xlu0 %5775
        %5779 = vset.pattern.permute.xlu0 0
        %5780 = vperm.xlu0 %5779, %v5762
        %v5781 = vpop.permute.xlu0 %5780
        %5784 = vset.pattern.permute.xlu0 0
        %5785 = vperm.xlu0 %5784, %v5763
        %v5786 = vpop.permute.xlu0 %5785
        %5789 = vset.pattern.permute.xlu0 0
        %5790 = vperm.xlu0 %5789, %v5764
        %v5791 = vpop.permute.xlu0 %5790
        %5794 = vset.pattern.permute.xlu0 0
        %5795 = vperm.xlu0 %5794, %v5765
        %v5796 = vpop.permute.xlu0 %5795
        %5799 = vset.pattern.permute.xlu0 0
        %5800 = vperm.xlu0 %5799, %v5766
        %v5801 = vpop.permute.xlu0 %5800
        %5804 = vset.pattern.permute.xlu0 0
        %5805 = vperm.xlu0 %5804, %v5767
        %v5806 = vpop.permute.xlu0 %5805
        %v5808 = vmul.f32 %v4938, %v5771
        %v5809 = vmul.f32 %v4939, %v5776
        %v5810 = vmul.f32 %v4940, %v5781
        %v5811 = vmul.f32 %v4941, %v5786
        %v5812 = vmul.f32 %v4942, %v5791
        %v5813 = vmul.f32 %v4943, %v5796
        %v5814 = vmul.f32 %v4944, %v5801
        %v5815 = vmul.f32 %v4945, %v5806
        %v5816 = vld [vmem:[%s13] sm:$0xff]
        %v5817 = vld [vmem:[%s13 + $0x8] sm:$0xff]
        %v5818 = vld [vmem:[%s13 + $0x10] sm:$0xff]
        %v5819 = vld [vmem:[%s13 + $0x18] sm:$0xff]
        %v5820 = vld [vmem:[%s13 + $0x20] sm:$0xff]
        %v5821 = vld [vmem:[%s13 + $0x28] sm:$0xff]
        %v5822 = vld [vmem:[%s13 + $0x30] sm:$0xff]
        %v5823 = vld [vmem:[%s13 + $0x38] sm:$0xff]
        %v5824 = vld [vmem:[%s13 + $0x40] sm:$0xff]
        %v5825 = vld [vmem:[%s13 + $0x48] sm:$0xff]
        %v5826 = vld [vmem:[%s13 + $0x50] sm:$0xff]
        %v5827 = vld [vmem:[%s13 + $0x58] sm:$0xff]
        %v5828 = vld [vmem:[%s13 + $0x60] sm:$0xff]
        %v5829 = vld [vmem:[%s13 + $0x68] sm:$0xff]
        %v5830 = vld [vmem:[%s13 + $0x70] sm:$0xff]
        %v5831 = vld [vmem:[%s13 + $0x78] sm:$0xff]
        %5832 = vmatprep.subr.mxu0 0.0
        %5833 = vmatpush1.msra.mxu0 %v599
        %5834 = vmatprep.subr.mxu0 0.0
        %5835 = vmatpush1.msra.mxu0 %v598
        %5836 = vmatprep.subr.mxu0 0.0
        %5837 = vmatpush1.msra.mxu0 %v597
        %5838 = vmatprep.subr.mxu0 0.0
        %5839 = vmatpush1.msra.mxu0 %v596
        %5840 = vmatprep.subr.mxu0 0.0
        %5841 = vmatpush1.msra.mxu0 %v595
        %5842 = vmatprep.subr.mxu0 0.0
        %5843 = vmatpush1.msra.mxu0 %v594
        %5844 = vmatprep.subr.mxu0 0.0
        %5845 = vmatpush1.msra.mxu0 %v593
        %5846 = vmatprep.subr.mxu0 0.0
        %5847 = vmatpush1.msra.mxu0 %v592
        %5848 = vmatprep.subr.mxu0 0.0
        %5849 = vmatpush1.msra.mxu0 %v591
        %5850 = vmatprep.subr.mxu0 0.0
        %5851 = vmatpush1.msra.mxu0 %v590
        %5852 = vmatprep.subr.mxu0 0.0
        %5853 = vmatpush1.msra.mxu0 %v589
        %5854 = vmatprep.subr.mxu0 0.0
        %5855 = vmatpush1.msra.mxu0 %v588
        %5856 = vmatprep.subr.mxu0 0.0
        %5857 = vmatpush1.msra.mxu0 %v587
        %5858 = vmatprep.subr.mxu0 0.0
        %5859 = vmatpush1.msra.mxu0 %v586
        %5860 = vmatprep.subr.mxu0 0.0
        %5861 = vmatpush1.msra.mxu0 %v585
        %5862 = vmatprep.subr.mxu0 0.0
        %5863 = vmatpush1.msra.mxu0 %v584
        %5864 = vmatprep.subr.mxu0 0.0
        %5865 = vmatpush2.msra.mxu0 %v615
        %5866 = vmatprep.subr.mxu0 0.0
        %5867 = vmatpush2.msra.mxu0 %v614
        %5868 = vmatprep.subr.mxu0 0.0
        %5869 = vmatpush2.msra.mxu0 %v613
        %5870 = vmatprep.subr.mxu0 0.0
        %5871 = vmatpush2.msra.mxu0 %v612
        %5872 = vmatprep.subr.mxu0 0.0
        %5873 = vmatpush2.msra.mxu0 %v611
        %5874 = vmatprep.subr.mxu0 0.0
        %5875 = vmatpush2.msra.mxu0 %v610
        %5876 = vmatprep.subr.mxu0 0.0
        %5877 = vmatpush2.msra.mxu0 %v609
        %5878 = vmatprep.subr.mxu0 0.0
        %5879 = vmatpush2.msra.mxu0 %v608
        %5880 = vmatprep.subr.mxu0 0.0
        %5881 = vmatpush2.msra.mxu0 %v607
        %5882 = vmatprep.subr.mxu0 0.0
        %5883 = vmatpush2.msra.mxu0 %v606
        %5884 = vmatprep.subr.mxu0 0.0
        %5885 = vmatpush2.msra.mxu0 %v605
        %5886 = vmatprep.subr.mxu0 0.0
        %5887 = vmatpush2.msra.mxu0 %v604
        %5888 = vmatprep.subr.mxu0 0.0
        %5889 = vmatpush2.msra.mxu0 %v603
        %5890 = vmatprep.subr.mxu0 0.0
        %5891 = vmatpush2.msra.mxu0 %v602
        %5892 = vmatprep.subr.mxu0 0.0
        %5893 = vmatpush2.msra.mxu0 %v601
        %5894 = vmatprep.subr.mxu0 0.0
        %5895 = vmatpush2.msra.mxu0 %v600
        %5896 = vmatprep.mubr.f32.mxu0 %v5817
        %5897 = vmatmul.mubr.f32.gmra.mxu0 %v5816
        %v5898 = vpop.f32.mrf.mxu0
        %v5899 = vadd.f32 0.0, %v5898
        %v5900 = vpop.f32.mrf.mxu0
        %5901 = vmatprep.mubr.f32.mxu0 %v5819
        %5902 = vmatmul.mubr.f32.gmra.mxu0 %v5818
        %v5903 = vpop.f32.mrf.mxu0
        %v5904 = vadd.f32 0.0, %v5903
        %v5905 = vpop.f32.mrf.mxu0
        %5906 = vmatprep.mubr.f32.mxu0 %v5821
        %5907 = vmatmul.mubr.f32.gmra.mxu0 %v5820
        %v5908 = vpop.f32.mrf.mxu0
        %v5909 = vadd.f32 0.0, %v5908
        %v5910 = vpop.f32.mrf.mxu0
        %5911 = vmatprep.mubr.f32.mxu0 %v5823
        %5912 = vmatmul.mubr.f32.gmra.mxu0 %v5822
        %v5913 = vpop.f32.mrf.mxu0
        %v5914 = vadd.f32 0.0, %v5913
        %v5915 = vpop.f32.mrf.mxu0
        %5916 = vmatprep.mubr.f32.mxu0 %v5825
        %5917 = vmatmul.mubr.f32.gmra.mxu0 %v5824
        %v5918 = vpop.f32.mrf.mxu0
        %v5919 = vadd.f32 0.0, %v5918
        %v5920 = vpop.f32.mrf.mxu0
        %5921 = vmatprep.mubr.f32.mxu0 %v5827
        %5922 = vmatmul.mubr.f32.gmra.mxu0 %v5826
        %v5923 = vpop.f32.mrf.mxu0
        %v5924 = vadd.f32 0.0, %v5923
        %v5925 = vpop.f32.mrf.mxu0
        %5926 = vmatprep.mubr.f32.mxu0 %v5829
        %5927 = vmatmul.mubr.f32.gmra.mxu0 %v5828
        %v5928 = vpop.f32.mrf.mxu0
        %v5929 = vadd.f32 0.0, %v5928
        %v5930 = vpop.f32.mrf.mxu0
        %5931 = vmatprep.mubr.f32.mxu0 %v5831
        %5932 = vmatmul.mubr.f32.gmra.mxu0 %v5830
        %v5933 = vpop.f32.mrf.mxu0
        %v5934 = vadd.f32 0.0, %v5933
        %v5935 = vpop.f32.mrf.mxu0
        %5936 = vdwg.mxu0
        %v5937 = vld [vmem:[%s14] sm:$0xff]
        %v5938 = vld [vmem:[%s14 + $0x8] sm:$0xff]
        %v5940 = vsel %vm694, %v5899, 0
        %v5943 = vsel %vm694, %v5904, 0
        %v5946 = vsel %vm694, %v5909, 0
        %v5949 = vsel %vm694, %v5914, 0
        %v5952 = vsel %vm694, %v5919, 0
        %v5955 = vsel %vm694, %v5924, 0
        %v5958 = vsel %vm694, %v5929, 0
        %v5961 = vsel %vm694, %v5934, 0
        %5963 = vmatprep.subr.mxu0 0.0
        %5964 = vmatpush1.msra.mxu0 0.0
        %5965 = vmatprep.subr.mxu0 0.0
        %5966 = vmatpush1.msra.mxu0 0.0
        %5967 = vmatprep.subr.mxu0 0.0
        %5968 = vmatpush1.msra.mxu0 0.0
        %5969 = vmatprep.subr.mxu0 0.0
        %5970 = vmatpush1.msra.mxu0 0.0
        %5971 = vmatprep.subr.mxu0 0.0
        %5972 = vmatpush1.msra.mxu0 0.0
        %5973 = vmatprep.subr.mxu0 0.0
        %5974 = vmatpush1.msra.mxu0 0.0
        %5975 = vmatprep.subr.mxu0 0.0
        %5976 = vmatpush1.msra.mxu0 0.0
        %5977 = vmatprep.subr.mxu0 0.0
        %5978 = vmatpush1.msra.mxu0 0.0
        %5979 = vmatprep.subr.mxu0 0.0
        %5980 = vmatpush1.msra.mxu0 0.0
        %5981 = vmatprep.subr.mxu0 0.0
        %5982 = vmatpush1.msra.mxu0 0.0
        %5983 = vmatprep.subr.mxu0 0.0
        %5984 = vmatpush1.msra.mxu0 0.0
        %5985 = vmatprep.subr.mxu0 0.0
        %5986 = vmatpush1.msra.mxu0 0.0
        %5987 = vmatprep.subr.mxu0 0.0
        %5988 = vmatpush1.msra.mxu0 0.0
        %5989 = vmatprep.subr.mxu0 0.0
        %5990 = vmatpush1.msra.mxu0 0.0
        %5991 = vmatprep.subr.mxu0 0.0
        %5992 = vmatpush1.msra.mxu0 %v5938
        %5993 = vmatprep.subr.mxu0 0.0
        %5994 = vmatpush1.msra.mxu0 %v5937
        %5995 = vmatprep.subr.mxu0 0.0
        %5996 = vmatpush2.msra.mxu0 0.0
        %5997 = vmatprep.subr.mxu0 0.0
        %5998 = vmatpush2.msra.mxu0 0.0
        %5999 = vmatprep.subr.mxu0 0.0
        %6000 = vmatpush2.msra.mxu0 0.0
        %6001 = vmatprep.subr.mxu0 0.0
        %6002 = vmatpush2.msra.mxu0 0.0
        %6003 = vmatprep.subr.mxu0 0.0
        %6004 = vmatpush2.msra.mxu0 0.0
        %6005 = vmatprep.subr.mxu0 0.0
        %6006 = vmatpush2.msra.mxu0 0.0
        %6007 = vmatprep.subr.mxu0 0.0
        %6008 = vmatpush2.msra.mxu0 0.0
        %6009 = vmatprep.subr.mxu0 0.0
        %6010 = vmatpush2.msra.mxu0 0.0
        %6011 = vmatprep.subr.mxu0 0.0
        %6012 = vmatpush2.msra.mxu0 0.0
        %6013 = vmatprep.subr.mxu0 0.0
        %6014 = vmatpush2.msra.mxu0 0.0
        %6015 = vmatprep.subr.mxu0 0.0
        %6016 = vmatpush2.msra.mxu0 0.0
        %6017 = vmatprep.subr.mxu0 0.0
        %6018 = vmatpush2.msra.mxu0 0.0
        %6019 = vmatprep.subr.mxu0 0.0
        %6020 = vmatpush2.msra.mxu0 0.0
        %6021 = vmatprep.subr.mxu0 0.0
        %6022 = vmatpush2.msra.mxu0 0.0
        %6023 = vmatprep.subr.mxu0 0.0
        %6024 = vmatpush2.msra.mxu0 0.0
        %6025 = vmatprep.subr.mxu0 0.0
        %6026 = vmatpush2.msra.mxu0 0.0
        %6027 = vmatprep.mubr.f32.mxu0 0.0
        %6028 = vmatmul.mubr.f32.gmra.mxu0 %v5940
        %v6029 = vpop.f32.mrf.mxu0
        %v6030 = vadd.f32 0.0, %v6029
        %v6031 = vpop.f32.mrf.mxu0
        %6032 = vmatprep.mubr.f32.mxu0 0.0
        %6033 = vmatmul.mubr.f32.gmra.mxu0 %v5943
        %v6034 = vpop.f32.mrf.mxu0
        %v6035 = vadd.f32 0.0, %v6034
        %v6036 = vpop.f32.mrf.mxu0
        %6037 = vmatprep.mubr.f32.mxu0 0.0
        %6038 = vmatmul.mubr.f32.gmra.mxu0 %v5946
        %v6039 = vpop.f32.mrf.mxu0
        %v6040 = vadd.f32 0.0, %v6039
        %v6041 = vpop.f32.mrf.mxu0
        %6042 = vmatprep.mubr.f32.mxu0 0.0
        %6043 = vmatmul.mubr.f32.gmra.mxu0 %v5949
        %v6044 = vpop.f32.mrf.mxu0
        %v6045 = vadd.f32 0.0, %v6044
        %v6046 = vpop.f32.mrf.mxu0
        %6047 = vmatprep.mubr.f32.mxu0 0.0
        %6048 = vmatmul.mubr.f32.gmra.mxu0 %v5952
        %v6049 = vpop.f32.mrf.mxu0
        %v6050 = vadd.f32 0.0, %v6049
        %v6051 = vpop.f32.mrf.mxu0
        %6052 = vmatprep.mubr.f32.mxu0 0.0
        %6053 = vmatmul.mubr.f32.gmra.mxu0 %v5955
        %v6054 = vpop.f32.mrf.mxu0
        %v6055 = vadd.f32 0.0, %v6054
        %v6056 = vpop.f32.mrf.mxu0
        %6057 = vmatprep.mubr.f32.mxu0 0.0
        %6058 = vmatmul.mubr.f32.gmra.mxu0 %v5958
        %v6059 = vpop.f32.mrf.mxu0
        %v6060 = vadd.f32 0.0, %v6059
        %v6061 = vpop.f32.mrf.mxu0
        %6062 = vmatprep.mubr.f32.mxu0 0.0
        %6063 = vmatmul.mubr.f32.gmra.mxu0 %v5961
        %v6064 = vpop.f32.mrf.mxu0
        %v6065 = vadd.f32 0.0, %v6064
        %v6066 = vpop.f32.mrf.mxu0
        %6067 = vdwg.mxu0
        %v6068 = vld [vmem:[%s15] sm:$0x1]
        %v6070 = vlaneseq
        %v6071 = vshrl.u32 %v6070, 7
        %v6072 = vsub.s32 0, %v6071
        %v6073 = vrot.slane %v6068, %v6072
        %v6075 = vmul.f32 %v6030, %v6073
        %v6076 = vmul.f32 %v6035, %v6073
        %v6077 = vmul.f32 %v6040, %v6073
        %v6078 = vmul.f32 %v6045, %v6073
        %v6079 = vmul.f32 %v6050, %v6073
        %v6080 = vmul.f32 %v6055, %v6073
        %v6081 = vmul.f32 %v6060, %v6073
        %v6082 = vmul.f32 %v6065, %v6073
        %v6083 = vld [vmem:[%s16] sm:$0x1]
        %v6085 = vlaneseq
        %v6086 = vshrl.u32 %v6085, 7
        %v6087 = vsub.s32 0, %v6086
        %v6088 = vrot.slane %v6083, %v6087
        %v6090 = vadd.f32 %v6075, %v6088
        %v6091 = vadd.f32 %v6076, %v6088
        %v6092 = vadd.f32 %v6077, %v6088
        %v6093 = vadd.f32 %v6078, %v6088
        %v6094 = vadd.f32 %v6079, %v6088
        %v6095 = vadd.f32 %v6080, %v6088
        %v6096 = vadd.f32 %v6081, %v6088
        %v6097 = vadd.f32 %v6082, %v6088
        %v6098 = vadd.f32 %v6090, %v5808
        %v6099 = vadd.f32 %v6091, %v5809
        %v6100 = vadd.f32 %v6092, %v5810
        %v6101 = vadd.f32 %v6093, %v5811
        %v6102 = vadd.f32 %v6094, %v5812
        %v6103 = vadd.f32 %v6095, %v5813
        %v6104 = vadd.f32 %v6096, %v5814
        %v6105 = vadd.f32 %v6097, %v5815
        %6106 = vst.msk [vmem:[%s582] sm:$0xff] %vm1990, %v6098
        %6107 = vst.msk [vmem:[%s582 + $0x8] sm:$0xff] %vm1990, %v6099
        %6108 = vst.msk [vmem:[%s582 + $0x10] sm:$0xff] %vm1990, %v6100
        %6109 = vst.msk [vmem:[%s582 + $0x18] sm:$0xff] %vm1990, %v6101
        %6110 = vst.msk [vmem:[%s582 + $0x20] sm:$0xff] %vm1990, %v6102
        %6111 = vst.msk [vmem:[%s582 + $0x28] sm:$0xff] %vm1990, %v6103
        %6112 = vst.msk [vmem:[%s582 + $0x30] sm:$0xff] %vm1990, %v6104
        %6113 = vst.msk [vmem:[%s582 + $0x38] sm:$0xff] %vm1990, %v6105
        %s6114 = sand.u32 %s405, 1
        %s6115 = scalar_lea.sflag [#allocation7], %s6114
        %s6116 = sand.u32 %s405, 1
        %s6117 = smul.addr %s6116, 64
        %s6118 = scalar_lea.vmem [#allocation10], %s6117
        // Predicated region
        $region97: #{tpu_custom_call.1} parent=87 // pred_check
          %p6119 = pneg %p415
        $region98: #{tpu_custom_call.1} parent=87 // pred_check_branch
          %6121 = sbr.rel (%p6119) target = $region100
        $region99: #{tpu_custom_call.1} parent=87 // pred_region
          %s6123 = ssub.s32 1024, 1024
          %6124 = vsyncadd %s6115, %s6123
          %s6125 = smul.addr %s35, 8
          %s6126 = smul.addr %s6125, 128
          %s6127 = scalar_lea.hbm %s17, %s6126
          %s6128 = sshll.u32 %s6118, 4
          %s6129 = int_to_ptr.vmem [resolvable:$true] %s6128
          %6134 = dma.vmem_to_hbm [thread:$0]  %s6129, 1024, %s6127, %s6115, 128, 128, 8
        $region100: #{tpu_custom_call.1} parent=87 // pred_fallthru
          _
      $region88: #{tpu_custom_call.1} parent=5 // pred_fallthru
        _
      %p6135 = scmp.le.s32.totalorder 2, %s30
      // Predicated region
      $region101: #{tpu_custom_call.1} parent=5 // pred_check
        %p6136 = pneg %p6135
      $region102: #{tpu_custom_call.1} parent=5 // pred_check_branch
        %6138 = sbr.rel (%p6136) target = $region104
      $region103: #{tpu_custom_call.1} parent=5 // pred_region
        %s6139 = ssub.s32 %s30, 2
        // Predicated region
        $region105: #{tpu_custom_call.1} parent=103 // pred_check
          %p6140 = pneg %p421
        $region106: #{tpu_custom_call.1} parent=103 // pred_check_branch
          %6142 = sbr.rel (%p6140) target = $region108
        $region107: #{tpu_custom_call.1} parent=103 // pred_region
          %s6143 = sand.u32 %s406, 1
          %s6144 = scalar_lea.sflag [#allocation7], %s6143
          %s6145 = sand.u32 %s406, 1
          %s6146 = smul.addr %s6145, 64
          %s6147 = scalar_lea.vmem [#allocation10], %s6146
          %6148 = dma.done %s6144, 1024
        $region108: #{tpu_custom_call.1} parent=103 // pred_fallthru
          _
      $region104: #{tpu_custom_call.1} parent=5 // pred_fallthru
        _
    $region6: #{tpu_custom_call.1} parent=1 // loop_footer
      %s34 = sadd.s32 1, %s30
    $region7: #{tpu_custom_call.1} parent=1 // loop_footer_branch
      %29 = sbr.rel target = $region3
    $region8: #{tpu_custom_call.1} parent=1 // loop_exit
      _
    %6149 = vsyncpa [#allocation6], 1
    %s6150 = scalar_lea.sflag [#allocation6], 1
    %6151 = vsyncpa %s6150, 1
    %6152 = vsyncpa [#allocation7], 1
    %s6153 = scalar_lea.sflag [#allocation7], 1
    %6154 = vsyncpa %s6153, 1
    %6155 = vsyncpa [#allocation8], 1
    %s6156 = scalar_lea.sflag [#allocation8], 1
    %6157 = vsyncpa %s6156, 1

</llo_original>
